<compile_context>
chip_gen: v5e
topology: v5e:2x2
jax: 0.10.0
libtpu: 0.0.40
codegen_flags: <defaults>
</compile_context>

<pallas_src>
import functools
import math

import jax
import jax.numpy as jnp
from jax import lax
from jax.experimental import pallas as pl
from jax.experimental.pallas import tpu as pltpu


def _round_up(x, m):
    return ((x + m - 1) // m) * m


def graph_triples_kernel(total_rows,
                         x_ref,                         # [T2, D]  bf16, u/v rows interleaved
                         w0_ref, c0_ref,                # [D, H] bf16, [1, H] f32  (BN+bias folded)
                         w1_ref, c1_ref,                # [H, H] bf16, [1, H] f32
                         g0u_ref, g0v_ref, gb0_ref,     # graph MLP layer 0 (row-split), bias
                         g1_ref, gb1_ref,               # graph MLP layer 1, bias
                         hidden_ref,                    # [T2, H] f32 out
                         out_ref,                       # [1, H]  f32 out
                         acc_u_ref, acc_v_ref):         # [1, H]  f32 scratch accumulators
    pid = pl.program_id(0)
    n_tiles = pl.num_programs(0)
    T2 = x_ref.shape[0]

    @pl.when(pid == 0)
    def _init():
        acc_u_ref[...] = jnp.zeros_like(acc_u_ref)
        acc_v_ref[...] = jnp.zeros_like(acc_v_ref)

    # --- shared phi MLP (eval mode: dropout = identity, BN folded into W'/c) ---
    h = jnp.dot(x_ref[...], w0_ref[...], preferred_element_type=jnp.float32)
    h = jnp.maximum(h + c0_ref[...], 0.0)
    h = jnp.dot(h.astype(jnp.bfloat16), w1_ref[...], preferred_element_type=jnp.float32)
    h = h + c1_ref[...]                                # [T2, H] f32

    # Out-of-bounds rows of the last (partial) tile are clipped on writeback.
    hidden_ref[...] = h

    # --- pooled sum: u rows are even, v rows are odd (tile start is a multiple of 8 => even) ---
    row = lax.broadcasted_iota(jnp.int32, (T2, 1), 0)
    valid = row < (total_rows - pid * T2)              # mask garbage rows of the partial tile
    is_u = (row % 2) == 0
    acc_u_ref[...] += jnp.sum(jnp.where(jnp.logical_and(valid, is_u), h, 0.0),
                              axis=0, keepdims=True)
    acc_v_ref[...] += jnp.sum(jnp.where(jnp.logical_and(valid, jnp.logical_not(is_u)), h, 0.0),
                              axis=0, keepdims=True)

    # --- graph-level readout (2-layer MLP, no BN), only once on the final tile ---
    @pl.when(pid == n_tiles - 1)
    def _finalize():
        g = jnp.dot(acc_u_ref[...], g0u_ref[...], preferred_element_type=jnp.float32)
        g = g + jnp.dot(acc_v_ref[...], g0v_ref[...], preferred_element_type=jnp.float32)
        g = jnp.maximum(g + gb0_ref[...], 0.0)
        out = jnp.dot(g, g1_ref[...], preferred_element_type=jnp.float32) + gb1_ref[...]
        out_ref[...] = out


def graph_level_triples_mlp(x, prep, *, tile_rows=1024):
    N, C = x.shape
    D = C // 2
    H = prep["w1"].shape[1]
    two_n = 2 * N

    # Row-major [N, 2D] flattened == [2N, D]: free reshape. Rows interleave as u0,v0,u1,v1,...
    # so the [2N, H] phi output reshaped back to [N, 2H] is exactly concat(phi(u), phi(v), axis=1).
    x2 = x.astype(jnp.bfloat16).reshape(two_n, D)

    T2 = min(tile_rows, _round_up(two_n, 8))           # multiple of 8 (keeps u/v parity per tile)
    grid = (pl.cdiv(two_n, T2),)

    const = lambda i: (0, 0)                            # weights stay VMEM-resident (no re-DMA)
    row_tile = lambda i: (i, 0)

    flops = 2 * two_n * (D * H + H * H) + 2 * (2 * H * H + H * H)
    bytes_accessed = (two_n * D * 2 + two_n * H * 4            # x (bf16) + hidden (f32)
                      + (D * H + H * H) * 2 + 3 * H * H * 4    # phi (bf16) + graph (f32) weights
                      + 6 * H * 4)                             # biases + out

    hidden2, out = pl.pallas_call(
        functools.partial(graph_triples_kernel, two_n),
        out_shape=(jax.ShapeDtypeStruct((two_n, H), jnp.float32),
                   jax.ShapeDtypeStruct((1, H), jnp.float32)),
        grid=grid,
        in_specs=[
            pl.BlockSpec((T2, D), row_tile),   # x2 tile
            pl.BlockSpec((D, H), const),       # W0' (BN-folded, bf16)
            pl.BlockSpec((1, H), const),       # c0
            pl.BlockSpec((H, H), const),       # W1' (BN-folded, bf16)
            pl.BlockSpec((1, H), const),       # c1
            pl.BlockSpec((H, H), const),       # G0[:H]  (acts on the u-sum)
            pl.BlockSpec((H, H), const),       # G0[H:]  (acts on the v-sum)
            pl.BlockSpec((1, H), const),       # gb0
            pl.BlockSpec((H, H), const),       # G1
            pl.BlockSpec((1, H), const),       # gb1
        ],
        out_specs=(pl.BlockSpec((T2, H), row_tile),
                   pl.BlockSpec((1, H), const)),
        scratch_shapes=[pltpu.VMEM((1, H), jnp.float32),
                        pltpu.VMEM((1, H), jnp.float32)],
        compiler_params=pltpu.CompilerParams(
            dimension_semantics=("arbitrary",),         # pooled accumulator => sequential axis
            vmem_limit_bytes=32 * 1024 * 1024),
        cost_estimate=pl.CostEstimate(flops=flops, transcendentals=0,
                                      bytes_accessed=bytes_accessed),
    )(x2, prep["w0"], prep["c0"], prep["w1"], prep["c1"],
      prep["g0u"], prep["g0v"], prep["gb0"], prep["g1"], prep["gb1"])

    hidden = hidden2.reshape(N, 2 * H)                  # free reshape back to [N, 2H]
    return hidden, out


def make_params(key, in_channels, hidden):
    """Synthetic PyTorch-module parameters (Linear weights pre-transposed to [in, out])."""
    D = in_channels // 2
    H = hidden
    ks = jax.random.split(key, 12)

    def lin(k, fan_in, fan_out):
        bound = 1.0 / math.sqrt(fan_in)
        kw, kb = jax.random.split(k)
        w = jax.random.uniform(kw, (fan_in, fan_out), jnp.float32, -bound, bound)
        b = jax.random.uniform(kb, (1, fan_out), jnp.float32, -bound, bound)
        return w, b

    w0, b0 = lin(ks[0], D, H)                # phi: Linear(D,H), BN(H), Linear(H,H), BN(H)
    w1, b1 = lin(ks[1], H, H)
    bn = dict(
        gamma0=1.0 + 0.1 * jax.random.normal(ks[2], (1, H), jnp.float32),
        beta0=0.1 * jax.random.normal(ks[3], (1, H), jnp.float32),
        mean0=0.1 * jax.random.normal(ks[4], (1, H), jnp.float32),
        var0=jax.random.uniform(ks[5], (1, H), jnp.float32, 0.5, 1.5),
        gamma1=1.0 + 0.1 * jax.random.normal(ks[6], (1, H), jnp.float32),
        beta1=0.1 * jax.random.normal(ks[7], (1, H), jnp.float32),
        mean1=0.1 * jax.random.normal(ks[8], (1, H), jnp.float32),
        var1=jax.random.uniform(ks[9], (1, H), jnp.float32, 0.5, 1.5),
    )
    g0, gb0 = lin(ks[10], 2 * H, H)          # graph encoder: Linear(2H,H), Linear(H,H), no BN
    g1, gb1 = lin(ks[11], H, H)
    return dict(w0=w0, b0=b0, w1=w1, b1=b1, g0=g0, gb0=gb0, g1=g1, gb1=gb1, **bn)


def prepare_params(p, eps=1e-5):
    """Fold eval-mode BatchNorm + Linear bias into the weights; quantize phi weights to bf16."""
    H = p["w1"].shape[1]
    s0 = p["gamma0"] / jnp.sqrt(p["var0"] + eps)
    t0 = p["beta0"] - p["mean0"] * s0
    s1 = p["gamma1"] / jnp.sqrt(p["var1"] + eps)
    t1 = p["beta1"] - p["mean1"] * s1
    return dict(
        w0=(p["w0"] * s0).astype(jnp.bfloat16),        # BN column scale folded into W
        c0=p["b0"] * s0 + t0,                          # fused bias + BN shift (f32)
        w1=(p["w1"] * s1).astype(jnp.bfloat16),
        c1=p["b1"] * s1 + t1,
        g0u=p["g0"][:H, :], g0v=p["g0"][H:, :],        # split to match the (u-sum, v-sum) accumulators
        gb0=p["gb0"], g1=p["g1"], gb1=p["gb1"],
    )


def reference(x, prep):
    """Pure-JAX reference mirroring the kernel's bf16-input / f32-accumulate inference math."""
    D = prep["w0"].shape[0]
    xq = x.astype(jnp.bfloat16).astype(jnp.float32)
    w0 = prep["w0"].astype(jnp.float32)
    w1 = prep["w1"].astype(jnp.float32)

    def phi(z):
        h = jnp.maximum(z @ w0 + prep["c0"], 0.0)
        h = h.astype(jnp.bfloat16).astype(jnp.float32)
        return h @ w1 + prep["c1"]

    u, v = xq[:, :D], xq[:, D:]
    hidden = jnp.concatenate([phi(u), phi(v)], axis=1)
    pooled = jnp.sum(hidden, axis=0, keepdims=True)
    g0 = jnp.concatenate([prep["g0u"], prep["g0v"]], axis=0)
    g = jnp.maximum(pooled @ g0 + prep["gb0"], 0.0)
    out = g @ prep["g1"] + prep["gb1"]
    return hidden, out


if __name__ == "__main__":
    # N triples, in_channels = 2*D, hidden H (2H = 256-wide hidden output; H=128 => lane-dense store)
    N, IN_CHANNELS, HIDDEN = 1000, 64, 128
    key = jax.random.PRNGKey(0)
    kx, kp = jax.random.split(key)
    x = jax.random.normal(kx, (N, IN_CHANNELS), jnp.float32)
    raw = make_params(kp, IN_CHANNELS, HIDDEN)
    prep = prepare_params(raw)

    hidden, out = jax.jit(graph_level_triples_mlp)(x, prep)
    jax.block_until_ready((hidden, out))

    ref_hidden, ref_out = reference(x, prep)
    assert hidden.shape == (N, 2 * HIDDEN) and out.shape == (1, HIDDEN)
    assert jnp.allclose(hidden, ref_hidden, atol=1e-3, rtol=1e-3), \
        float(jnp.max(jnp.abs(hidden - ref_hidden)))
    assert jnp.allclose(out, ref_out, atol=2e-2, rtol=2e-3), \
        float(jnp.max(jnp.abs(out - ref_out)))

    print("KERNEL_OK")
</pallas_src>

<mosaic_0001>
module attributes {stable_mosaic.version = 11 : i64} {
  func.func @graph_triples_kernel(%arg0: i32, %arg1: memref<1024x32xbf16, #tpu.memory_space<vmem>>, %arg2: memref<32x128xbf16, #tpu.memory_space<vmem>>, %arg3: memref<1x128xf32, #tpu.memory_space<vmem>>, %arg4: memref<128x128xbf16, #tpu.memory_space<vmem>>, %arg5: memref<1x128xf32, #tpu.memory_space<vmem>>, %arg6: memref<128x128xf32, #tpu.memory_space<vmem>>, %arg7: memref<128x128xf32, #tpu.memory_space<vmem>>, %arg8: memref<1x128xf32, #tpu.memory_space<vmem>>, %arg9: memref<128x128xf32, #tpu.memory_space<vmem>>, %arg10: memref<1x128xf32, #tpu.memory_space<vmem>>, %arg11: memref<1024x128xf32, #tpu.memory_space<vmem>>, %arg12: memref<1x128xf32, #tpu.memory_space<vmem>>, %arg13: memref<1x128xf32, #tpu.memory_space<vmem>>, %arg14: memref<1x128xf32, #tpu.memory_space<vmem>>) attributes {dimension_semantics = [#tpu.dimension_semantics<arbitrary>], iteration_bounds = array<i64: 2>, scalar_prefetch = 0 : i64, scratch_operands = 2 : i64, tpu.core_type = #tpu.core_type<tc>, window_params = [{transform_indices = @transform_0, window_bounds = array<i64: 1024, 32>}, {pipeline_mode = #tpu.pipeline_mode<synchronous>, transform_indices = @transform_1, window_bounds = array<i64: 32, 128>}, {pipeline_mode = #tpu.pipeline_mode<synchronous>, transform_indices = @transform_2, window_bounds = array<i64: 1, 128>}, {pipeline_mode = #tpu.pipeline_mode<synchronous>, transform_indices = @transform_3, window_bounds = array<i64: 128, 128>}, {pipeline_mode = #tpu.pipeline_mode<synchronous>, transform_indices = @transform_4, window_bounds = array<i64: 1, 128>}, {pipeline_mode = #tpu.pipeline_mode<synchronous>, transform_indices = @transform_5, window_bounds = array<i64: 128, 128>}, {pipeline_mode = #tpu.pipeline_mode<synchronous>, transform_indices = @transform_6, window_bounds = array<i64: 128, 128>}, {pipeline_mode = #tpu.pipeline_mode<synchronous>, transform_indices = @transform_7, window_bounds = array<i64: 1, 128>}, {pipeline_mode = #tpu.pipeline_mode<synchronous>, transform_indices = @transform_8, window_bounds = array<i64: 128, 128>}, {pipeline_mode = #tpu.pipeline_mode<synchronous>, transform_indices = @transform_9, window_bounds = array<i64: 1, 128>}, {transform_indices = @transform_10, window_bounds = array<i64: 1024, 128>}, {pipeline_mode = #tpu.pipeline_mode<synchronous>, transform_indices = @transform_11, window_bounds = array<i64: 1, 128>}]} {
    %c0_i32 = arith.constant 0 : i32
    %0 = arith.cmpi eq, %arg0, %c0_i32 : i32
    %1 = arith.extui %0 : i1 to i32
    %c0_i32_0 = arith.constant 0 : i32
    %2 = arith.cmpi ne, %1, %c0_i32_0 : i32
    scf.if %2 {
      %cst_34 = arith.constant 0.000000e+00 : f32
      %65 = vector.broadcast %cst_34 : f32 to vector<1x128xf32>
      %c0_35 = arith.constant 0 : index
      %c0_36 = arith.constant 0 : index
      %66 = vector.load %arg13[%c0_35, %c0_36] : memref<1x128xf32, #tpu.memory_space<vmem>>, vector<1x128xf32>
      tpu.vector_store %arg13[%c0_35, %c0_36], %65 {strides = array<i32>} : memref<1x128xf32, #tpu.memory_space<vmem>>, vector<1x128xf32>,
      %cst_37 = arith.constant 0.000000e+00 : f32
      %67 = vector.broadcast %cst_37 : f32 to vector<1x128xf32>
      %c0_38 = arith.constant 0 : index
      %c0_39 = arith.constant 0 : index
      %68 = vector.load %arg14[%c0_38, %c0_39] : memref<1x128xf32, #tpu.memory_space<vmem>>, vector<1x128xf32>
      tpu.vector_store %arg14[%c0_38, %c0_39], %67 {strides = array<i32>} : memref<1x128xf32, #tpu.memory_space<vmem>>, vector<1x128xf32>,
    } else {
    }
    %c0 = arith.constant 0 : index
    %c0_1 = arith.constant 0 : index
    %3 = vector.load %arg1[%c0, %c0_1] : memref<1024x32xbf16, #tpu.memory_space<vmem>>, vector<1024x32xbf16>
    %c0_2 = arith.constant 0 : index
    %c0_3 = arith.constant 0 : index
    %4 = vector.load %arg2[%c0_2, %c0_3] : memref<32x128xbf16, #tpu.memory_space<vmem>>, vector<32x128xbf16>
    %cst = arith.constant dense<0.000000e+00> : vector<1024x128xf32>
    %5 = tpu.matmul %3, %4, %cst {dimension_numbers = #tpu.dot_dimension_numbers<[1], [0], [0], [1], [0, 0, 1, 1], [], []>} : vector<1024x32xbf16>, vector<32x128xbf16>, vector<1024x128xf32> -> vector<1024x128xf32>
    %c0_4 = arith.constant 0 : index
    %c0_5 = arith.constant 0 : index
    %6 = vector.load %arg3[%c0_4, %c0_5] : memref<1x128xf32, #tpu.memory_space<vmem>>, vector<1x128xf32>
    %7 = vector.broadcast %6 : vector<1x128xf32> to vector<1024x128xf32>
    %8 = arith.addf %5, %7 : vector<1024x128xf32>
    %cst_6 = arith.constant 0.000000e+00 : f32
    %9 = vector.broadcast %cst_6 : f32 to vector<1024x128xf32>
    %10 = arith.maximumf %8, %9 : vector<1024x128xf32>
    %11 = arith.truncf %10 : vector<1024x128xf32> to vector<1024x128xbf16>
    %c0_7 = arith.constant 0 : index
    %c0_8 = arith.constant 0 : index
    %12 = vector.load %arg4[%c0_7, %c0_8] : memref<128x128xbf16, #tpu.memory_space<vmem>>, vector<128x128xbf16>
    %cst_9 = arith.constant dense<0.000000e+00> : vector<1024x128xf32>
    %13 = tpu.matmul %11, %12, %cst_9 {dimension_numbers = #tpu.dot_dimension_numbers<[1], [0], [0], [1], [0, 0, 1, 1], [], []>} : vector<1024x128xbf16>, vector<128x128xbf16>, vector<1024x128xf32> -> vector<1024x128xf32>
    %c0_10 = arith.constant 0 : index
    %c0_11 = arith.constant 0 : index
    %14 = vector.load %arg5[%c0_10, %c0_11] : memref<1x128xf32, #tpu.memory_space<vmem>>, vector<1x128xf32>
    %15 = vector.broadcast %14 : vector<1x128xf32> to vector<1024x128xf32>
    %16 = arith.addf %13, %15 : vector<1024x128xf32>
    %c0_12 = arith.constant 0 : index
    %c0_13 = arith.constant 0 : index
    %17 = vector.load %arg11[%c0_12, %c0_13] : memref<1024x128xf32, #tpu.memory_space<vmem>>, vector<1024x128xf32>
    tpu.vector_store %arg11[%c0_12, %c0_13], %16 {strides = array<i32>} : memref<1024x128xf32, #tpu.memory_space<vmem>>, vector<1024x128xf32>,
    %18 = tpu.iota {dimensions = array<i32: 0>} : vector<1024x1xi32>
    %c1024_i32 = arith.constant 1024 : i32
    %19 = arith.muli %arg0, %c1024_i32 : i32
    %c2000_i32 = arith.constant 2000 : i32
    %20 = arith.subi %c2000_i32, %19 : i32
    %21 = vector.broadcast %20 : i32 to vector<1024x1xi32>
    %22 = arith.cmpi slt, %18, %21 : vector<1024x1xi32>
    %c2_i32 = arith.constant 2 : i32
    %c0_i32_14 = arith.constant 0 : i32
    %23 = arith.cmpi eq, %c2_i32, %c0_i32_14 : i32
    %c1_i32 = arith.constant 1 : i32
    %24 = arith.select %23, %c1_i32, %c2_i32 : i32
    %25 = vector.broadcast %24 : i32 to vector<1024x1xi32>
    %26 = arith.remsi %18, %25 : vector<1024x1xi32>
    %c0_i32_15 = arith.constant 0 : i32
    %27 = vector.broadcast %c0_i32_15 : i32 to vector<1024x1xi32>
    %28 = arith.cmpi ne, %26, %27 : vector<1024x1xi32>
    %c0_i32_16 = arith.constant 0 : i32
    %29 = vector.broadcast %c0_i32_16 : i32 to vector<1024x1xi32>
    %30 = arith.cmpi slt, %26, %29 : vector<1024x1xi32>
    %c0_i32_17 = arith.constant 0 : i32
    %31 = arith.cmpi slt, %24, %c0_i32_17 : i32
    %32 = vector.broadcast %31 : i1 to vector<1024x1xi1>
    %33 = vector.broadcast %32 : vector<1024x1xi1> to vector<1024x1xi1>
    %34 = arith.xori %30, %33 : vector<1024x1xi1>
    %35 = arith.andi %34, %28 : vector<1024x1xi1>
    %36 = vector.broadcast %24 : i32 to vector<1024x1xi32>
    %37 = arith.addi %26, %36 : vector<1024x1xi32>
    %38 = arith.select %35, %37, %26 : vector<1024x1xi1>, vector<1024x1xi32>
    %c0_i32_18 = arith.constant 0 : i32
    %39 = vector.broadcast %c0_i32_18 : i32 to vector<1024x1xi32>
    %40 = arith.cmpi eq, %38, %39 : vector<1024x1xi32>
    %c0_19 = arith.constant 0 : index
    %c0_20 = arith.constant 0 : index
    %41 = vector.load %arg13[%c0_19, %c0_20] : memref<1x128xf32, #tpu.memory_space<vmem>>, vector<1x128xf32>
    %42 = arith.andi %22, %40 : vector<1024x1xi1>
    %cst_21 = arith.constant 0.000000e+00 : f32
    %43 = vector.shape_cast %42 : vector<1024x1xi1> to vector<1024x1xi1>
    %44 = vector.broadcast %43 : vector<1024x1xi1> to vector<1024x128xi1>
    %45 = vector.broadcast %cst_21 : f32 to vector<1024x128xf32>
    %46 = arith.select %44, %16, %45 : vector<1024x128xi1>, vector<1024x128xf32>
    %cst_22 = arith.constant dense<0.000000e+00> : vector<128xf32>
    %47 = vector.multi_reduction <add>, %46, %cst_22 [0] : vector<1024x128xf32> to vector<128xf32>
    %48 = vector.shape_cast %47 : vector<128xf32> to vector<1x128xf32>
    %49 = arith.addf %41, %48 : vector<1x128xf32>
    %c0_23 = arith.constant 0 : index
    %c0_24 = arith.constant 0 : index
    %50 = vector.load %arg13[%c0_23, %c0_24] : memref<1x128xf32, #tpu.memory_space<vmem>>, vector<1x128xf32>
    tpu.vector_store %arg13[%c0_23, %c0_24], %49 {strides = array<i32>} : memref<1x128xf32, #tpu.memory_space<vmem>>, vector<1x128xf32>,
    %c0_25 = arith.constant 0 : index
    %c0_26 = arith.constant 0 : index
    %51 = vector.load %arg14[%c0_25, %c0_26] : memref<1x128xf32, #tpu.memory_space<vmem>>, vector<1x128xf32>
    %cst_27 = arith.constant dense<true> : vector<1024x1xi1>
    %52 = arith.xori %40, %cst_27 : vector<1024x1xi1>
    %53 = arith.andi %22, %52 : vector<1024x1xi1>
    %cst_28 = arith.constant 0.000000e+00 : f32
    %54 = vector.shape_cast %53 : vector<1024x1xi1> to vector<1024x1xi1>
    %55 = vector.broadcast %54 : vector<1024x1xi1> to vector<1024x128xi1>
    %56 = vector.broadcast %cst_28 : f32 to vector<1024x128xf32>
    %57 = arith.select %55, %16, %56 : vector<1024x128xi1>, vector<1024x128xf32>
    %cst_29 = arith.constant dense<0.000000e+00> : vector<128xf32>
    %58 = vector.multi_reduction <add>, %57, %cst_29 [0] : vector<1024x128xf32> to vector<128xf32>
    %59 = vector.shape_cast %58 : vector<128xf32> to vector<1x128xf32>
    %60 = arith.addf %51, %59 : vector<1x128xf32>
    %c0_30 = arith.constant 0 : index
    %c0_31 = arith.constant 0 : index
    %61 = vector.load %arg14[%c0_30, %c0_31] : memref<1x128xf32, #tpu.memory_space<vmem>>, vector<1x128xf32>
    tpu.vector_store %arg14[%c0_30, %c0_31], %60 {strides = array<i32>} : memref<1x128xf32, #tpu.memory_space<vmem>>, vector<1x128xf32>,
    %c1_i32_32 = arith.constant 1 : i32
    %62 = arith.cmpi eq, %arg0, %c1_i32_32 : i32
    %63 = arith.extui %62 : i1 to i32
    %c0_i32_33 = arith.constant 0 : i32
    %64 = arith.cmpi ne, %63, %c0_i32_33 : i32
    scf.if %64 {
      %c0_34 = arith.constant 0 : index
      %c0_35 = arith.constant 0 : index
      %65 = vector.load %arg13[%c0_34, %c0_35] : memref<1x128xf32, #tpu.memory_space<vmem>>, vector<1x128xf32>
      %c0_36 = arith.constant 0 : index
      %c0_37 = arith.constant 0 : index
      %66 = vector.load %arg6[%c0_36, %c0_37] : memref<128x128xf32, #tpu.memory_space<vmem>>, vector<128x128xf32>
      %cst_38 = arith.constant dense<0.000000e+00> : vector<1x128xf32>
      %67 = tpu.matmul %65, %66, %cst_38 {dimension_numbers = #tpu.dot_dimension_numbers<[1], [0], [0], [1], [0, 0, 1, 1], [], []>} : vector<1x128xf32>, vector<128x128xf32>, vector<1x128xf32> -> vector<1x128xf32>
      %c0_39 = arith.constant 0 : index
      %c0_40 = arith.constant 0 : index
      %68 = vector.load %arg14[%c0_39, %c0_40] : memref<1x128xf32, #tpu.memory_space<vmem>>, vector<1x128xf32>
      %c0_41 = arith.constant 0 : index
      %c0_42 = arith.constant 0 : index
      %69 = vector.load %arg7[%c0_41, %c0_42] : memref<128x128xf32, #tpu.memory_space<vmem>>, vector<128x128xf32>
      %cst_43 = arith.constant dense<0.000000e+00> : vector<1x128xf32>
      %70 = tpu.matmul %68, %69, %cst_43 {dimension_numbers = #tpu.dot_dimension_numbers<[1], [0], [0], [1], [0, 0, 1, 1], [], []>} : vector<1x128xf32>, vector<128x128xf32>, vector<1x128xf32> -> vector<1x128xf32>
      %71 = arith.addf %67, %70 : vector<1x128xf32>
      %c0_44 = arith.constant 0 : index
      %c0_45 = arith.constant 0 : index
      %72 = vector.load %arg8[%c0_44, %c0_45] : memref<1x128xf32, #tpu.memory_space<vmem>>, vector<1x128xf32>
      %73 = arith.addf %71, %72 : vector<1x128xf32>
      %cst_46 = arith.constant 0.000000e+00 : f32
      %74 = vector.broadcast %cst_46 : f32 to vector<1x128xf32>
      %75 = arith.maximumf %73, %74 : vector<1x128xf32>
      %c0_47 = arith.constant 0 : index
      %c0_48 = arith.constant 0 : index
      %76 = vector.load %arg9[%c0_47, %c0_48] : memref<128x128xf32, #tpu.memory_space<vmem>>, vector<128x128xf32>
      %cst_49 = arith.constant dense<0.000000e+00> : vector<1x128xf32>
      %77 = tpu.matmul %75, %76, %cst_49 {dimension_numbers = #tpu.dot_dimension_numbers<[1], [0], [0], [1], [0, 0, 1, 1], [], []>} : vector<1x128xf32>, vector<128x128xf32>, vector<1x128xf32> -> vector<1x128xf32>
      %c0_50 = arith.constant 0 : index
      %c0_51 = arith.constant 0 : index
      %78 = vector.load %arg10[%c0_50, %c0_51] : memref<1x128xf32, #tpu.memory_space<vmem>>, vector<1x128xf32>
      %79 = arith.addf %77, %78 : vector<1x128xf32>
      %c0_52 = arith.constant 0 : index
      %c0_53 = arith.constant 0 : index
      %80 = vector.load %arg12[%c0_52, %c0_53] : memref<1x128xf32, #tpu.memory_space<vmem>>, vector<1x128xf32>
      tpu.vector_store %arg12[%c0_52, %c0_53], %79 {strides = array<i32>} : memref<1x128xf32, #tpu.memory_space<vmem>>, vector<1x128xf32>,
    } else {
    }
    return
  }
  func.func @transform_0(%arg0: i32) -> (i32, i32) {
    %c0_i32 = arith.constant 0 : i32
    %c0_i32_0 = arith.constant 0 : i32
    return %arg0, %c0_i32 : i32, i32
  }
  func.func @transform_1(%arg0: i32) -> (i32, i32) {
    %c0_i32 = arith.constant 0 : i32
    %c0_i32_0 = arith.constant 0 : i32
    %c0_i32_1 = arith.constant 0 : i32
    return %c0_i32, %c0_i32_0 : i32, i32
  }
  func.func @transform_2(%arg0: i32) -> (i32, i32) {
    %c0_i32 = arith.constant 0 : i32
    %c0_i32_0 = arith.constant 0 : i32
    %c0_i32_1 = arith.constant 0 : i32
    return %c0_i32, %c0_i32_0 : i32, i32
  }
  func.func @transform_3(%arg0: i32) -> (i32, i32) {
    %c0_i32 = arith.constant 0 : i32
    %c0_i32_0 = arith.constant 0 : i32
    %c0_i32_1 = arith.constant 0 : i32
    return %c0_i32, %c0_i32_0 : i32, i32
  }
  func.func @transform_4(%arg0: i32) -> (i32, i32) {
    %c0_i32 = arith.constant 0 : i32
    %c0_i32_0 = arith.constant 0 : i32
    %c0_i32_1 = arith.constant 0 : i32
    return %c0_i32, %c0_i32_0 : i32, i32
  }
  func.func @transform_5(%arg0: i32) -> (i32, i32) {
    %c0_i32 = arith.constant 0 : i32
    %c0_i32_0 = arith.constant 0 : i32
    %c0_i32_1 = arith.constant 0 : i32
    return %c0_i32, %c0_i32_0 : i32, i32
  }
  func.func @transform_6(%arg0: i32) -> (i32, i32) {
    %c0_i32 = arith.constant 0 : i32
    %c0_i32_0 = arith.constant 0 : i32
    %c0_i32_1 = arith.constant 0 : i32
    return %c0_i32, %c0_i32_0 : i32, i32
  }
  func.func @transform_7(%arg0: i32) -> (i32, i32) {
    %c0_i32 = arith.constant 0 : i32
    %c0_i32_0 = arith.constant 0 : i32
    %c0_i32_1 = arith.constant 0 : i32
    return %c0_i32, %c0_i32_0 : i32, i32
  }
  func.func @transform_8(%arg0: i32) -> (i32, i32) {
    %c0_i32 = arith.constant 0 : i32
    %c0_i32_0 = arith.constant 0 : i32
    %c0_i32_1 = arith.constant 0 : i32
    return %c0_i32, %c0_i32_0 : i32, i32
  }
  func.func @transform_9(%arg0: i32) -> (i32, i32) {
    %c0_i32 = arith.constant 0 : i32
    %c0_i32_0 = arith.constant 0 : i32
    %c0_i32_1 = arith.constant 0 : i32
    return %c0_i32, %c0_i32_0 : i32, i32
  }
  func.func @transform_10(%arg0: i32) -> (i32, i32) {
    %c0_i32 = arith.constant 0 : i32
    %c0_i32_0 = arith.constant 0 : i32
    return %arg0, %c0_i32 : i32, i32
  }
  func.func @transform_11(%arg0: i32) -> (i32, i32) {
    %c0_i32 = arith.constant 0 : i32
    %c0_i32_0 = arith.constant 0 : i32
    %c0_i32_1 = arith.constant 0 : i32
    return %c0_i32, %c0_i32_0 : i32, i32
  }
}

</mosaic_0001>

<llo_original>
// kernel: graph_level_triples_mlp.1
$region0: #{graph_level_triples_mlp.1}
  #allocation0 [shape = 'u32[]', space=smem, size = 0x4, offset = 0x4, fixed_abs, tag = 'smem constant byte address 0x4 - core index']
  #allocation1 [shape = 'u32[72,128]{1,0:T(1,128)}', space=vmem, size = 0x9000, scoped, tag = 'internal scratch']
  #allocation2 [shape = 'f32[1,128]{1,0:T(1,128)}', space=vmem, size = 0x200, scoped, tag = 'scratch operand']
  #allocation3 [shape = 'f32[1,128]{1,0:T(1,128)}', space=vmem, size = 0x200, scoped, tag = 'scratch operand']
  %s0 = inlined_call_operand.vmem [shape: bf16[2000,32], index: 0, kind: input, shape index: {}]
  %s1 = inlined_call_operand.vmem [shape: bf16[32,128], index: 1, kind: input, shape index: {}]
  %s2 = inlined_call_operand.vmem [shape: f32[1,128], index: 2, kind: input, shape index: {}]
  %s3 = inlined_call_operand.vmem [shape: bf16[128,128], index: 3, kind: input, shape index: {}]
  %s4 = inlined_call_operand.vmem [shape: f32[1,128], index: 4, kind: input, shape index: {}]
  %s5 = inlined_call_operand.vmem [shape: f32[128,128], index: 5, kind: input, shape index: {}]
  %s6 = inlined_call_operand.vmem [shape: f32[128,128], index: 6, kind: input, shape index: {}]
  %s7 = inlined_call_operand.vmem [shape: f32[1,128], index: 7, kind: input, shape index: {}]
  %s8 = inlined_call_operand.vmem [shape: f32[128,128], index: 8, kind: input, shape index: {}]
  %s9 = inlined_call_operand.vmem [shape: f32[1,128], index: 9, kind: input, shape index: {}]
  %s10 = inlined_call_operand.vmem [shape: f32[2000,128], index: 10, kind: output, shape index: {0}]
  %s11 = inlined_call_operand.hbm [shape: f32[1,128], index: 11, kind: output, shape index: {1}]
  %12 = xla_tuple %s10, %s11
  %s13 = sld [smem:[#allocation0]]
  $region137: #{graph_level_triples_mlp.1} parent=0
    _
  %s15 = ssub.s32 1, %s13
  %s16 = scalar_select 0, %s15, %s13
  $region1: #{graph_level_triples_mlp.1} parent=0
    #allocation4 [shape = 'u8[1048576]{0}', space=vmem, size = 0x100000, scoped, tag = 'output window, operand 0']
    #allocation5 [shape = 'u8[512]{0}', space=vmem, size = 0x400, scoped, tag = 'output window, operand 1, single buffered']
    #allocation6 [shape = 's32[2]{0}', space=sflag, size = 0x8, scoped, tag = 'scoped memory for graph_level_triples_mlp.1']
    %17 = vsyncpa [#allocation6], 0
    loop: start=0, step=1, limit=4
    $region2: #{graph_level_triples_mlp.1} parent=1 // loop_pre_header
      _
    $region3: #{graph_level_triples_mlp.1} parent=1 // loop_header
      %s19 = sphi 0, %s23
      %p20 = scmp.ge.s32.totalorder %s19, 4
      %s29 = sphi 0, %s31
      %s32 = sphi 0, %s29
      %s33 = sphi 0, %s32
      %s49 = sphi 0, %s33
      %s53 = sphi 0, %s53
      %s55 = sphi 0, %s53
      %s56 = sphi 0, %s55
      %s70 = sphi 0, %s56
      %s74 = sphi 0, %s74
      %s76 = sphi 0, %s74
      %s77 = sphi 0, %s76
      %s91 = sphi 0, %s77
      %s95 = sphi 0, %s95
      %s97 = sphi 0, %s95
      %s98 = sphi 0, %s97
      %s112 = sphi 0, %s98
      %s116 = sphi 0, %s116
      %s118 = sphi 0, %s116
      %s119 = sphi 0, %s118
      %s133 = sphi 0, %s119
      %s137 = sphi 0, %s137
      %s139 = sphi 0, %s137
      %s140 = sphi 0, %s139
      %s154 = sphi 0, %s140
      %s158 = sphi 0, %s158
      %s160 = sphi 0, %s158
      %s161 = sphi 0, %s160
      %s175 = sphi 0, %s161
      %s179 = sphi 0, %s179
      %s181 = sphi 0, %s179
      %s182 = sphi 0, %s181
      %s196 = sphi 0, %s182
      %s200 = sphi 0, %s200
      %s202 = sphi 0, %s200
      %s203 = sphi 0, %s202
      %s217 = sphi 0, %s203
      %s221 = sphi 0, %s221
      %s223 = sphi 0, %s221
      %s224 = sphi 0, %s223
      %s238 = sphi 0, %s224
      %s244 = sphi 0, %s246
      %s247 = sphi 0, %s244
      %s248 = sphi 0, %s247
      %s264 = sphi 0, %s248
      %s268 = sphi 0, %s268
      %s270 = sphi 0, %s268
      %s271 = sphi 0, %s270
      %s285 = sphi 0, %s271
    $region4: #{graph_level_triples_mlp.1} parent=1 // loop_header_branch
      %22 = sbr.rel (%p20) target = $region8
    $region5: #{graph_level_triples_mlp.1} parent=1 // loop_body
      %s24 = ssub.s32 %s19, 1
      %s25 = ssub.s32 %s19, 2
      %s26 = sadd.s32 %s19, 1
      %s27 = ssub.s32 %s19, %s26
      %p28 = scmp.eq.s32.totalorder %s27, 0
      %s30 = sadd.s32 %s29, 1
      %s31 = scalar_select %p28, %s29, %s30
      %p34 = pneg %p28
      %p35 = scmp.eq.s32.totalorder %s19, 1
      %p36 = por %p34, %p35
      %p37 = scmp.ne.s32.totalorder %s29, %s32
      %p38 = scmp.eq.s32.totalorder %s19, 0
      %p39 = por %p37, %p38
      %p40 = scmp.ne.s32.totalorder %s29, %s32
      %p41 = scmp.eq.s32.totalorder %s24, 1
      %p42 = por %p40, %p41
      %p43 = scmp.ne.s32.totalorder %s32, %s33
      %p44 = scmp.eq.s32.totalorder %s24, 0
      %p45 = por %p43, %p44
      %p46 = scmp.ne.s32.totalorder %s32, %s33
      %p47 = scmp.eq.s32.totalorder %s25, 1
      %p48 = por %p46, %p47
      %p50 = scmp.ne.s32.totalorder %s33, %s49
      %p51 = scmp.eq.s32.totalorder %s25, 0
      %p52 = por %p50, %p51
      %s54 = sadd.s32 %s53, 1
      %p57 = scmp.eq.s32.totalorder %s19, 1
      %p58 = scmp.ne.s32.totalorder %s53, %s55
      %p59 = scmp.eq.s32.totalorder %s19, 0
      %p60 = por %p58, %p59
      %p61 = scmp.ne.s32.totalorder %s53, %s55
      %p62 = scmp.eq.s32.totalorder %s24, 1
      %p63 = por %p61, %p62
      %p64 = scmp.ne.s32.totalorder %s55, %s56
      %p65 = scmp.eq.s32.totalorder %s24, 0
      %p66 = por %p64, %p65
      %p67 = scmp.ne.s32.totalorder %s55, %s56
      %p68 = scmp.eq.s32.totalorder %s25, 1
      %p69 = por %p67, %p68
      %p71 = scmp.ne.s32.totalorder %s56, %s70
      %p72 = scmp.eq.s32.totalorder %s25, 0
      %p73 = por %p71, %p72
      %s75 = sadd.s32 %s74, 1
      %p78 = scmp.eq.s32.totalorder %s19, 1
      %p79 = scmp.ne.s32.totalorder %s74, %s76
      %p80 = scmp.eq.s32.totalorder %s19, 0
      %p81 = por %p79, %p80
      %p82 = scmp.ne.s32.totalorder %s74, %s76
      %p83 = scmp.eq.s32.totalorder %s24, 1
      %p84 = por %p82, %p83
      %p85 = scmp.ne.s32.totalorder %s76, %s77
      %p86 = scmp.eq.s32.totalorder %s24, 0
      %p87 = por %p85, %p86
      %p88 = scmp.ne.s32.totalorder %s76, %s77
      %p89 = scmp.eq.s32.totalorder %s25, 1
      %p90 = por %p88, %p89
      %p92 = scmp.ne.s32.totalorder %s77, %s91
      %p93 = scmp.eq.s32.totalorder %s25, 0
      %p94 = por %p92, %p93
      %s96 = sadd.s32 %s95, 1
      %p99 = scmp.eq.s32.totalorder %s19, 1
      %p100 = scmp.ne.s32.totalorder %s95, %s97
      %p101 = scmp.eq.s32.totalorder %s19, 0
      %p102 = por %p100, %p101
      %p103 = scmp.ne.s32.totalorder %s95, %s97
      %p104 = scmp.eq.s32.totalorder %s24, 1
      %p105 = por %p103, %p104
      %p106 = scmp.ne.s32.totalorder %s97, %s98
      %p107 = scmp.eq.s32.totalorder %s24, 0
      %p108 = por %p106, %p107
      %p109 = scmp.ne.s32.totalorder %s97, %s98
      %p110 = scmp.eq.s32.totalorder %s25, 1
      %p111 = por %p109, %p110
      %p113 = scmp.ne.s32.totalorder %s98, %s112
      %p114 = scmp.eq.s32.totalorder %s25, 0
      %p115 = por %p113, %p114
      %s117 = sadd.s32 %s116, 1
      %p120 = scmp.eq.s32.totalorder %s19, 1
      %p121 = scmp.ne.s32.totalorder %s116, %s118
      %p122 = scmp.eq.s32.totalorder %s19, 0
      %p123 = por %p121, %p122
      %p124 = scmp.ne.s32.totalorder %s116, %s118
      %p125 = scmp.eq.s32.totalorder %s24, 1
      %p126 = por %p124, %p125
      %p127 = scmp.ne.s32.totalorder %s118, %s119
      %p128 = scmp.eq.s32.totalorder %s24, 0
      %p129 = por %p127, %p128
      %p130 = scmp.ne.s32.totalorder %s118, %s119
      %p131 = scmp.eq.s32.totalorder %s25, 1
      %p132 = por %p130, %p131
      %p134 = scmp.ne.s32.totalorder %s119, %s133
      %p135 = scmp.eq.s32.totalorder %s25, 0
      %p136 = por %p134, %p135
      %s138 = sadd.s32 %s137, 1
      %p141 = scmp.eq.s32.totalorder %s19, 1
      %p142 = scmp.ne.s32.totalorder %s137, %s139
      %p143 = scmp.eq.s32.totalorder %s19, 0
      %p144 = por %p142, %p143
      %p145 = scmp.ne.s32.totalorder %s137, %s139
      %p146 = scmp.eq.s32.totalorder %s24, 1
      %p147 = por %p145, %p146
      %p148 = scmp.ne.s32.totalorder %s139, %s140
      %p149 = scmp.eq.s32.totalorder %s24, 0
      %p150 = por %p148, %p149
      %p151 = scmp.ne.s32.totalorder %s139, %s140
      %p152 = scmp.eq.s32.totalorder %s25, 1
      %p153 = por %p151, %p152
      %p155 = scmp.ne.s32.totalorder %s140, %s154
      %p156 = scmp.eq.s32.totalorder %s25, 0
      %p157 = por %p155, %p156
      %s159 = sadd.s32 %s158, 1
      %p162 = scmp.eq.s32.totalorder %s19, 1
      %p163 = scmp.ne.s32.totalorder %s158, %s160
      %p164 = scmp.eq.s32.totalorder %s19, 0
      %p165 = por %p163, %p164
      %p166 = scmp.ne.s32.totalorder %s158, %s160
      %p167 = scmp.eq.s32.totalorder %s24, 1
      %p168 = por %p166, %p167
      %p169 = scmp.ne.s32.totalorder %s160, %s161
      %p170 = scmp.eq.s32.totalorder %s24, 0
      %p171 = por %p169, %p170
      %p172 = scmp.ne.s32.totalorder %s160, %s161
      %p173 = scmp.eq.s32.totalorder %s25, 1
      %p174 = por %p172, %p173
      %p176 = scmp.ne.s32.totalorder %s161, %s175
      %p177 = scmp.eq.s32.totalorder %s25, 0
      %p178 = por %p176, %p177
      %s180 = sadd.s32 %s179, 1
      %p183 = scmp.eq.s32.totalorder %s19, 1
      %p184 = scmp.ne.s32.totalorder %s179, %s181
      %p185 = scmp.eq.s32.totalorder %s19, 0
      %p186 = por %p184, %p185
      %p187 = scmp.ne.s32.totalorder %s179, %s181
      %p188 = scmp.eq.s32.totalorder %s24, 1
      %p189 = por %p187, %p188
      %p190 = scmp.ne.s32.totalorder %s181, %s182
      %p191 = scmp.eq.s32.totalorder %s24, 0
      %p192 = por %p190, %p191
      %p193 = scmp.ne.s32.totalorder %s181, %s182
      %p194 = scmp.eq.s32.totalorder %s25, 1
      %p195 = por %p193, %p194
      %p197 = scmp.ne.s32.totalorder %s182, %s196
      %p198 = scmp.eq.s32.totalorder %s25, 0
      %p199 = por %p197, %p198
      %s201 = sadd.s32 %s200, 1
      %p204 = scmp.eq.s32.totalorder %s19, 1
      %p205 = scmp.ne.s32.totalorder %s200, %s202
      %p206 = scmp.eq.s32.totalorder %s19, 0
      %p207 = por %p205, %p206
      %p208 = scmp.ne.s32.totalorder %s200, %s202
      %p209 = scmp.eq.s32.totalorder %s24, 1
      %p210 = por %p208, %p209
      %p211 = scmp.ne.s32.totalorder %s202, %s203
      %p212 = scmp.eq.s32.totalorder %s24, 0
      %p213 = por %p211, %p212
      %p214 = scmp.ne.s32.totalorder %s202, %s203
      %p215 = scmp.eq.s32.totalorder %s25, 1
      %p216 = por %p214, %p215
      %p218 = scmp.ne.s32.totalorder %s203, %s217
      %p219 = scmp.eq.s32.totalorder %s25, 0
      %p220 = por %p218, %p219
      %s222 = sadd.s32 %s221, 1
      %p225 = scmp.eq.s32.totalorder %s19, 1
      %p226 = scmp.ne.s32.totalorder %s221, %s223
      %p227 = scmp.eq.s32.totalorder %s19, 0
      %p228 = por %p226, %p227
      %p229 = scmp.ne.s32.totalorder %s221, %s223
      %p230 = scmp.eq.s32.totalorder %s24, 1
      %p231 = por %p229, %p230
      %p232 = scmp.ne.s32.totalorder %s223, %s224
      %p233 = scmp.eq.s32.totalorder %s24, 0
      %p234 = por %p232, %p233
      %p235 = scmp.ne.s32.totalorder %s223, %s224
      %p236 = scmp.eq.s32.totalorder %s25, 1
      %p237 = por %p235, %p236
      %p239 = scmp.ne.s32.totalorder %s224, %s238
      %p240 = scmp.eq.s32.totalorder %s25, 0
      %p241 = por %p239, %p240
      %s242 = ssub.s32 %s19, %s26
      %p243 = scmp.eq.s32.totalorder %s242, 0
      %s245 = sadd.s32 %s244, 1
      %s246 = scalar_select %p243, %s244, %s245
      %p249 = pneg %p243
      %p250 = scmp.eq.s32.totalorder %s19, 1
      %p251 = por %p249, %p250
      %p252 = scmp.ne.s32.totalorder %s244, %s247
      %p253 = scmp.eq.s32.totalorder %s19, 0
      %p254 = por %p252, %p253
      %p255 = scmp.ne.s32.totalorder %s244, %s247
      %p256 = scmp.eq.s32.totalorder %s24, 1
      %p257 = por %p255, %p256
      %p258 = scmp.ne.s32.totalorder %s247, %s248
      %p259 = scmp.eq.s32.totalorder %s24, 0
      %p260 = por %p258, %p259
      %p261 = scmp.ne.s32.totalorder %s247, %s248
      %p262 = scmp.eq.s32.totalorder %s25, 1
      %p263 = por %p261, %p262
      %p265 = scmp.ne.s32.totalorder %s248, %s264
      %p266 = scmp.eq.s32.totalorder %s25, 0
      %p267 = por %p265, %p266
      %s269 = sadd.s32 %s268, 1
      %p272 = scmp.eq.s32.totalorder %s19, 1
      %p273 = scmp.ne.s32.totalorder %s268, %s270
      %p274 = scmp.eq.s32.totalorder %s19, 0
      %p275 = por %p273, %p274
      %p276 = scmp.ne.s32.totalorder %s268, %s270
      %p277 = scmp.eq.s32.totalorder %s24, 1
      %p278 = por %p276, %p277
      %p279 = scmp.ne.s32.totalorder %s270, %s271
      %p280 = scmp.eq.s32.totalorder %s24, 0
      %p281 = por %p279, %p280
      %p282 = scmp.ne.s32.totalorder %s270, %s271
      %p283 = scmp.eq.s32.totalorder %s25, 1
      %p284 = por %p282, %p283
      %p286 = scmp.ne.s32.totalorder %s271, %s285
      %p287 = scmp.eq.s32.totalorder %s25, 0
      %p288 = por %p286, %p287
      %p289 = scmp.le.s32.totalorder 1, %s19
      %p290 = scmp.lt.s32.totalorder %s19, 3
      %p291 = pnand %p289, %p290
      %p292 = pneg %p291
      // Predicated region
      $region9: #{graph_level_triples_mlp.1} parent=5 // pred_check
        _
      $region10: #{graph_level_triples_mlp.1} parent=5 // pred_check_branch
        %294 = sbr.rel (%p291) target = $region12
      $region11: #{graph_level_triples_mlp.1} parent=5 // pred_region
        %s295 = ssub.s32 %s19, 1
        // Predicated region
        $region13: #{graph_level_triples_mlp.1} parent=11 // pred_check
          %p296 = pneg %p66
        $region14: #{graph_level_triples_mlp.1} parent=11 // pred_check_branch
          %298 = sbr.rel (%p296) target = $region16
        $region15: #{graph_level_triples_mlp.1} parent=11 // pred_region
          _
        $region16: #{graph_level_triples_mlp.1} parent=11 // pred_fallthru
          _
        // Predicated region
        $region17: #{graph_level_triples_mlp.1} parent=11 // pred_check
          %p299 = pneg %p87
        $region18: #{graph_level_triples_mlp.1} parent=11 // pred_check_branch
          %301 = sbr.rel (%p299) target = $region20
        $region19: #{graph_level_triples_mlp.1} parent=11 // pred_region
          _
        $region20: #{graph_level_triples_mlp.1} parent=11 // pred_fallthru
          _
        // Predicated region
        $region21: #{graph_level_triples_mlp.1} parent=11 // pred_check
          %p302 = pneg %p108
        $region22: #{graph_level_triples_mlp.1} parent=11 // pred_check_branch
          %304 = sbr.rel (%p302) target = $region24
        $region23: #{graph_level_triples_mlp.1} parent=11 // pred_region
          _
        $region24: #{graph_level_triples_mlp.1} parent=11 // pred_fallthru
          _
        // Predicated region
        $region25: #{graph_level_triples_mlp.1} parent=11 // pred_check
          %p305 = pneg %p129
        $region26: #{graph_level_triples_mlp.1} parent=11 // pred_check_branch
          %307 = sbr.rel (%p305) target = $region28
        $region27: #{graph_level_triples_mlp.1} parent=11 // pred_region
          _
        $region28: #{graph_level_triples_mlp.1} parent=11 // pred_fallthru
          _
        // Predicated region
        $region29: #{graph_level_triples_mlp.1} parent=11 // pred_check
          %p308 = pneg %p150
        $region30: #{graph_level_triples_mlp.1} parent=11 // pred_check_branch
          %310 = sbr.rel (%p308) target = $region32
        $region31: #{graph_level_triples_mlp.1} parent=11 // pred_region
          _
        $region32: #{graph_level_triples_mlp.1} parent=11 // pred_fallthru
          _
        // Predicated region
        $region33: #{graph_level_triples_mlp.1} parent=11 // pred_check
          %p311 = pneg %p171
        $region34: #{graph_level_triples_mlp.1} parent=11 // pred_check_branch
          %313 = sbr.rel (%p311) target = $region36
        $region35: #{graph_level_triples_mlp.1} parent=11 // pred_region
          _
        $region36: #{graph_level_triples_mlp.1} parent=11 // pred_fallthru
          _
        // Predicated region
        $region37: #{graph_level_triples_mlp.1} parent=11 // pred_check
          %p314 = pneg %p192
        $region38: #{graph_level_triples_mlp.1} parent=11 // pred_check_branch
          %316 = sbr.rel (%p314) target = $region40
        $region39: #{graph_level_triples_mlp.1} parent=11 // pred_region
          _
        $region40: #{graph_level_triples_mlp.1} parent=11 // pred_fallthru
          _
        // Predicated region
        $region41: #{graph_level_triples_mlp.1} parent=11 // pred_check
          %p317 = pneg %p213
        $region42: #{graph_level_triples_mlp.1} parent=11 // pred_check_branch
          %319 = sbr.rel (%p317) target = $region44
        $region43: #{graph_level_triples_mlp.1} parent=11 // pred_region
          _
        $region44: #{graph_level_triples_mlp.1} parent=11 // pred_fallthru
          _
        // Predicated region
        $region45: #{graph_level_triples_mlp.1} parent=11 // pred_check
          %p320 = pneg %p234
        $region46: #{graph_level_triples_mlp.1} parent=11 // pred_check_branch
          %322 = sbr.rel (%p320) target = $region48
        $region47: #{graph_level_triples_mlp.1} parent=11 // pred_region
          _
        $region48: #{graph_level_triples_mlp.1} parent=11 // pred_fallthru
          _
      $region12: #{graph_level_triples_mlp.1} parent=5 // pred_fallthru
        _
      %p323 = scmp.lt.s32.totalorder %s19, 2
      // Predicated region
      $region49: #{graph_level_triples_mlp.1} parent=5 // pred_check
        %p324 = pneg %p323
      $region50: #{graph_level_triples_mlp.1} parent=5 // pred_check_branch
        %326 = sbr.rel (%p324) target = $region52
      $region51: #{graph_level_triples_mlp.1} parent=5 // pred_region
        // Predicated region
        $region53: #{graph_level_triples_mlp.1} parent=51 // pred_check
          %p327 = pneg %p39
        $region54: #{graph_level_triples_mlp.1} parent=51 // pred_check_branch
          %329 = sbr.rel (%p327) target = $region56
        $region55: #{graph_level_triples_mlp.1} parent=51 // pred_region
          %s330 = smul.u32 128, %s19
          %s331 = ssub.s32 250, %s330
          %p332 = scmp.lt.s32.totalorder %s331, 128
          %s333 = scalar_select %p332, %s331, 128
          %s334 = smul.u32 4, %s333
          %p335 = scmp.lt.s32.totalorder %s330, 249
          %s336 = scalar_select %p335, %s330, 249
          %s337 = smul.addr %s336, 4
          %s338 = scalar_lea.vmem %s0, %s337
          %s339 = smul.u32 128, %s19
          %s340 = ssub.s32 250, %s339
          %p341 = scmp.lt.s32.totalorder %s340, 128
          %s342 = scalar_select %p341, %s340, 128
          %s343 = smul.u32 4, %s342
        $region56: #{graph_level_triples_mlp.1} parent=51 // pred_fallthru
          _
      $region52: #{graph_level_triples_mlp.1} parent=5 // pred_fallthru
        _
      %p344 = scmp.le.s32.totalorder 1, %s19
      %p345 = scmp.lt.s32.totalorder %s19, 3
      %p346 = pnand %p344, %p345
      %p347 = pneg %p346
      // Predicated region
      $region57: #{graph_level_triples_mlp.1} parent=5 // pred_check
        _
      $region58: #{graph_level_triples_mlp.1} parent=5 // pred_check_branch
        %349 = sbr.rel (%p346) target = $region60
      $region59: #{graph_level_triples_mlp.1} parent=5 // pred_region
        %s350 = ssub.s32 %s19, 1
        %s351 = smul.u32 128, %s24
        %s352 = ssub.s32 250, %s351
        %p353 = scmp.lt.s32.totalorder %s352, 128
        %s354 = scalar_select %p353, %s352, 128
        %s355 = smul.u32 4, %s354
        %p356 = scmp.lt.s32.totalorder %s351, 249
        %s357 = scalar_select %p356, %s351, 249
        %s358 = smul.addr %s357, 4
        %s359 = scalar_lea.vmem %s0, %s358
        %p360 = pneg %p45
        %p361 = pneg %p42
        %p362 = pneg %p66
        %p363 = pneg %p63
        %p364 = pneg %p87
        %p365 = pneg %p84
        %p366 = pneg %p108
        %p367 = pneg %p105
        %p368 = pneg %p129
        %p369 = pneg %p126
        %p370 = pneg %p150
        %p371 = pneg %p147
        %p372 = pneg %p171
        %p373 = pneg %p168
        %p374 = pneg %p192
        %p375 = pneg %p189
        %p376 = pneg %p213
        %p377 = pneg %p210
        %p378 = pneg %p234
        %p379 = pneg %p231
        %p380 = pneg %p260
        %p381 = pneg %p257
        %s382 = sand.u32 %s247, 1
        %s383 = sand.u32 %s247, 1
        %s384 = smul.addr %s383, 1024
        %s385 = scalar_lea.vmem [#allocation4], %s384
        %p386 = pneg %p281
        %p387 = pneg %p278
        %s388 = smul.u32 128, %s24
        %s389 = ssub.s32 250, %s388
        %p390 = scmp.lt.s32.totalorder %s389, 128
        %s391 = scalar_select %p390, %s389, 128
        %s392 = smul.u32 4, %s391
        %p393 = scmp.lt.s32.totalorder %s388, 249
        %s394 = scalar_select %p393, %s388, 249
        %s395 = smul.addr %s394, 4
        %s396 = scalar_lea.vmem %s0, %s395
        %s397 = smul.u32 128, %s24
        %s398 = ssub.s32 250, %s397
        %p399 = scmp.lt.s32.totalorder %s398, 128
        %s400 = scalar_select %p399, %s398, 128
        %s401 = smul.u32 4, %s400
        %s402 = smul.u32 128, %s24
        %s403 = ssub.s32 250, %s402
        %p404 = scmp.lt.s32.totalorder %s403, 128
        %s405 = scalar_select %p404, %s403, 128
        %s406 = smul.u32 8, %s405
        %p408 = scmp.eq.s32.totalorder %s24, 0
        // Predicated region
        $region61: #{graph_level_triples_mlp.1} parent=59 // pred_check
          %p409 = pneg %p408
        $region62: #{graph_level_triples_mlp.1} parent=59 // pred_check_branch
          %411 = sbr.rel (%p409) target = $region64
        $region63: #{graph_level_triples_mlp.1} parent=59 // pred_region
          %412 = vst [vmem:[#allocation2] sm:$0x1] 0.0
          %413 = vst [vmem:[#allocation3] sm:$0x1] 0.0
        $region64: #{graph_level_triples_mlp.1} parent=59 // pred_fallthru
          _
        %v414 = vld [vmem:[%s396] sm:$0xf]
        %v415 = vld [vmem:[%s396 + $0x4] sm:$0xf]
        %v416 = vld [vmem:[%s396 + $0x8] sm:$0xf]
        %v417 = vld [vmem:[%s396 + $0xc] sm:$0xf]
        %v418 = vld [vmem:[%s396 + $0x10] sm:$0xf]
        %v419 = vld [vmem:[%s396 + $0x14] sm:$0xf]
        %v420 = vld [vmem:[%s396 + $0x18] sm:$0xf]
        %v421 = vld [vmem:[%s396 + $0x1c] sm:$0xf]
        %v422 = vld [vmem:[%s396 + $0x20] sm:$0xf]
        %v423 = vld [vmem:[%s396 + $0x24] sm:$0xf]
        %v424 = vld [vmem:[%s396 + $0x28] sm:$0xf]
        %v425 = vld [vmem:[%s396 + $0x2c] sm:$0xf]
        %v426 = vld [vmem:[%s396 + $0x30] sm:$0xf]
        %v427 = vld [vmem:[%s396 + $0x34] sm:$0xf]
        %v428 = vld [vmem:[%s396 + $0x38] sm:$0xf]
        %v429 = vld [vmem:[%s396 + $0x3c] sm:$0xf]
        %v430 = vld [vmem:[%s396 + $0x40] sm:$0xf]
        %v431 = vld [vmem:[%s396 + $0x44] sm:$0xf]
        %v432 = vld [vmem:[%s396 + $0x48] sm:$0xf]
        %v433 = vld [vmem:[%s396 + $0x4c] sm:$0xf]
        %v434 = vld [vmem:[%s396 + $0x50] sm:$0xf]
        %v435 = vld [vmem:[%s396 + $0x54] sm:$0xf]
        %v436 = vld [vmem:[%s396 + $0x58] sm:$0xf]
        %v437 = vld [vmem:[%s396 + $0x5c] sm:$0xf]
        %v438 = vld [vmem:[%s396 + $0x60] sm:$0xf]
        %v439 = vld [vmem:[%s396 + $0x64] sm:$0xf]
        %v440 = vld [vmem:[%s396 + $0x68] sm:$0xf]
        %v441 = vld [vmem:[%s396 + $0x6c] sm:$0xf]
        %v442 = vld [vmem:[%s396 + $0x70] sm:$0xf]
        %v443 = vld [vmem:[%s396 + $0x74] sm:$0xf]
        %v444 = vld [vmem:[%s396 + $0x78] sm:$0xf]
        %v445 = vld [vmem:[%s396 + $0x7c] sm:$0xf]
        %v446 = vld [vmem:[%s396 + $0x80] sm:$0xf]
        %v447 = vld [vmem:[%s396 + $0x84] sm:$0xf]
        %v448 = vld [vmem:[%s396 + $0x88] sm:$0xf]
        %v449 = vld [vmem:[%s396 + $0x8c] sm:$0xf]
        %v450 = vld [vmem:[%s396 + $0x90] sm:$0xf]
        %v451 = vld [vmem:[%s396 + $0x94] sm:$0xf]
        %v452 = vld [vmem:[%s396 + $0x98] sm:$0xf]
        %v453 = vld [vmem:[%s396 + $0x9c] sm:$0xf]
        %v454 = vld [vmem:[%s396 + $0xa0] sm:$0xf]
        %v455 = vld [vmem:[%s396 + $0xa4] sm:$0xf]
        %v456 = vld [vmem:[%s396 + $0xa8] sm:$0xf]
        %v457 = vld [vmem:[%s396 + $0xac] sm:$0xf]
        %v458 = vld [vmem:[%s396 + $0xb0] sm:$0xf]
        %v459 = vld [vmem:[%s396 + $0xb4] sm:$0xf]
        %v460 = vld [vmem:[%s396 + $0xb8] sm:$0xf]
        %v461 = vld [vmem:[%s396 + $0xbc] sm:$0xf]
        %v462 = vld [vmem:[%s396 + $0xc0] sm:$0xf]
        %v463 = vld [vmem:[%s396 + $0xc4] sm:$0xf]
        %v464 = vld [vmem:[%s396 + $0xc8] sm:$0xf]
        %v465 = vld [vmem:[%s396 + $0xcc] sm:$0xf]
        %v466 = vld [vmem:[%s396 + $0xd0] sm:$0xf]
        %v467 = vld [vmem:[%s396 + $0xd4] sm:$0xf]
        %v468 = vld [vmem:[%s396 + $0xd8] sm:$0xf]
        %v469 = vld [vmem:[%s396 + $0xdc] sm:$0xf]
        %v470 = vld [vmem:[%s396 + $0xe0] sm:$0xf]
        %v471 = vld [vmem:[%s396 + $0xe4] sm:$0xf]
        %v472 = vld [vmem:[%s396 + $0xe8] sm:$0xf]
        %v473 = vld [vmem:[%s396 + $0xec] sm:$0xf]
        %v474 = vld [vmem:[%s396 + $0xf0] sm:$0xf]
        %v475 = vld [vmem:[%s396 + $0xf4] sm:$0xf]
        %v476 = vld [vmem:[%s396 + $0xf8] sm:$0xf]
        %v477 = vld [vmem:[%s396 + $0xfc] sm:$0xf]
        %v478 = vld [vmem:[%s396 + $0x100] sm:$0xf]
        %v479 = vld [vmem:[%s396 + $0x104] sm:$0xf]
        %v480 = vld [vmem:[%s396 + $0x108] sm:$0xf]
        %v481 = vld [vmem:[%s396 + $0x10c] sm:$0xf]
        %v482 = vld [vmem:[%s396 + $0x110] sm:$0xf]
        %v483 = vld [vmem:[%s396 + $0x114] sm:$0xf]
        %v484 = vld [vmem:[%s396 + $0x118] sm:$0xf]
        %v485 = vld [vmem:[%s396 + $0x11c] sm:$0xf]
        %v486 = vld [vmem:[%s396 + $0x120] sm:$0xf]
        %v487 = vld [vmem:[%s396 + $0x124] sm:$0xf]
        %v488 = vld [vmem:[%s396 + $0x128] sm:$0xf]
        %v489 = vld [vmem:[%s396 + $0x12c] sm:$0xf]
        %v490 = vld [vmem:[%s396 + $0x130] sm:$0xf]
        %v491 = vld [vmem:[%s396 + $0x134] sm:$0xf]
        %v492 = vld [vmem:[%s396 + $0x138] sm:$0xf]
        %v493 = vld [vmem:[%s396 + $0x13c] sm:$0xf]
        %v494 = vld [vmem:[%s396 + $0x140] sm:$0xf]
        %v495 = vld [vmem:[%s396 + $0x144] sm:$0xf]
        %v496 = vld [vmem:[%s396 + $0x148] sm:$0xf]
        %v497 = vld [vmem:[%s396 + $0x14c] sm:$0xf]
        %v498 = vld [vmem:[%s396 + $0x150] sm:$0xf]
        %v499 = vld [vmem:[%s396 + $0x154] sm:$0xf]
        %v500 = vld [vmem:[%s396 + $0x158] sm:$0xf]
        %v501 = vld [vmem:[%s396 + $0x15c] sm:$0xf]
        %v502 = vld [vmem:[%s396 + $0x160] sm:$0xf]
        %v503 = vld [vmem:[%s396 + $0x164] sm:$0xf]
        %v504 = vld [vmem:[%s396 + $0x168] sm:$0xf]
        %v505 = vld [vmem:[%s396 + $0x16c] sm:$0xf]
        %v506 = vld [vmem:[%s396 + $0x170] sm:$0xf]
        %v507 = vld [vmem:[%s396 + $0x174] sm:$0xf]
        %v508 = vld [vmem:[%s396 + $0x178] sm:$0xf]
        %v509 = vld [vmem:[%s396 + $0x17c] sm:$0xf]
        %v510 = vld [vmem:[%s396 + $0x180] sm:$0xf]
        %v511 = vld [vmem:[%s396 + $0x184] sm:$0xf]
        %v512 = vld [vmem:[%s396 + $0x188] sm:$0xf]
        %v513 = vld [vmem:[%s396 + $0x18c] sm:$0xf]
        %v514 = vld [vmem:[%s396 + $0x190] sm:$0xf]
        %v515 = vld [vmem:[%s396 + $0x194] sm:$0xf]
        %v516 = vld [vmem:[%s396 + $0x198] sm:$0xf]
        %v517 = vld [vmem:[%s396 + $0x19c] sm:$0xf]
        %v518 = vld [vmem:[%s396 + $0x1a0] sm:$0xf]
        %v519 = vld [vmem:[%s396 + $0x1a4] sm:$0xf]
        %v520 = vld [vmem:[%s396 + $0x1a8] sm:$0xf]
        %v521 = vld [vmem:[%s396 + $0x1ac] sm:$0xf]
        %v522 = vld [vmem:[%s396 + $0x1b0] sm:$0xf]
        %v523 = vld [vmem:[%s396 + $0x1b4] sm:$0xf]
        %v524 = vld [vmem:[%s396 + $0x1b8] sm:$0xf]
        %v525 = vld [vmem:[%s396 + $0x1bc] sm:$0xf]
        %v526 = vld [vmem:[%s396 + $0x1c0] sm:$0xf]
        %v527 = vld [vmem:[%s396 + $0x1c4] sm:$0xf]
        %v528 = vld [vmem:[%s396 + $0x1c8] sm:$0xf]
        %v529 = vld [vmem:[%s396 + $0x1cc] sm:$0xf]
        %v530 = vld [vmem:[%s396 + $0x1d0] sm:$0xf]
        %v531 = vld [vmem:[%s396 + $0x1d4] sm:$0xf]
        %v532 = vld [vmem:[%s396 + $0x1d8] sm:$0xf]
        %v533 = vld [vmem:[%s396 + $0x1dc] sm:$0xf]
        %v534 = vld [vmem:[%s396 + $0x1e0] sm:$0xf]
        %v535 = vld [vmem:[%s396 + $0x1e4] sm:$0xf]
        %v536 = vld [vmem:[%s396 + $0x1e8] sm:$0xf]
        %v537 = vld [vmem:[%s396 + $0x1ec] sm:$0xf]
        %v538 = vld [vmem:[%s396 + $0x1f0] sm:$0xf]
        %v539 = vld [vmem:[%s396 + $0x1f4] sm:$0xf]
        %v540 = vld [vmem:[%s396 + $0x1f8] sm:$0xf]
        %v541 = vld [vmem:[%s396 + $0x1fc] sm:$0xf]
        %v542 = vld [vmem:[%s1] sm:$0xf]
        %v543 = vld [vmem:[%s1 + $0x4] sm:$0xf]
        %v544 = vld [vmem:[%s1 + $0x8] sm:$0xf]
        %v545 = vld [vmem:[%s1 + $0xc] sm:$0xf]
        %v546 = vld [vmem:[%s2] sm:$0x1]
        %v548 = vperm.slane %v546, 0
        %v678 = vunpack.c.l.b16 %v414
        %v679 = vunpack.c.l.b16 %v415
        %v680 = vunpack.c.l.b16 %v416
        %v681 = vunpack.c.l.b16 %v417
        %v682 = vunpack.c.l.b16 %v418
        %v683 = vunpack.c.l.b16 %v419
        %v684 = vunpack.c.l.b16 %v420
        %v685 = vunpack.c.l.b16 %v421
        %v686 = vunpack.c.l.b16 %v422
        %v687 = vunpack.c.l.b16 %v423
        %v688 = vunpack.c.l.b16 %v424
        %v689 = vunpack.c.l.b16 %v425
        %v690 = vunpack.c.l.b16 %v426
        %v691 = vunpack.c.l.b16 %v427
        %v692 = vunpack.c.l.b16 %v428
        %v693 = vunpack.c.l.b16 %v429
        %v694 = vunpack.c.l.b16 %v430
        %v695 = vunpack.c.l.b16 %v431
        %v696 = vunpack.c.l.b16 %v432
        %v697 = vunpack.c.l.b16 %v433
        %v698 = vunpack.c.l.b16 %v434
        %v699 = vunpack.c.l.b16 %v435
        %v700 = vunpack.c.l.b16 %v436
        %v701 = vunpack.c.l.b16 %v437
        %v702 = vunpack.c.l.b16 %v438
        %v703 = vunpack.c.l.b16 %v439
        %v704 = vunpack.c.l.b16 %v440
        %v705 = vunpack.c.l.b16 %v441
        %v706 = vunpack.c.l.b16 %v442
        %v707 = vunpack.c.l.b16 %v443
        %v708 = vunpack.c.l.b16 %v444
        %v709 = vunpack.c.l.b16 %v445
        %v710 = vunpack.c.l.b16 %v446
        %v711 = vunpack.c.l.b16 %v447
        %v712 = vunpack.c.l.b16 %v448
        %v713 = vunpack.c.l.b16 %v449
        %v714 = vunpack.c.l.b16 %v450
        %v715 = vunpack.c.l.b16 %v451
        %v716 = vunpack.c.l.b16 %v452
        %v717 = vunpack.c.l.b16 %v453
        %v718 = vunpack.c.l.b16 %v454
        %v719 = vunpack.c.l.b16 %v455
        %v720 = vunpack.c.l.b16 %v456
        %v721 = vunpack.c.l.b16 %v457
        %v722 = vunpack.c.l.b16 %v458
        %v723 = vunpack.c.l.b16 %v459
        %v724 = vunpack.c.l.b16 %v460
        %v725 = vunpack.c.l.b16 %v461
        %v726 = vunpack.c.l.b16 %v462
        %v727 = vunpack.c.l.b16 %v463
        %v728 = vunpack.c.l.b16 %v464
        %v729 = vunpack.c.l.b16 %v465
        %v730 = vunpack.c.l.b16 %v466
        %v731 = vunpack.c.l.b16 %v467
        %v732 = vunpack.c.l.b16 %v468
        %v733 = vunpack.c.l.b16 %v469
        %v734 = vunpack.c.l.b16 %v470
        %v735 = vunpack.c.l.b16 %v471
        %v736 = vunpack.c.l.b16 %v472
        %v737 = vunpack.c.l.b16 %v473
        %v738 = vunpack.c.l.b16 %v474
        %v739 = vunpack.c.l.b16 %v475
        %v740 = vunpack.c.l.b16 %v476
        %v741 = vunpack.c.l.b16 %v477
        %v742 = vunpack.c.l.b16 %v478
        %v743 = vunpack.c.l.b16 %v479
        %v744 = vunpack.c.l.b16 %v480
        %v745 = vunpack.c.l.b16 %v481
        %v746 = vunpack.c.l.b16 %v482
        %v747 = vunpack.c.l.b16 %v483
        %v748 = vunpack.c.l.b16 %v484
        %v749 = vunpack.c.l.b16 %v485
        %v750 = vunpack.c.l.b16 %v486
        %v751 = vunpack.c.l.b16 %v487
        %v752 = vunpack.c.l.b16 %v488
        %v753 = vunpack.c.l.b16 %v489
        %v754 = vunpack.c.l.b16 %v490
        %v755 = vunpack.c.l.b16 %v491
        %v756 = vunpack.c.l.b16 %v492
        %v757 = vunpack.c.l.b16 %v493
        %v758 = vunpack.c.l.b16 %v494
        %v759 = vunpack.c.l.b16 %v495
        %v760 = vunpack.c.l.b16 %v496
        %v761 = vunpack.c.l.b16 %v497
        %v762 = vunpack.c.l.b16 %v498
        %v763 = vunpack.c.l.b16 %v499
        %v764 = vunpack.c.l.b16 %v500
        %v765 = vunpack.c.l.b16 %v501
        %v766 = vunpack.c.l.b16 %v502
        %v767 = vunpack.c.l.b16 %v503
        %v768 = vunpack.c.l.b16 %v504
        %v769 = vunpack.c.l.b16 %v505
        %v770 = vunpack.c.l.b16 %v506
        %v771 = vunpack.c.l.b16 %v507
        %v772 = vunpack.c.l.b16 %v508
        %v773 = vunpack.c.l.b16 %v509
        %v774 = vunpack.c.l.b16 %v510
        %v775 = vunpack.c.l.b16 %v511
        %v776 = vunpack.c.l.b16 %v512
        %v777 = vunpack.c.l.b16 %v513
        %v778 = vunpack.c.l.b16 %v514
        %v779 = vunpack.c.l.b16 %v515
        %v780 = vunpack.c.l.b16 %v516
        %v781 = vunpack.c.l.b16 %v517
        %v782 = vunpack.c.l.b16 %v518
        %v783 = vunpack.c.l.b16 %v519
        %v784 = vunpack.c.l.b16 %v520
        %v785 = vunpack.c.l.b16 %v521
        %v786 = vunpack.c.l.b16 %v522
        %v787 = vunpack.c.l.b16 %v523
        %v788 = vunpack.c.l.b16 %v524
        %v789 = vunpack.c.l.b16 %v525
        %v790 = vunpack.c.l.b16 %v526
        %v791 = vunpack.c.l.b16 %v527
        %v792 = vunpack.c.l.b16 %v528
        %v793 = vunpack.c.l.b16 %v529
        %v794 = vunpack.c.l.b16 %v530
        %v795 = vunpack.c.l.b16 %v531
        %v796 = vunpack.c.l.b16 %v532
        %v797 = vunpack.c.l.b16 %v533
        %v798 = vunpack.c.l.b16 %v534
        %v799 = vunpack.c.l.b16 %v535
        %v800 = vunpack.c.l.b16 %v536
        %v801 = vunpack.c.l.b16 %v537
        %v802 = vunpack.c.l.b16 %v538
        %v803 = vunpack.c.l.b16 %v539
        %v804 = vunpack.c.l.b16 %v540
        %v805 = vunpack.c.l.b16 %v541
        %v806 = vpack.c.b16 %v679, %v678
        %v807 = vpack.c.b16 %v681, %v680
        %v808 = vpack.c.b16 %v683, %v682
        %v809 = vpack.c.b16 %v685, %v684
        %v810 = vpack.c.b16 %v687, %v686
        %v811 = vpack.c.b16 %v689, %v688
        %v812 = vpack.c.b16 %v691, %v690
        %v813 = vpack.c.b16 %v693, %v692
        %v814 = vpack.c.b16 %v695, %v694
        %v815 = vpack.c.b16 %v697, %v696
        %v816 = vpack.c.b16 %v699, %v698
        %v817 = vpack.c.b16 %v701, %v700
        %v818 = vpack.c.b16 %v703, %v702
        %v819 = vpack.c.b16 %v705, %v704
        %v820 = vpack.c.b16 %v707, %v706
        %v821 = vpack.c.b16 %v709, %v708
        %v822 = vpack.c.b16 %v711, %v710
        %v823 = vpack.c.b16 %v713, %v712
        %v824 = vpack.c.b16 %v715, %v714
        %v825 = vpack.c.b16 %v717, %v716
        %v826 = vpack.c.b16 %v719, %v718
        %v827 = vpack.c.b16 %v721, %v720
        %v828 = vpack.c.b16 %v723, %v722
        %v829 = vpack.c.b16 %v725, %v724
        %v830 = vpack.c.b16 %v727, %v726
        %v831 = vpack.c.b16 %v729, %v728
        %v832 = vpack.c.b16 %v731, %v730
        %v833 = vpack.c.b16 %v733, %v732
        %v834 = vpack.c.b16 %v735, %v734
        %v835 = vpack.c.b16 %v737, %v736
        %v836 = vpack.c.b16 %v739, %v738
        %v837 = vpack.c.b16 %v741, %v740
        %v838 = vpack.c.b16 %v743, %v742
        %v839 = vpack.c.b16 %v745, %v744
        %v840 = vpack.c.b16 %v747, %v746
        %v841 = vpack.c.b16 %v749, %v748
        %v842 = vpack.c.b16 %v751, %v750
        %v843 = vpack.c.b16 %v753, %v752
        %v844 = vpack.c.b16 %v755, %v754
        %v845 = vpack.c.b16 %v757, %v756
        %v846 = vpack.c.b16 %v759, %v758
        %v847 = vpack.c.b16 %v761, %v760
        %v848 = vpack.c.b16 %v763, %v762
        %v849 = vpack.c.b16 %v765, %v764
        %v850 = vpack.c.b16 %v767, %v766
        %v851 = vpack.c.b16 %v769, %v768
        %v852 = vpack.c.b16 %v771, %v770
        %v853 = vpack.c.b16 %v773, %v772
        %v854 = vpack.c.b16 %v775, %v774
        %v855 = vpack.c.b16 %v777, %v776
        %v856 = vpack.c.b16 %v779, %v778
        %v857 = vpack.c.b16 %v781, %v780
        %v858 = vpack.c.b16 %v783, %v782
        %v859 = vpack.c.b16 %v785, %v784
        %v860 = vpack.c.b16 %v787, %v786
        %v861 = vpack.c.b16 %v789, %v788
        %v862 = vpack.c.b16 %v791, %v790
        %v863 = vpack.c.b16 %v793, %v792
        %v864 = vpack.c.b16 %v795, %v794
        %v865 = vpack.c.b16 %v797, %v796
        %v866 = vpack.c.b16 %v799, %v798
        %v867 = vpack.c.b16 %v801, %v800
        %v868 = vpack.c.b16 %v803, %v802
        %v869 = vpack.c.b16 %v805, %v804
        %v874 = vunpack.c.l.b16 %v542
        %v875 = vunpack.c.l.b16 %v543
        %v876 = vunpack.c.l.b16 %v544
        %v877 = vunpack.c.l.b16 %v545
        %v878 = vpack.c.b16 %v875, %v874
        %v879 = vpack.c.b16 %v877, %v876
        %vm882 = vcmask 261120
        %v884 = vsel %vm882, %v806, 0
        %v887 = vsel %vm882, %v807, 0
        %v890 = vsel %vm882, %v808, 0
        %v893 = vsel %vm882, %v809, 0
        %v896 = vsel %vm882, %v810, 0
        %v899 = vsel %vm882, %v811, 0
        %v902 = vsel %vm882, %v812, 0
        %v905 = vsel %vm882, %v813, 0
        %v908 = vsel %vm882, %v814, 0
        %v911 = vsel %vm882, %v815, 0
        %v914 = vsel %vm882, %v816, 0
        %v917 = vsel %vm882, %v817, 0
        %v920 = vsel %vm882, %v818, 0
        %v923 = vsel %vm882, %v819, 0
        %v926 = vsel %vm882, %v820, 0
        %v929 = vsel %vm882, %v821, 0
        %v932 = vsel %vm882, %v822, 0
        %v935 = vsel %vm882, %v823, 0
        %v938 = vsel %vm882, %v824, 0
        %v941 = vsel %vm882, %v825, 0
        %v944 = vsel %vm882, %v826, 0
        %v947 = vsel %vm882, %v827, 0
        %v950 = vsel %vm882, %v828, 0
        %v953 = vsel %vm882, %v829, 0
        %v956 = vsel %vm882, %v830, 0
        %v959 = vsel %vm882, %v831, 0
        %v962 = vsel %vm882, %v832, 0
        %v965 = vsel %vm882, %v833, 0
        %v968 = vsel %vm882, %v834, 0
        %v971 = vsel %vm882, %v835, 0
        %v974 = vsel %vm882, %v836, 0
        %v977 = vsel %vm882, %v837, 0
        %v980 = vsel %vm882, %v838, 0
        %v983 = vsel %vm882, %v839, 0
        %v986 = vsel %vm882, %v840, 0
        %v989 = vsel %vm882, %v841, 0
        %v992 = vsel %vm882, %v842, 0
        %v995 = vsel %vm882, %v843, 0
        %v998 = vsel %vm882, %v844, 0
        %v1001 = vsel %vm882, %v845, 0
        %v1004 = vsel %vm882, %v846, 0
        %v1007 = vsel %vm882, %v847, 0
        %v1010 = vsel %vm882, %v848, 0
        %v1013 = vsel %vm882, %v849, 0
        %v1016 = vsel %vm882, %v850, 0
        %v1019 = vsel %vm882, %v851, 0
        %v1022 = vsel %vm882, %v852, 0
        %v1025 = vsel %vm882, %v853, 0
        %v1028 = vsel %vm882, %v854, 0
        %v1031 = vsel %vm882, %v855, 0
        %v1034 = vsel %vm882, %v856, 0
        %v1037 = vsel %vm882, %v857, 0
        %v1040 = vsel %vm882, %v858, 0
        %v1043 = vsel %vm882, %v859, 0
        %v1046 = vsel %vm882, %v860, 0
        %v1049 = vsel %vm882, %v861, 0
        %v1052 = vsel %vm882, %v862, 0
        %v1055 = vsel %vm882, %v863, 0
        %v1058 = vsel %vm882, %v864, 0
        %v1061 = vsel %vm882, %v865, 0
        %v1064 = vsel %vm882, %v866, 0
        %v1067 = vsel %vm882, %v867, 0
        %v1070 = vsel %vm882, %v868, 0
        %v1073 = vsel %vm882, %v869, 0
        %1075 = vmatpush.bf16.msra.mxu0 0
        %1076 = vmatpush.bf16.msra.mxu0 0
        %1077 = vmatpush.bf16.msra.mxu0 0
        %1078 = vmatpush.bf16.msra.mxu0 0
        %1079 = vmatpush.bf16.msra.mxu0 0
        %1080 = vmatpush.bf16.msra.mxu0 0
        %1081 = vmatpush.bf16.msra.mxu0 %v879
        %1082 = vmatpush.bf16.msra.mxu0 %v878
        %1083 = vmatmul.bf16.gmra.mxu0 %v884
        %v1084 = vpop.f32.mrf.mxu0
        %v1085 = vadd.f32 %v548, %v1084
        %v1086 = vpop.f32.mrf.mxu0
        %v1087 = vadd.f32 %v548, %v1086
        %1088 = vmatmul.bf16.gmra.mxu0 %v887
        %v1089 = vpop.f32.mrf.mxu0
        %v1090 = vadd.f32 %v548, %v1089
        %v1091 = vpop.f32.mrf.mxu0
        %v1092 = vadd.f32 %v548, %v1091
        %1093 = vmatmul.bf16.gmra.mxu0 %v890
        %v1094 = vpop.f32.mrf.mxu0
        %v1095 = vadd.f32 %v548, %v1094
        %v1096 = vpop.f32.mrf.mxu0
        %v1097 = vadd.f32 %v548, %v1096
        %1098 = vmatmul.bf16.gmra.mxu0 %v893
        %v1099 = vpop.f32.mrf.mxu0
        %v1100 = vadd.f32 %v548, %v1099
        %v1101 = vpop.f32.mrf.mxu0
        %v1102 = vadd.f32 %v548, %v1101
        %1103 = vmatmul.bf16.gmra.mxu0 %v896
        %v1104 = vpop.f32.mrf.mxu0
        %v1105 = vadd.f32 %v548, %v1104
        %v1106 = vpop.f32.mrf.mxu0
        %v1107 = vadd.f32 %v548, %v1106
        %1108 = vmatmul.bf16.gmra.mxu0 %v899
        %v1109 = vpop.f32.mrf.mxu0
        %v1110 = vadd.f32 %v548, %v1109
        %v1111 = vpop.f32.mrf.mxu0
        %v1112 = vadd.f32 %v548, %v1111
        %1113 = vmatmul.bf16.gmra.mxu0 %v902
        %v1114 = vpop.f32.mrf.mxu0
        %v1115 = vadd.f32 %v548, %v1114
        %v1116 = vpop.f32.mrf.mxu0
        %v1117 = vadd.f32 %v548, %v1116
        %1118 = vmatmul.bf16.gmra.mxu0 %v905
        %v1119 = vpop.f32.mrf.mxu0
        %v1120 = vadd.f32 %v548, %v1119
        %v1121 = vpop.f32.mrf.mxu0
        %v1122 = vadd.f32 %v548, %v1121
        %1123 = vmatmul.bf16.gmra.mxu0 %v908
        %v1124 = vpop.f32.mrf.mxu0
        %v1125 = vadd.f32 %v548, %v1124
        %v1126 = vpop.f32.mrf.mxu0
        %v1127 = vadd.f32 %v548, %v1126
        %1128 = vmatmul.bf16.gmra.mxu0 %v911
        %v1129 = vpop.f32.mrf.mxu0
        %v1130 = vadd.f32 %v548, %v1129
        %v1131 = vpop.f32.mrf.mxu0
        %v1132 = vadd.f32 %v548, %v1131
        %1133 = vmatmul.bf16.gmra.mxu0 %v914
        %v1134 = vpop.f32.mrf.mxu0
        %v1135 = vadd.f32 %v548, %v1134
        %v1136 = vpop.f32.mrf.mxu0
        %v1137 = vadd.f32 %v548, %v1136
        %1138 = vmatmul.bf16.gmra.mxu0 %v917
        %v1139 = vpop.f32.mrf.mxu0
        %v1140 = vadd.f32 %v548, %v1139
        %v1141 = vpop.f32.mrf.mxu0
        %v1142 = vadd.f32 %v548, %v1141
        %1143 = vmatmul.bf16.gmra.mxu0 %v920
        %v1144 = vpop.f32.mrf.mxu0
        %v1145 = vadd.f32 %v548, %v1144
        %v1146 = vpop.f32.mrf.mxu0
        %v1147 = vadd.f32 %v548, %v1146
        %1148 = vmatmul.bf16.gmra.mxu0 %v923
        %v1149 = vpop.f32.mrf.mxu0
        %v1150 = vadd.f32 %v548, %v1149
        %v1151 = vpop.f32.mrf.mxu0
        %v1152 = vadd.f32 %v548, %v1151
        %1153 = vmatmul.bf16.gmra.mxu0 %v926
        %v1154 = vpop.f32.mrf.mxu0
        %v1155 = vadd.f32 %v548, %v1154
        %v1156 = vpop.f32.mrf.mxu0
        %v1157 = vadd.f32 %v548, %v1156
        %1158 = vmatmul.bf16.gmra.mxu0 %v929
        %v1159 = vpop.f32.mrf.mxu0
        %v1160 = vadd.f32 %v548, %v1159
        %v1161 = vpop.f32.mrf.mxu0
        %v1162 = vadd.f32 %v548, %v1161
        %1163 = vmatmul.bf16.gmra.mxu0 %v932
        %v1164 = vpop.f32.mrf.mxu0
        %v1165 = vadd.f32 %v548, %v1164
        %v1166 = vpop.f32.mrf.mxu0
        %v1167 = vadd.f32 %v548, %v1166
        %1168 = vmatmul.bf16.gmra.mxu0 %v935
        %v1169 = vpop.f32.mrf.mxu0
        %v1170 = vadd.f32 %v548, %v1169
        %v1171 = vpop.f32.mrf.mxu0
        %v1172 = vadd.f32 %v548, %v1171
        %1173 = vmatmul.bf16.gmra.mxu0 %v938
        %v1174 = vpop.f32.mrf.mxu0
        %v1175 = vadd.f32 %v548, %v1174
        %v1176 = vpop.f32.mrf.mxu0
        %v1177 = vadd.f32 %v548, %v1176
        %1178 = vmatmul.bf16.gmra.mxu0 %v941
        %v1179 = vpop.f32.mrf.mxu0
        %v1180 = vadd.f32 %v548, %v1179
        %v1181 = vpop.f32.mrf.mxu0
        %v1182 = vadd.f32 %v548, %v1181
        %1183 = vmatmul.bf16.gmra.mxu0 %v944
        %v1184 = vpop.f32.mrf.mxu0
        %v1185 = vadd.f32 %v548, %v1184
        %v1186 = vpop.f32.mrf.mxu0
        %v1187 = vadd.f32 %v548, %v1186
        %1188 = vmatmul.bf16.gmra.mxu0 %v947
        %v1189 = vpop.f32.mrf.mxu0
        %v1190 = vadd.f32 %v548, %v1189
        %v1191 = vpop.f32.mrf.mxu0
        %v1192 = vadd.f32 %v548, %v1191
        %1193 = vmatmul.bf16.gmra.mxu0 %v950
        %v1194 = vpop.f32.mrf.mxu0
        %v1195 = vadd.f32 %v548, %v1194
        %v1196 = vpop.f32.mrf.mxu0
        %v1197 = vadd.f32 %v548, %v1196
        %1198 = vmatmul.bf16.gmra.mxu0 %v953
        %v1199 = vpop.f32.mrf.mxu0
        %v1200 = vadd.f32 %v548, %v1199
        %v1201 = vpop.f32.mrf.mxu0
        %v1202 = vadd.f32 %v548, %v1201
        %1203 = vmatmul.bf16.gmra.mxu0 %v956
        %v1204 = vpop.f32.mrf.mxu0
        %v1205 = vadd.f32 %v548, %v1204
        %v1206 = vpop.f32.mrf.mxu0
        %v1207 = vadd.f32 %v548, %v1206
        %1208 = vmatmul.bf16.gmra.mxu0 %v959
        %v1209 = vpop.f32.mrf.mxu0
        %v1210 = vadd.f32 %v548, %v1209
        %v1211 = vpop.f32.mrf.mxu0
        %v1212 = vadd.f32 %v548, %v1211
        %1213 = vmatmul.bf16.gmra.mxu0 %v962
        %v1214 = vpop.f32.mrf.mxu0
        %v1215 = vadd.f32 %v548, %v1214
        %v1216 = vpop.f32.mrf.mxu0
        %v1217 = vadd.f32 %v548, %v1216
        %1218 = vmatmul.bf16.gmra.mxu0 %v965
        %v1219 = vpop.f32.mrf.mxu0
        %v1220 = vadd.f32 %v548, %v1219
        %v1221 = vpop.f32.mrf.mxu0
        %v1222 = vadd.f32 %v548, %v1221
        %1223 = vmatmul.bf16.gmra.mxu0 %v968
        %v1224 = vpop.f32.mrf.mxu0
        %v1225 = vadd.f32 %v548, %v1224
        %v1226 = vpop.f32.mrf.mxu0
        %v1227 = vadd.f32 %v548, %v1226
        %1228 = vmatmul.bf16.gmra.mxu0 %v971
        %v1229 = vpop.f32.mrf.mxu0
        %v1230 = vadd.f32 %v548, %v1229
        %v1231 = vpop.f32.mrf.mxu0
        %v1232 = vadd.f32 %v548, %v1231
        %1233 = vmatmul.bf16.gmra.mxu0 %v974
        %v1234 = vpop.f32.mrf.mxu0
        %v1235 = vadd.f32 %v548, %v1234
        %v1236 = vpop.f32.mrf.mxu0
        %v1237 = vadd.f32 %v548, %v1236
        %1238 = vmatmul.bf16.gmra.mxu0 %v977
        %v1239 = vpop.f32.mrf.mxu0
        %v1240 = vadd.f32 %v548, %v1239
        %v1241 = vpop.f32.mrf.mxu0
        %v1242 = vadd.f32 %v548, %v1241
        %1243 = vmatmul.bf16.gmra.mxu0 %v980
        %v1244 = vpop.f32.mrf.mxu0
        %v1245 = vadd.f32 %v548, %v1244
        %v1246 = vpop.f32.mrf.mxu0
        %v1247 = vadd.f32 %v548, %v1246
        %1248 = vmatmul.bf16.gmra.mxu0 %v983
        %v1249 = vpop.f32.mrf.mxu0
        %v1250 = vadd.f32 %v548, %v1249
        %v1251 = vpop.f32.mrf.mxu0
        %v1252 = vadd.f32 %v548, %v1251
        %1253 = vmatmul.bf16.gmra.mxu0 %v986
        %v1254 = vpop.f32.mrf.mxu0
        %v1255 = vadd.f32 %v548, %v1254
        %v1256 = vpop.f32.mrf.mxu0
        %v1257 = vadd.f32 %v548, %v1256
        %1258 = vmatmul.bf16.gmra.mxu0 %v989
        %v1259 = vpop.f32.mrf.mxu0
        %v1260 = vadd.f32 %v548, %v1259
        %v1261 = vpop.f32.mrf.mxu0
        %v1262 = vadd.f32 %v548, %v1261
        %1263 = vmatmul.bf16.gmra.mxu0 %v992
        %v1264 = vpop.f32.mrf.mxu0
        %v1265 = vadd.f32 %v548, %v1264
        %v1266 = vpop.f32.mrf.mxu0
        %v1267 = vadd.f32 %v548, %v1266
        %1268 = vmatmul.bf16.gmra.mxu0 %v995
        %v1269 = vpop.f32.mrf.mxu0
        %v1270 = vadd.f32 %v548, %v1269
        %v1271 = vpop.f32.mrf.mxu0
        %v1272 = vadd.f32 %v548, %v1271
        %1273 = vmatmul.bf16.gmra.mxu0 %v998
        %v1274 = vpop.f32.mrf.mxu0
        %v1275 = vadd.f32 %v548, %v1274
        %v1276 = vpop.f32.mrf.mxu0
        %v1277 = vadd.f32 %v548, %v1276
        %1278 = vmatmul.bf16.gmra.mxu0 %v1001
        %v1279 = vpop.f32.mrf.mxu0
        %v1280 = vadd.f32 %v548, %v1279
        %v1281 = vpop.f32.mrf.mxu0
        %v1282 = vadd.f32 %v548, %v1281
        %1283 = vmatmul.bf16.gmra.mxu0 %v1004
        %v1284 = vpop.f32.mrf.mxu0
        %v1285 = vadd.f32 %v548, %v1284
        %v1286 = vpop.f32.mrf.mxu0
        %v1287 = vadd.f32 %v548, %v1286
        %1288 = vmatmul.bf16.gmra.mxu0 %v1007
        %v1289 = vpop.f32.mrf.mxu0
        %v1290 = vadd.f32 %v548, %v1289
        %v1291 = vpop.f32.mrf.mxu0
        %v1292 = vadd.f32 %v548, %v1291
        %1293 = vmatmul.bf16.gmra.mxu0 %v1010
        %v1294 = vpop.f32.mrf.mxu0
        %v1295 = vadd.f32 %v548, %v1294
        %v1296 = vpop.f32.mrf.mxu0
        %v1297 = vadd.f32 %v548, %v1296
        %1298 = vmatmul.bf16.gmra.mxu0 %v1013
        %v1299 = vpop.f32.mrf.mxu0
        %v1300 = vadd.f32 %v548, %v1299
        %v1301 = vpop.f32.mrf.mxu0
        %v1302 = vadd.f32 %v548, %v1301
        %1303 = vmatmul.bf16.gmra.mxu0 %v1016
        %v1304 = vpop.f32.mrf.mxu0
        %v1305 = vadd.f32 %v548, %v1304
        %v1306 = vpop.f32.mrf.mxu0
        %v1307 = vadd.f32 %v548, %v1306
        %1308 = vmatmul.bf16.gmra.mxu0 %v1019
        %v1309 = vpop.f32.mrf.mxu0
        %v1310 = vadd.f32 %v548, %v1309
        %v1311 = vpop.f32.mrf.mxu0
        %v1312 = vadd.f32 %v548, %v1311
        %1313 = vmatmul.bf16.gmra.mxu0 %v1022
        %v1314 = vpop.f32.mrf.mxu0
        %v1315 = vadd.f32 %v548, %v1314
        %v1316 = vpop.f32.mrf.mxu0
        %v1317 = vadd.f32 %v548, %v1316
        %1318 = vmatmul.bf16.gmra.mxu0 %v1025
        %v1319 = vpop.f32.mrf.mxu0
        %v1320 = vadd.f32 %v548, %v1319
        %v1321 = vpop.f32.mrf.mxu0
        %v1322 = vadd.f32 %v548, %v1321
        %1323 = vmatmul.bf16.gmra.mxu0 %v1028
        %v1324 = vpop.f32.mrf.mxu0
        %v1325 = vadd.f32 %v548, %v1324
        %v1326 = vpop.f32.mrf.mxu0
        %v1327 = vadd.f32 %v548, %v1326
        %1328 = vmatmul.bf16.gmra.mxu0 %v1031
        %v1329 = vpop.f32.mrf.mxu0
        %v1330 = vadd.f32 %v548, %v1329
        %v1331 = vpop.f32.mrf.mxu0
        %v1332 = vadd.f32 %v548, %v1331
        %1333 = vmatmul.bf16.gmra.mxu0 %v1034
        %v1334 = vpop.f32.mrf.mxu0
        %v1335 = vadd.f32 %v548, %v1334
        %v1336 = vpop.f32.mrf.mxu0
        %v1337 = vadd.f32 %v548, %v1336
        %1338 = vmatmul.bf16.gmra.mxu0 %v1037
        %v1339 = vpop.f32.mrf.mxu0
        %v1340 = vadd.f32 %v548, %v1339
        %v1341 = vpop.f32.mrf.mxu0
        %v1342 = vadd.f32 %v548, %v1341
        %1343 = vmatmul.bf16.gmra.mxu0 %v1040
        %v1344 = vpop.f32.mrf.mxu0
        %v1345 = vadd.f32 %v548, %v1344
        %v1346 = vpop.f32.mrf.mxu0
        %v1347 = vadd.f32 %v548, %v1346
        %1348 = vmatmul.bf16.gmra.mxu0 %v1043
        %v1349 = vpop.f32.mrf.mxu0
        %v1350 = vadd.f32 %v548, %v1349
        %v1351 = vpop.f32.mrf.mxu0
        %v1352 = vadd.f32 %v548, %v1351
        %1353 = vmatmul.bf16.gmra.mxu0 %v1046
        %v1354 = vpop.f32.mrf.mxu0
        %v1355 = vadd.f32 %v548, %v1354
        %v1356 = vpop.f32.mrf.mxu0
        %v1357 = vadd.f32 %v548, %v1356
        %1358 = vmatmul.bf16.gmra.mxu0 %v1049
        %v1359 = vpop.f32.mrf.mxu0
        %v1360 = vadd.f32 %v548, %v1359
        %v1361 = vpop.f32.mrf.mxu0
        %v1362 = vadd.f32 %v548, %v1361
        %1363 = vmatmul.bf16.gmra.mxu0 %v1052
        %v1364 = vpop.f32.mrf.mxu0
        %v1365 = vadd.f32 %v548, %v1364
        %v1366 = vpop.f32.mrf.mxu0
        %v1367 = vadd.f32 %v548, %v1366
        %1368 = vmatmul.bf16.gmra.mxu0 %v1055
        %v1369 = vpop.f32.mrf.mxu0
        %v1370 = vadd.f32 %v548, %v1369
        %v1371 = vpop.f32.mrf.mxu0
        %v1372 = vadd.f32 %v548, %v1371
        %1373 = vmatmul.bf16.gmra.mxu0 %v1058
        %v1374 = vpop.f32.mrf.mxu0
        %v1375 = vadd.f32 %v548, %v1374
        %v1376 = vpop.f32.mrf.mxu0
        %v1377 = vadd.f32 %v548, %v1376
        %1378 = vmatmul.bf16.gmra.mxu0 %v1061
        %v1379 = vpop.f32.mrf.mxu0
        %v1380 = vadd.f32 %v548, %v1379
        %v1381 = vpop.f32.mrf.mxu0
        %v1382 = vadd.f32 %v548, %v1381
        %1383 = vmatmul.bf16.gmra.mxu0 %v1064
        %v1384 = vpop.f32.mrf.mxu0
        %v1385 = vadd.f32 %v548, %v1384
        %v1386 = vpop.f32.mrf.mxu0
        %v1387 = vadd.f32 %v548, %v1386
        %1388 = vmatmul.bf16.gmra.mxu0 %v1067
        %v1389 = vpop.f32.mrf.mxu0
        %v1390 = vadd.f32 %v548, %v1389
        %v1391 = vpop.f32.mrf.mxu0
        %v1392 = vadd.f32 %v548, %v1391
        %1393 = vmatmul.bf16.gmra.mxu0 %v1070
        %v1394 = vpop.f32.mrf.mxu0
        %v1395 = vadd.f32 %v548, %v1394
        %v1396 = vpop.f32.mrf.mxu0
        %v1397 = vadd.f32 %v548, %v1396
        %1398 = vmatmul.bf16.gmra.mxu0 %v1073
        %v1399 = vpop.f32.mrf.mxu0
        %v1400 = vadd.f32 %v548, %v1399
        %v1401 = vpop.f32.mrf.mxu0
        %v1402 = vadd.f32 %v548, %v1401
        %1403 = vdwg.mxu0
        %v1404 = vmax.f32 %v1085, 0.0
        %v1405 = vmax.f32 %v1087, 0.0
        %v1406 = vmax.f32 %v1090, 0.0
        %v1407 = vmax.f32 %v1092, 0.0
        %v1408 = vmax.f32 %v1095, 0.0
        %v1409 = vmax.f32 %v1097, 0.0
        %v1410 = vmax.f32 %v1100, 0.0
        %v1411 = vmax.f32 %v1102, 0.0
        %v1412 = vmax.f32 %v1105, 0.0
        %v1413 = vmax.f32 %v1107, 0.0
        %v1414 = vmax.f32 %v1110, 0.0
        %v1415 = vmax.f32 %v1112, 0.0
        %v1416 = vmax.f32 %v1115, 0.0
        %v1417 = vmax.f32 %v1117, 0.0
        %v1418 = vmax.f32 %v1120, 0.0
        %v1419 = vmax.f32 %v1122, 0.0
        %v1420 = vmax.f32 %v1125, 0.0
        %v1421 = vmax.f32 %v1127, 0.0
        %v1422 = vmax.f32 %v1130, 0.0
        %v1423 = vmax.f32 %v1132, 0.0
        %v1424 = vmax.f32 %v1135, 0.0
        %v1425 = vmax.f32 %v1137, 0.0
        %v1426 = vmax.f32 %v1140, 0.0
        %v1427 = vmax.f32 %v1142, 0.0
        %v1428 = vmax.f32 %v1145, 0.0
        %v1429 = vmax.f32 %v1147, 0.0
        %v1430 = vmax.f32 %v1150, 0.0
        %v1431 = vmax.f32 %v1152, 0.0
        %v1432 = vmax.f32 %v1155, 0.0
        %v1433 = vmax.f32 %v1157, 0.0
        %v1434 = vmax.f32 %v1160, 0.0
        %v1435 = vmax.f32 %v1162, 0.0
        %v1436 = vmax.f32 %v1165, 0.0
        %v1437 = vmax.f32 %v1167, 0.0
        %v1438 = vmax.f32 %v1170, 0.0
        %v1439 = vmax.f32 %v1172, 0.0
        %v1440 = vmax.f32 %v1175, 0.0
        %v1441 = vmax.f32 %v1177, 0.0
        %v1442 = vmax.f32 %v1180, 0.0
        %v1443 = vmax.f32 %v1182, 0.0
        %v1444 = vmax.f32 %v1185, 0.0
        %v1445 = vmax.f32 %v1187, 0.0
        %v1446 = vmax.f32 %v1190, 0.0
        %v1447 = vmax.f32 %v1192, 0.0
        %v1448 = vmax.f32 %v1195, 0.0
        %v1449 = vmax.f32 %v1197, 0.0
        %v1450 = vmax.f32 %v1200, 0.0
        %v1451 = vmax.f32 %v1202, 0.0
        %v1452 = vmax.f32 %v1205, 0.0
        %v1453 = vmax.f32 %v1207, 0.0
        %v1454 = vmax.f32 %v1210, 0.0
        %v1455 = vmax.f32 %v1212, 0.0
        %v1456 = vmax.f32 %v1215, 0.0
        %v1457 = vmax.f32 %v1217, 0.0
        %v1458 = vmax.f32 %v1220, 0.0
        %v1459 = vmax.f32 %v1222, 0.0
        %v1460 = vmax.f32 %v1225, 0.0
        %v1461 = vmax.f32 %v1227, 0.0
        %v1462 = vmax.f32 %v1230, 0.0
        %v1463 = vmax.f32 %v1232, 0.0
        %v1464 = vmax.f32 %v1235, 0.0
        %v1465 = vmax.f32 %v1237, 0.0
        %v1466 = vmax.f32 %v1240, 0.0
        %v1467 = vmax.f32 %v1242, 0.0
        %v1468 = vmax.f32 %v1245, 0.0
        %v1469 = vmax.f32 %v1247, 0.0
        %v1470 = vmax.f32 %v1250, 0.0
        %v1471 = vmax.f32 %v1252, 0.0
        %v1472 = vmax.f32 %v1255, 0.0
        %v1473 = vmax.f32 %v1257, 0.0
        %v1474 = vmax.f32 %v1260, 0.0
        %v1475 = vmax.f32 %v1262, 0.0
        %v1476 = vmax.f32 %v1265, 0.0
        %v1477 = vmax.f32 %v1267, 0.0
        %v1478 = vmax.f32 %v1270, 0.0
        %v1479 = vmax.f32 %v1272, 0.0
        %v1480 = vmax.f32 %v1275, 0.0
        %v1481 = vmax.f32 %v1277, 0.0
        %v1482 = vmax.f32 %v1280, 0.0
        %v1483 = vmax.f32 %v1282, 0.0
        %v1484 = vmax.f32 %v1285, 0.0
        %v1485 = vmax.f32 %v1287, 0.0
        %v1486 = vmax.f32 %v1290, 0.0
        %v1487 = vmax.f32 %v1292, 0.0
        %v1488 = vmax.f32 %v1295, 0.0
        %v1489 = vmax.f32 %v1297, 0.0
        %v1490 = vmax.f32 %v1300, 0.0
        %v1491 = vmax.f32 %v1302, 0.0
        %v1492 = vmax.f32 %v1305, 0.0
        %v1493 = vmax.f32 %v1307, 0.0
        %v1494 = vmax.f32 %v1310, 0.0
        %v1495 = vmax.f32 %v1312, 0.0
        %v1496 = vmax.f32 %v1315, 0.0
        %v1497 = vmax.f32 %v1317, 0.0
        %v1498 = vmax.f32 %v1320, 0.0
        %v1499 = vmax.f32 %v1322, 0.0
        %v1500 = vmax.f32 %v1325, 0.0
        %v1501 = vmax.f32 %v1327, 0.0
        %v1502 = vmax.f32 %v1330, 0.0
        %v1503 = vmax.f32 %v1332, 0.0
        %v1504 = vmax.f32 %v1335, 0.0
        %v1505 = vmax.f32 %v1337, 0.0
        %v1506 = vmax.f32 %v1340, 0.0
        %v1507 = vmax.f32 %v1342, 0.0
        %v1508 = vmax.f32 %v1345, 0.0
        %v1509 = vmax.f32 %v1347, 0.0
        %v1510 = vmax.f32 %v1350, 0.0
        %v1511 = vmax.f32 %v1352, 0.0
        %v1512 = vmax.f32 %v1355, 0.0
        %v1513 = vmax.f32 %v1357, 0.0
        %v1514 = vmax.f32 %v1360, 0.0
        %v1515 = vmax.f32 %v1362, 0.0
        %v1516 = vmax.f32 %v1365, 0.0
        %v1517 = vmax.f32 %v1367, 0.0
        %v1518 = vmax.f32 %v1370, 0.0
        %v1519 = vmax.f32 %v1372, 0.0
        %v1520 = vmax.f32 %v1375, 0.0
        %v1521 = vmax.f32 %v1377, 0.0
        %v1522 = vmax.f32 %v1380, 0.0
        %v1523 = vmax.f32 %v1382, 0.0
        %v1524 = vmax.f32 %v1385, 0.0
        %v1525 = vmax.f32 %v1387, 0.0
        %v1526 = vmax.f32 %v1390, 0.0
        %v1527 = vmax.f32 %v1392, 0.0
        %v1528 = vmax.f32 %v1395, 0.0
        %v1529 = vmax.f32 %v1397, 0.0
        %v1530 = vmax.f32 %v1400, 0.0
        %v1531 = vmax.f32 %v1402, 0.0
        %v1532 = vpack.c.bf16 %v1405, %v1404
        %v1533 = vpack.c.bf16 %v1407, %v1406
        %v1534 = vpack.c.bf16 %v1409, %v1408
        %v1535 = vpack.c.bf16 %v1411, %v1410
        %v1536 = vpack.c.bf16 %v1413, %v1412
        %v1537 = vpack.c.bf16 %v1415, %v1414
        %v1538 = vpack.c.bf16 %v1417, %v1416
        %v1539 = vpack.c.bf16 %v1419, %v1418
        %v1540 = vpack.c.bf16 %v1421, %v1420
        %v1541 = vpack.c.bf16 %v1423, %v1422
        %v1542 = vpack.c.bf16 %v1425, %v1424
        %v1543 = vpack.c.bf16 %v1427, %v1426
        %v1544 = vpack.c.bf16 %v1429, %v1428
        %v1545 = vpack.c.bf16 %v1431, %v1430
        %v1546 = vpack.c.bf16 %v1433, %v1432
        %v1547 = vpack.c.bf16 %v1435, %v1434
        %v1548 = vpack.c.bf16 %v1437, %v1436
        %v1549 = vpack.c.bf16 %v1439, %v1438
        %v1550 = vpack.c.bf16 %v1441, %v1440
        %v1551 = vpack.c.bf16 %v1443, %v1442
        %v1552 = vpack.c.bf16 %v1445, %v1444
        %v1553 = vpack.c.bf16 %v1447, %v1446
        %v1554 = vpack.c.bf16 %v1449, %v1448
        %v1555 = vpack.c.bf16 %v1451, %v1450
        %v1556 = vpack.c.bf16 %v1453, %v1452
        %v1557 = vpack.c.bf16 %v1455, %v1454
        %v1558 = vpack.c.bf16 %v1457, %v1456
        %v1559 = vpack.c.bf16 %v1459, %v1458
        %v1560 = vpack.c.bf16 %v1461, %v1460
        %v1561 = vpack.c.bf16 %v1463, %v1462
        %v1562 = vpack.c.bf16 %v1465, %v1464
        %v1563 = vpack.c.bf16 %v1467, %v1466
        %v1564 = vpack.c.bf16 %v1469, %v1468
        %v1565 = vpack.c.bf16 %v1471, %v1470
        %v1566 = vpack.c.bf16 %v1473, %v1472
        %v1567 = vpack.c.bf16 %v1475, %v1474
        %v1568 = vpack.c.bf16 %v1477, %v1476
        %v1569 = vpack.c.bf16 %v1479, %v1478
        %v1570 = vpack.c.bf16 %v1481, %v1480
        %v1571 = vpack.c.bf16 %v1483, %v1482
        %v1572 = vpack.c.bf16 %v1485, %v1484
        %v1573 = vpack.c.bf16 %v1487, %v1486
        %v1574 = vpack.c.bf16 %v1489, %v1488
        %v1575 = vpack.c.bf16 %v1491, %v1490
        %v1576 = vpack.c.bf16 %v1493, %v1492
        %v1577 = vpack.c.bf16 %v1495, %v1494
        %v1578 = vpack.c.bf16 %v1497, %v1496
        %v1579 = vpack.c.bf16 %v1499, %v1498
        %v1580 = vpack.c.bf16 %v1501, %v1500
        %v1581 = vpack.c.bf16 %v1503, %v1502
        %v1582 = vpack.c.bf16 %v1505, %v1504
        %v1583 = vpack.c.bf16 %v1507, %v1506
        %v1584 = vpack.c.bf16 %v1509, %v1508
        %v1585 = vpack.c.bf16 %v1511, %v1510
        %v1586 = vpack.c.bf16 %v1513, %v1512
        %v1587 = vpack.c.bf16 %v1515, %v1514
        %v1588 = vpack.c.bf16 %v1517, %v1516
        %v1589 = vpack.c.bf16 %v1519, %v1518
        %v1590 = vpack.c.bf16 %v1521, %v1520
        %v1591 = vpack.c.bf16 %v1523, %v1522
        %v1592 = vpack.c.bf16 %v1525, %v1524
        %v1593 = vpack.c.bf16 %v1527, %v1526
        %v1594 = vpack.c.bf16 %v1529, %v1528
        %v1595 = vpack.c.bf16 %v1531, %v1530
        %v1596 = vld [vmem:[%s3] sm:$0xf]
        %v1597 = vld [vmem:[%s3 + $0x4] sm:$0xf]
        %v1598 = vld [vmem:[%s3 + $0x8] sm:$0xf]
        %v1599 = vld [vmem:[%s3 + $0xc] sm:$0xf]
        %v1600 = vld [vmem:[%s3 + $0x10] sm:$0xf]
        %v1601 = vld [vmem:[%s3 + $0x14] sm:$0xf]
        %v1602 = vld [vmem:[%s3 + $0x18] sm:$0xf]
        %v1603 = vld [vmem:[%s3 + $0x1c] sm:$0xf]
        %v1604 = vld [vmem:[%s3 + $0x20] sm:$0xf]
        %v1605 = vld [vmem:[%s3 + $0x24] sm:$0xf]
        %v1606 = vld [vmem:[%s3 + $0x28] sm:$0xf]
        %v1607 = vld [vmem:[%s3 + $0x2c] sm:$0xf]
        %v1608 = vld [vmem:[%s3 + $0x30] sm:$0xf]
        %v1609 = vld [vmem:[%s3 + $0x34] sm:$0xf]
        %v1610 = vld [vmem:[%s3 + $0x38] sm:$0xf]
        %v1611 = vld [vmem:[%s3 + $0x3c] sm:$0xf]
        %v1612 = vld [vmem:[%s4] sm:$0x1]
        %v1614 = vperm.slane %v1612, 0
        %v1632 = vunpack.c.l.b16 %v1596
        %v1633 = vunpack.c.l.b16 %v1597
        %v1634 = vunpack.c.l.b16 %v1598
        %v1635 = vunpack.c.l.b16 %v1599
        %v1636 = vunpack.c.l.b16 %v1600
        %v1637 = vunpack.c.l.b16 %v1601
        %v1638 = vunpack.c.l.b16 %v1602
        %v1639 = vunpack.c.l.b16 %v1603
        %v1640 = vunpack.c.l.b16 %v1604
        %v1641 = vunpack.c.l.b16 %v1605
        %v1642 = vunpack.c.l.b16 %v1606
        %v1643 = vunpack.c.l.b16 %v1607
        %v1644 = vunpack.c.l.b16 %v1608
        %v1645 = vunpack.c.l.b16 %v1609
        %v1646 = vunpack.c.l.b16 %v1610
        %v1647 = vunpack.c.l.b16 %v1611
        %v1648 = vpack.c.b16 %v1633, %v1632
        %v1649 = vpack.c.b16 %v1635, %v1634
        %v1650 = vpack.c.b16 %v1637, %v1636
        %v1651 = vpack.c.b16 %v1639, %v1638
        %v1652 = vpack.c.b16 %v1641, %v1640
        %v1653 = vpack.c.b16 %v1643, %v1642
        %v1654 = vpack.c.b16 %v1645, %v1644
        %v1655 = vpack.c.b16 %v1647, %v1646
        %1664 = vmatpush.bf16.msra.mxu0 %v1655
        %1665 = vmatpush.bf16.msra.mxu0 %v1654
        %1666 = vmatpush.bf16.msra.mxu0 %v1653
        %1667 = vmatpush.bf16.msra.mxu0 %v1652
        %1668 = vmatpush.bf16.msra.mxu0 %v1651
        %1669 = vmatpush.bf16.msra.mxu0 %v1650
        %1670 = vmatpush.bf16.msra.mxu0 %v1649
        %1671 = vmatpush.bf16.msra.mxu0 %v1648
        %1672 = vmatmul.bf16.gmra.mxu0 %v1532
        %v1673 = vpop.f32.mrf.mxu0
        %v1674 = vadd.f32 %v1614, %v1673
        %v1675 = vpop.f32.mrf.mxu0
        %v1676 = vadd.f32 %v1614, %v1675
        %1677 = vmatmul.bf16.gmra.mxu0 %v1533
        %v1678 = vpop.f32.mrf.mxu0
        %v1679 = vadd.f32 %v1614, %v1678
        %v1680 = vpop.f32.mrf.mxu0
        %v1681 = vadd.f32 %v1614, %v1680
        %1682 = vmatmul.bf16.gmra.mxu0 %v1534
        %v1683 = vpop.f32.mrf.mxu0
        %v1684 = vadd.f32 %v1614, %v1683
        %v1685 = vpop.f32.mrf.mxu0
        %v1686 = vadd.f32 %v1614, %v1685
        %1687 = vmatmul.bf16.gmra.mxu0 %v1535
        %v1688 = vpop.f32.mrf.mxu0
        %v1689 = vadd.f32 %v1614, %v1688
        %v1690 = vpop.f32.mrf.mxu0
        %v1691 = vadd.f32 %v1614, %v1690
        %1692 = vmatmul.bf16.gmra.mxu0 %v1536
        %v1693 = vpop.f32.mrf.mxu0
        %v1694 = vadd.f32 %v1614, %v1693
        %v1695 = vpop.f32.mrf.mxu0
        %v1696 = vadd.f32 %v1614, %v1695
        %1697 = vmatmul.bf16.gmra.mxu0 %v1537
        %v1698 = vpop.f32.mrf.mxu0
        %v1699 = vadd.f32 %v1614, %v1698
        %v1700 = vpop.f32.mrf.mxu0
        %v1701 = vadd.f32 %v1614, %v1700
        %1702 = vmatmul.bf16.gmra.mxu0 %v1538
        %v1703 = vpop.f32.mrf.mxu0
        %v1704 = vadd.f32 %v1614, %v1703
        %v1705 = vpop.f32.mrf.mxu0
        %v1706 = vadd.f32 %v1614, %v1705
        %1707 = vmatmul.bf16.gmra.mxu0 %v1539
        %v1708 = vpop.f32.mrf.mxu0
        %v1709 = vadd.f32 %v1614, %v1708
        %v1710 = vpop.f32.mrf.mxu0
        %v1711 = vadd.f32 %v1614, %v1710
        %1712 = vmatmul.bf16.gmra.mxu0 %v1540
        %v1713 = vpop.f32.mrf.mxu0
        %v1714 = vadd.f32 %v1614, %v1713
        %v1715 = vpop.f32.mrf.mxu0
        %v1716 = vadd.f32 %v1614, %v1715
        %1717 = vmatmul.bf16.gmra.mxu0 %v1541
        %v1718 = vpop.f32.mrf.mxu0
        %v1719 = vadd.f32 %v1614, %v1718
        %v1720 = vpop.f32.mrf.mxu0
        %v1721 = vadd.f32 %v1614, %v1720
        %1722 = vmatmul.bf16.gmra.mxu0 %v1542
        %v1723 = vpop.f32.mrf.mxu0
        %v1724 = vadd.f32 %v1614, %v1723
        %v1725 = vpop.f32.mrf.mxu0
        %v1726 = vadd.f32 %v1614, %v1725
        %1727 = vmatmul.bf16.gmra.mxu0 %v1543
        %v1728 = vpop.f32.mrf.mxu0
        %v1729 = vadd.f32 %v1614, %v1728
        %v1730 = vpop.f32.mrf.mxu0
        %v1731 = vadd.f32 %v1614, %v1730
        %1732 = vmatmul.bf16.gmra.mxu0 %v1544
        %v1733 = vpop.f32.mrf.mxu0
        %v1734 = vadd.f32 %v1614, %v1733
        %v1735 = vpop.f32.mrf.mxu0
        %v1736 = vadd.f32 %v1614, %v1735
        %1737 = vmatmul.bf16.gmra.mxu0 %v1545
        %v1738 = vpop.f32.mrf.mxu0
        %v1739 = vadd.f32 %v1614, %v1738
        %v1740 = vpop.f32.mrf.mxu0
        %v1741 = vadd.f32 %v1614, %v1740
        %1742 = vmatmul.bf16.gmra.mxu0 %v1546
        %v1743 = vpop.f32.mrf.mxu0
        %v1744 = vadd.f32 %v1614, %v1743
        %v1745 = vpop.f32.mrf.mxu0
        %v1746 = vadd.f32 %v1614, %v1745
        %1747 = vmatmul.bf16.gmra.mxu0 %v1547
        %v1748 = vpop.f32.mrf.mxu0
        %v1749 = vadd.f32 %v1614, %v1748
        %v1750 = vpop.f32.mrf.mxu0
        %v1751 = vadd.f32 %v1614, %v1750
        %1752 = vmatmul.bf16.gmra.mxu0 %v1548
        %v1753 = vpop.f32.mrf.mxu0
        %v1754 = vadd.f32 %v1614, %v1753
        %v1755 = vpop.f32.mrf.mxu0
        %v1756 = vadd.f32 %v1614, %v1755
        %1757 = vmatmul.bf16.gmra.mxu0 %v1549
        %v1758 = vpop.f32.mrf.mxu0
        %v1759 = vadd.f32 %v1614, %v1758
        %v1760 = vpop.f32.mrf.mxu0
        %v1761 = vadd.f32 %v1614, %v1760
        %1762 = vmatmul.bf16.gmra.mxu0 %v1550
        %v1763 = vpop.f32.mrf.mxu0
        %v1764 = vadd.f32 %v1614, %v1763
        %v1765 = vpop.f32.mrf.mxu0
        %v1766 = vadd.f32 %v1614, %v1765
        %1767 = vmatmul.bf16.gmra.mxu0 %v1551
        %v1768 = vpop.f32.mrf.mxu0
        %v1769 = vadd.f32 %v1614, %v1768
        %v1770 = vpop.f32.mrf.mxu0
        %v1771 = vadd.f32 %v1614, %v1770
        %1772 = vmatmul.bf16.gmra.mxu0 %v1552
        %v1773 = vpop.f32.mrf.mxu0
        %v1774 = vadd.f32 %v1614, %v1773
        %v1775 = vpop.f32.mrf.mxu0
        %v1776 = vadd.f32 %v1614, %v1775
        %1777 = vmatmul.bf16.gmra.mxu0 %v1553
        %v1778 = vpop.f32.mrf.mxu0
        %v1779 = vadd.f32 %v1614, %v1778
        %v1780 = vpop.f32.mrf.mxu0
        %v1781 = vadd.f32 %v1614, %v1780
        %1782 = vmatmul.bf16.gmra.mxu0 %v1554
        %v1783 = vpop.f32.mrf.mxu0
        %v1784 = vadd.f32 %v1614, %v1783
        %v1785 = vpop.f32.mrf.mxu0
        %v1786 = vadd.f32 %v1614, %v1785
        %1787 = vmatmul.bf16.gmra.mxu0 %v1555
        %v1788 = vpop.f32.mrf.mxu0
        %v1789 = vadd.f32 %v1614, %v1788
        %v1790 = vpop.f32.mrf.mxu0
        %v1791 = vadd.f32 %v1614, %v1790
        %1792 = vmatmul.bf16.gmra.mxu0 %v1556
        %v1793 = vpop.f32.mrf.mxu0
        %v1794 = vadd.f32 %v1614, %v1793
        %v1795 = vpop.f32.mrf.mxu0
        %v1796 = vadd.f32 %v1614, %v1795
        %1797 = vmatmul.bf16.gmra.mxu0 %v1557
        %v1798 = vpop.f32.mrf.mxu0
        %v1799 = vadd.f32 %v1614, %v1798
        %v1800 = vpop.f32.mrf.mxu0
        %v1801 = vadd.f32 %v1614, %v1800
        %1802 = vmatmul.bf16.gmra.mxu0 %v1558
        %v1803 = vpop.f32.mrf.mxu0
        %v1804 = vadd.f32 %v1614, %v1803
        %v1805 = vpop.f32.mrf.mxu0
        %v1806 = vadd.f32 %v1614, %v1805
        %1807 = vmatmul.bf16.gmra.mxu0 %v1559
        %v1808 = vpop.f32.mrf.mxu0
        %v1809 = vadd.f32 %v1614, %v1808
        %v1810 = vpop.f32.mrf.mxu0
        %v1811 = vadd.f32 %v1614, %v1810
        %1812 = vmatmul.bf16.gmra.mxu0 %v1560
        %v1813 = vpop.f32.mrf.mxu0
        %v1814 = vadd.f32 %v1614, %v1813
        %v1815 = vpop.f32.mrf.mxu0
        %v1816 = vadd.f32 %v1614, %v1815
        %1817 = vmatmul.bf16.gmra.mxu0 %v1561
        %v1818 = vpop.f32.mrf.mxu0
        %v1819 = vadd.f32 %v1614, %v1818
        %v1820 = vpop.f32.mrf.mxu0
        %v1821 = vadd.f32 %v1614, %v1820
        %1822 = vmatmul.bf16.gmra.mxu0 %v1562
        %v1823 = vpop.f32.mrf.mxu0
        %v1824 = vadd.f32 %v1614, %v1823
        %v1825 = vpop.f32.mrf.mxu0
        %v1826 = vadd.f32 %v1614, %v1825
        %1827 = vmatmul.bf16.gmra.mxu0 %v1563
        %v1828 = vpop.f32.mrf.mxu0
        %v1829 = vadd.f32 %v1614, %v1828
        %v1830 = vpop.f32.mrf.mxu0
        %v1831 = vadd.f32 %v1614, %v1830
        %1832 = vmatmul.bf16.gmra.mxu0 %v1564
        %v1833 = vpop.f32.mrf.mxu0
        %v1834 = vadd.f32 %v1614, %v1833
        %v1835 = vpop.f32.mrf.mxu0
        %v1836 = vadd.f32 %v1614, %v1835
        %1837 = vmatmul.bf16.gmra.mxu0 %v1565
        %v1838 = vpop.f32.mrf.mxu0
        %v1839 = vadd.f32 %v1614, %v1838
        %v1840 = vpop.f32.mrf.mxu0
        %v1841 = vadd.f32 %v1614, %v1840
        %1842 = vmatmul.bf16.gmra.mxu0 %v1566
        %v1843 = vpop.f32.mrf.mxu0
        %v1844 = vadd.f32 %v1614, %v1843
        %v1845 = vpop.f32.mrf.mxu0
        %v1846 = vadd.f32 %v1614, %v1845
        %1847 = vmatmul.bf16.gmra.mxu0 %v1567
        %v1848 = vpop.f32.mrf.mxu0
        %v1849 = vadd.f32 %v1614, %v1848
        %v1850 = vpop.f32.mrf.mxu0
        %v1851 = vadd.f32 %v1614, %v1850
        %1852 = vmatmul.bf16.gmra.mxu0 %v1568
        %v1853 = vpop.f32.mrf.mxu0
        %v1854 = vadd.f32 %v1614, %v1853
        %v1855 = vpop.f32.mrf.mxu0
        %v1856 = vadd.f32 %v1614, %v1855
        %1857 = vmatmul.bf16.gmra.mxu0 %v1569
        %v1858 = vpop.f32.mrf.mxu0
        %v1859 = vadd.f32 %v1614, %v1858
        %v1860 = vpop.f32.mrf.mxu0
        %v1861 = vadd.f32 %v1614, %v1860
        %1862 = vmatmul.bf16.gmra.mxu0 %v1570
        %v1863 = vpop.f32.mrf.mxu0
        %v1864 = vadd.f32 %v1614, %v1863
        %v1865 = vpop.f32.mrf.mxu0
        %v1866 = vadd.f32 %v1614, %v1865
        %1867 = vmatmul.bf16.gmra.mxu0 %v1571
        %v1868 = vpop.f32.mrf.mxu0
        %v1869 = vadd.f32 %v1614, %v1868
        %v1870 = vpop.f32.mrf.mxu0
        %v1871 = vadd.f32 %v1614, %v1870
        %1872 = vmatmul.bf16.gmra.mxu0 %v1572
        %v1873 = vpop.f32.mrf.mxu0
        %v1874 = vadd.f32 %v1614, %v1873
        %v1875 = vpop.f32.mrf.mxu0
        %v1876 = vadd.f32 %v1614, %v1875
        %1877 = vmatmul.bf16.gmra.mxu0 %v1573
        %v1878 = vpop.f32.mrf.mxu0
        %v1879 = vadd.f32 %v1614, %v1878
        %v1880 = vpop.f32.mrf.mxu0
        %v1881 = vadd.f32 %v1614, %v1880
        %1882 = vmatmul.bf16.gmra.mxu0 %v1574
        %v1883 = vpop.f32.mrf.mxu0
        %v1884 = vadd.f32 %v1614, %v1883
        %v1885 = vpop.f32.mrf.mxu0
        %v1886 = vadd.f32 %v1614, %v1885
        %1887 = vmatmul.bf16.gmra.mxu0 %v1575
        %v1888 = vpop.f32.mrf.mxu0
        %v1889 = vadd.f32 %v1614, %v1888
        %v1890 = vpop.f32.mrf.mxu0
        %v1891 = vadd.f32 %v1614, %v1890
        %1892 = vmatmul.bf16.gmra.mxu0 %v1576
        %v1893 = vpop.f32.mrf.mxu0
        %v1894 = vadd.f32 %v1614, %v1893
        %v1895 = vpop.f32.mrf.mxu0
        %v1896 = vadd.f32 %v1614, %v1895
        %1897 = vmatmul.bf16.gmra.mxu0 %v1577
        %v1898 = vpop.f32.mrf.mxu0
        %v1899 = vadd.f32 %v1614, %v1898
        %v1900 = vpop.f32.mrf.mxu0
        %v1901 = vadd.f32 %v1614, %v1900
        %1902 = vmatmul.bf16.gmra.mxu0 %v1578
        %v1903 = vpop.f32.mrf.mxu0
        %v1904 = vadd.f32 %v1614, %v1903
        %v1905 = vpop.f32.mrf.mxu0
        %v1906 = vadd.f32 %v1614, %v1905
        %1907 = vmatmul.bf16.gmra.mxu0 %v1579
        %v1908 = vpop.f32.mrf.mxu0
        %v1909 = vadd.f32 %v1614, %v1908
        %v1910 = vpop.f32.mrf.mxu0
        %v1911 = vadd.f32 %v1614, %v1910
        %1912 = vmatmul.bf16.gmra.mxu0 %v1580
        %v1913 = vpop.f32.mrf.mxu0
        %v1914 = vadd.f32 %v1614, %v1913
        %v1915 = vpop.f32.mrf.mxu0
        %v1916 = vadd.f32 %v1614, %v1915
        %1917 = vmatmul.bf16.gmra.mxu0 %v1581
        %v1918 = vpop.f32.mrf.mxu0
        %v1919 = vadd.f32 %v1614, %v1918
        %v1920 = vpop.f32.mrf.mxu0
        %v1921 = vadd.f32 %v1614, %v1920
        %1922 = vmatmul.bf16.gmra.mxu0 %v1582
        %v1923 = vpop.f32.mrf.mxu0
        %v1924 = vadd.f32 %v1614, %v1923
        %v1925 = vpop.f32.mrf.mxu0
        %v1926 = vadd.f32 %v1614, %v1925
        %1927 = vmatmul.bf16.gmra.mxu0 %v1583
        %v1928 = vpop.f32.mrf.mxu0
        %v1929 = vadd.f32 %v1614, %v1928
        %v1930 = vpop.f32.mrf.mxu0
        %v1931 = vadd.f32 %v1614, %v1930
        %1932 = vmatmul.bf16.gmra.mxu0 %v1584
        %v1933 = vpop.f32.mrf.mxu0
        %v1934 = vadd.f32 %v1614, %v1933
        %v1935 = vpop.f32.mrf.mxu0
        %v1936 = vadd.f32 %v1614, %v1935
        %1937 = vmatmul.bf16.gmra.mxu0 %v1585
        %v1938 = vpop.f32.mrf.mxu0
        %v1939 = vadd.f32 %v1614, %v1938
        %v1940 = vpop.f32.mrf.mxu0
        %v1941 = vadd.f32 %v1614, %v1940
        %1942 = vmatmul.bf16.gmra.mxu0 %v1586
        %v1943 = vpop.f32.mrf.mxu0
        %v1944 = vadd.f32 %v1614, %v1943
        %v1945 = vpop.f32.mrf.mxu0
        %v1946 = vadd.f32 %v1614, %v1945
        %1947 = vmatmul.bf16.gmra.mxu0 %v1587
        %v1948 = vpop.f32.mrf.mxu0
        %v1949 = vadd.f32 %v1614, %v1948
        %v1950 = vpop.f32.mrf.mxu0
        %v1951 = vadd.f32 %v1614, %v1950
        %1952 = vmatmul.bf16.gmra.mxu0 %v1588
        %v1953 = vpop.f32.mrf.mxu0
        %v1954 = vadd.f32 %v1614, %v1953
        %v1955 = vpop.f32.mrf.mxu0
        %v1956 = vadd.f32 %v1614, %v1955
        %1957 = vmatmul.bf16.gmra.mxu0 %v1589
        %v1958 = vpop.f32.mrf.mxu0
        %v1959 = vadd.f32 %v1614, %v1958
        %v1960 = vpop.f32.mrf.mxu0
        %v1961 = vadd.f32 %v1614, %v1960
        %1962 = vmatmul.bf16.gmra.mxu0 %v1590
        %v1963 = vpop.f32.mrf.mxu0
        %v1964 = vadd.f32 %v1614, %v1963
        %v1965 = vpop.f32.mrf.mxu0
        %v1966 = vadd.f32 %v1614, %v1965
        %1967 = vmatmul.bf16.gmra.mxu0 %v1591
        %v1968 = vpop.f32.mrf.mxu0
        %v1969 = vadd.f32 %v1614, %v1968
        %v1970 = vpop.f32.mrf.mxu0
        %v1971 = vadd.f32 %v1614, %v1970
        %1972 = vmatmul.bf16.gmra.mxu0 %v1592
        %v1973 = vpop.f32.mrf.mxu0
        %v1974 = vadd.f32 %v1614, %v1973
        %v1975 = vpop.f32.mrf.mxu0
        %v1976 = vadd.f32 %v1614, %v1975
        %1977 = vmatmul.bf16.gmra.mxu0 %v1593
        %v1978 = vpop.f32.mrf.mxu0
        %v1979 = vadd.f32 %v1614, %v1978
        %v1980 = vpop.f32.mrf.mxu0
        %v1981 = vadd.f32 %v1614, %v1980
        %1982 = vmatmul.bf16.gmra.mxu0 %v1594
        %v1983 = vpop.f32.mrf.mxu0
        %v1984 = vadd.f32 %v1614, %v1983
        %v1985 = vpop.f32.mrf.mxu0
        %v1986 = vadd.f32 %v1614, %v1985
        %1987 = vmatmul.bf16.gmra.mxu0 %v1595
        %v1988 = vpop.f32.mrf.mxu0
        %v1989 = vadd.f32 %v1614, %v1988
        %v1990 = vpop.f32.mrf.mxu0
        %v1991 = vadd.f32 %v1614, %v1990
        %1992 = vdwg.mxu0
        %1993 = vst [vmem:[%s385] sm:$0xff] %v1674
        %1994 = vst [vmem:[%s385 + $0x8] sm:$0xff] %v1676
        %1995 = vst [vmem:[%s385 + $0x10] sm:$0xff] %v1679
        %1996 = vst [vmem:[%s385 + $0x18] sm:$0xff] %v1681
        %1997 = vst [vmem:[%s385 + $0x20] sm:$0xff] %v1684
        %1998 = vst [vmem:[%s385 + $0x28] sm:$0xff] %v1686
        %1999 = vst [vmem:[%s385 + $0x30] sm:$0xff] %v1689
        %2000 = vst [vmem:[%s385 + $0x38] sm:$0xff] %v1691
        %2001 = vst [vmem:[%s385 + $0x40] sm:$0xff] %v1694
        %2002 = vst [vmem:[%s385 + $0x48] sm:$0xff] %v1696
        %2003 = vst [vmem:[%s385 + $0x50] sm:$0xff] %v1699
        %2004 = vst [vmem:[%s385 + $0x58] sm:$0xff] %v1701
        %2005 = vst [vmem:[%s385 + $0x60] sm:$0xff] %v1704
        %2006 = vst [vmem:[%s385 + $0x68] sm:$0xff] %v1706
        %2007 = vst [vmem:[%s385 + $0x70] sm:$0xff] %v1709
        %2008 = vst [vmem:[%s385 + $0x78] sm:$0xff] %v1711
        %2009 = vst [vmem:[%s385 + $0x80] sm:$0xff] %v1714
        %2010 = vst [vmem:[%s385 + $0x88] sm:$0xff] %v1716
        %2011 = vst [vmem:[%s385 + $0x90] sm:$0xff] %v1719
        %2012 = vst [vmem:[%s385 + $0x98] sm:$0xff] %v1721
        %2013 = vst [vmem:[%s385 + $0xa0] sm:$0xff] %v1724
        %2014 = vst [vmem:[%s385 + $0xa8] sm:$0xff] %v1726
        %2015 = vst [vmem:[%s385 + $0xb0] sm:$0xff] %v1729
        %2016 = vst [vmem:[%s385 + $0xb8] sm:$0xff] %v1731
        %2017 = vst [vmem:[%s385 + $0xc0] sm:$0xff] %v1734
        %2018 = vst [vmem:[%s385 + $0xc8] sm:$0xff] %v1736
        %2019 = vst [vmem:[%s385 + $0xd0] sm:$0xff] %v1739
        %2020 = vst [vmem:[%s385 + $0xd8] sm:$0xff] %v1741
        %2021 = vst [vmem:[%s385 + $0xe0] sm:$0xff] %v1744
        %2022 = vst [vmem:[%s385 + $0xe8] sm:$0xff] %v1746
        %2023 = vst [vmem:[%s385 + $0xf0] sm:$0xff] %v1749
        %2024 = vst [vmem:[%s385 + $0xf8] sm:$0xff] %v1751
        %2025 = vst [vmem:[%s385 + $0x100] sm:$0xff] %v1754
        %2026 = vst [vmem:[%s385 + $0x108] sm:$0xff] %v1756
        %2027 = vst [vmem:[%s385 + $0x110] sm:$0xff] %v1759
        %2028 = vst [vmem:[%s385 + $0x118] sm:$0xff] %v1761
        %2029 = vst [vmem:[%s385 + $0x120] sm:$0xff] %v1764
        %2030 = vst [vmem:[%s385 + $0x128] sm:$0xff] %v1766
        %2031 = vst [vmem:[%s385 + $0x130] sm:$0xff] %v1769
        %2032 = vst [vmem:[%s385 + $0x138] sm:$0xff] %v1771
        %2033 = vst [vmem:[%s385 + $0x140] sm:$0xff] %v1774
        %2034 = vst [vmem:[%s385 + $0x148] sm:$0xff] %v1776
        %2035 = vst [vmem:[%s385 + $0x150] sm:$0xff] %v1779
        %2036 = vst [vmem:[%s385 + $0x158] sm:$0xff] %v1781
        %2037 = vst [vmem:[%s385 + $0x160] sm:$0xff] %v1784
        %2038 = vst [vmem:[%s385 + $0x168] sm:$0xff] %v1786
        %2039 = vst [vmem:[%s385 + $0x170] sm:$0xff] %v1789
        %2040 = vst [vmem:[%s385 + $0x178] sm:$0xff] %v1791
        %2041 = vst [vmem:[%s385 + $0x180] sm:$0xff] %v1794
        %2042 = vst [vmem:[%s385 + $0x188] sm:$0xff] %v1796
        %2043 = vst [vmem:[%s385 + $0x190] sm:$0xff] %v1799
        %2044 = vst [vmem:[%s385 + $0x198] sm:$0xff] %v1801
        %2045 = vst [vmem:[%s385 + $0x1a0] sm:$0xff] %v1804
        %2046 = vst [vmem:[%s385 + $0x1a8] sm:$0xff] %v1806
        %2047 = vst [vmem:[%s385 + $0x1b0] sm:$0xff] %v1809
        %2048 = vst [vmem:[%s385 + $0x1b8] sm:$0xff] %v1811
        %2049 = vst [vmem:[%s385 + $0x1c0] sm:$0xff] %v1814
        %2050 = vst [vmem:[%s385 + $0x1c8] sm:$0xff] %v1816
        %2051 = vst [vmem:[%s385 + $0x1d0] sm:$0xff] %v1819
        %2052 = vst [vmem:[%s385 + $0x1d8] sm:$0xff] %v1821
        %2053 = vst [vmem:[%s385 + $0x1e0] sm:$0xff] %v1824
        %2054 = vst [vmem:[%s385 + $0x1e8] sm:$0xff] %v1826
        %2055 = vst [vmem:[%s385 + $0x1f0] sm:$0xff] %v1829
        %2056 = vst [vmem:[%s385 + $0x1f8] sm:$0xff] %v1831
        %2057 = vst [vmem:[%s385 + $0x200] sm:$0xff] %v1834
        %2058 = vst [vmem:[%s385 + $0x208] sm:$0xff] %v1836
        %2059 = vst [vmem:[%s385 + $0x210] sm:$0xff] %v1839
        %2060 = vst [vmem:[%s385 + $0x218] sm:$0xff] %v1841
        %2061 = vst [vmem:[%s385 + $0x220] sm:$0xff] %v1844
        %2062 = vst [vmem:[%s385 + $0x228] sm:$0xff] %v1846
        %2063 = vst [vmem:[%s385 + $0x230] sm:$0xff] %v1849
        %2064 = vst [vmem:[%s385 + $0x238] sm:$0xff] %v1851
        %2065 = vst [vmem:[%s385 + $0x240] sm:$0xff] %v1854
        %2066 = vst [vmem:[%s385 + $0x248] sm:$0xff] %v1856
        %2067 = vst [vmem:[%s385 + $0x250] sm:$0xff] %v1859
        %2068 = vst [vmem:[%s385 + $0x258] sm:$0xff] %v1861
        %2069 = vst [vmem:[%s385 + $0x260] sm:$0xff] %v1864
        %2070 = vst [vmem:[%s385 + $0x268] sm:$0xff] %v1866
        %2071 = vst [vmem:[%s385 + $0x270] sm:$0xff] %v1869
        %2072 = vst [vmem:[%s385 + $0x278] sm:$0xff] %v1871
        %2073 = vst [vmem:[%s385 + $0x280] sm:$0xff] %v1874
        %2074 = vst [vmem:[%s385 + $0x288] sm:$0xff] %v1876
        %2075 = vst [vmem:[%s385 + $0x290] sm:$0xff] %v1879
        %2076 = vst [vmem:[%s385 + $0x298] sm:$0xff] %v1881
        %2077 = vst [vmem:[%s385 + $0x2a0] sm:$0xff] %v1884
        %2078 = vst [vmem:[%s385 + $0x2a8] sm:$0xff] %v1886
        %2079 = vst [vmem:[%s385 + $0x2b0] sm:$0xff] %v1889
        %2080 = vst [vmem:[%s385 + $0x2b8] sm:$0xff] %v1891
        %2081 = vst [vmem:[%s385 + $0x2c0] sm:$0xff] %v1894
        %2082 = vst [vmem:[%s385 + $0x2c8] sm:$0xff] %v1896
        %2083 = vst [vmem:[%s385 + $0x2d0] sm:$0xff] %v1899
        %2084 = vst [vmem:[%s385 + $0x2d8] sm:$0xff] %v1901
        %2085 = vst [vmem:[%s385 + $0x2e0] sm:$0xff] %v1904
        %2086 = vst [vmem:[%s385 + $0x2e8] sm:$0xff] %v1906
        %2087 = vst [vmem:[%s385 + $0x2f0] sm:$0xff] %v1909
        %2088 = vst [vmem:[%s385 + $0x2f8] sm:$0xff] %v1911
        %2089 = vst [vmem:[%s385 + $0x300] sm:$0xff] %v1914
        %2090 = vst [vmem:[%s385 + $0x308] sm:$0xff] %v1916
        %2091 = vst [vmem:[%s385 + $0x310] sm:$0xff] %v1919
        %2092 = vst [vmem:[%s385 + $0x318] sm:$0xff] %v1921
        %2093 = vst [vmem:[%s385 + $0x320] sm:$0xff] %v1924
        %2094 = vst [vmem:[%s385 + $0x328] sm:$0xff] %v1926
        %2095 = vst [vmem:[%s385 + $0x330] sm:$0xff] %v1929
        %2096 = vst [vmem:[%s385 + $0x338] sm:$0xff] %v1931
        %2097 = vst [vmem:[%s385 + $0x340] sm:$0xff] %v1934
        %2098 = vst [vmem:[%s385 + $0x348] sm:$0xff] %v1936
        %2099 = vst [vmem:[%s385 + $0x350] sm:$0xff] %v1939
        %2100 = vst [vmem:[%s385 + $0x358] sm:$0xff] %v1941
        %2101 = vst [vmem:[%s385 + $0x360] sm:$0xff] %v1944
        %2102 = vst [vmem:[%s385 + $0x368] sm:$0xff] %v1946
        %2103 = vst [vmem:[%s385 + $0x370] sm:$0xff] %v1949
        %2104 = vst [vmem:[%s385 + $0x378] sm:$0xff] %v1951
        %2105 = vst [vmem:[%s385 + $0x380] sm:$0xff] %v1954
        %2106 = vst [vmem:[%s385 + $0x388] sm:$0xff] %v1956
        %2107 = vst [vmem:[%s385 + $0x390] sm:$0xff] %v1959
        %2108 = vst [vmem:[%s385 + $0x398] sm:$0xff] %v1961
        %2109 = vst [vmem:[%s385 + $0x3a0] sm:$0xff] %v1964
        %2110 = vst [vmem:[%s385 + $0x3a8] sm:$0xff] %v1966
        %2111 = vst [vmem:[%s385 + $0x3b0] sm:$0xff] %v1969
        %2112 = vst [vmem:[%s385 + $0x3b8] sm:$0xff] %v1971
        %2113 = vst [vmem:[%s385 + $0x3c0] sm:$0xff] %v1974
        %2114 = vst [vmem:[%s385 + $0x3c8] sm:$0xff] %v1976
        %2115 = vst [vmem:[%s385 + $0x3d0] sm:$0xff] %v1979
        %2116 = vst [vmem:[%s385 + $0x3d8] sm:$0xff] %v1981
        %2117 = vst [vmem:[%s385 + $0x3e0] sm:$0xff] %v1984
        %2118 = vst [vmem:[%s385 + $0x3e8] sm:$0xff] %v1986
        %2119 = vst [vmem:[%s385 + $0x3f0] sm:$0xff] %v1989
        %2120 = vst [vmem:[%s385 + $0x3f8] sm:$0xff] %v1991
        %v2121 = vlaneseq
        %v2122 = vshrl.u32 %v2121, 7
        %v2123 = vadd.s32 %v2122, 8
        %v2124 = vadd.s32 %v2122, 16
        %v2125 = vadd.s32 %v2122, 24
        %v2126 = vadd.s32 %v2122, 32
        %v2127 = vadd.s32 %v2122, 40
        %v2128 = vadd.s32 %v2122, 48
        %v2129 = vadd.s32 %v2122, 56
        %v2130 = vadd.s32 %v2122, 64
        %v2131 = vadd.s32 %v2122, 72
        %v2132 = vadd.s32 %v2122, 80
        %v2133 = vadd.s32 %v2122, 88
        %v2134 = vadd.s32 %v2122, 96
        %v2135 = vadd.s32 %v2122, 104
        %v2136 = vadd.s32 %v2122, 112
        %v2137 = vadd.s32 %v2122, 120
        %v2138 = vadd.s32 %v2122, 128
        %v2139 = vadd.s32 %v2122, 136
        %v2140 = vadd.s32 %v2122, 144
        %v2141 = vadd.s32 %v2122, 152
        %v2142 = vadd.s32 %v2122, 160
        %v2143 = vadd.s32 %v2122, 168
        %v2144 = vadd.s32 %v2122, 176
        %v2145 = vadd.s32 %v2122, 184
        %v2146 = vadd.s32 %v2122, 192
        %v2147 = vadd.s32 %v2122, 200
        %v2148 = vadd.s32 %v2122, 208
        %v2149 = vadd.s32 %v2122, 216
        %v2150 = vadd.s32 %v2122, 224
        %v2151 = vadd.s32 %v2122, 232
        %v2152 = vadd.s32 %v2122, 240
        %v2153 = vadd.s32 %v2122, 248
        %v2154 = vadd.s32 %v2122, 256
        %v2155 = vadd.s32 %v2122, 264
        %v2156 = vadd.s32 %v2122, 272
        %v2157 = vadd.s32 %v2122, 280
        %v2158 = vadd.s32 %v2122, 288
        %v2159 = vadd.s32 %v2122, 296
        %v2160 = vadd.s32 %v2122, 304
        %v2161 = vadd.s32 %v2122, 312
        %v2162 = vadd.s32 %v2122, 320
        %v2163 = vadd.s32 %v2122, 328
        %v2164 = vadd.s32 %v2122, 336
        %v2165 = vadd.s32 %v2122, 344
        %v2166 = vadd.s32 %v2122, 352
        %v2167 = vadd.s32 %v2122, 360
        %v2168 = vadd.s32 %v2122, 368
        %v2169 = vadd.s32 %v2122, 376
        %v2170 = vadd.s32 %v2122, 384
        %v2171 = vadd.s32 %v2122, 392
        %v2172 = vadd.s32 %v2122, 400
        %v2173 = vadd.s32 %v2122, 408
        %v2174 = vadd.s32 %v2122, 416
        %v2175 = vadd.s32 %v2122, 424
        %v2176 = vadd.s32 %v2122, 432
        %v2177 = vadd.s32 %v2122, 440
        %v2178 = vadd.s32 %v2122, 448
        %v2179 = vadd.s32 %v2122, 456
        %v2180 = vadd.s32 %v2122, 464
        %v2181 = vadd.s32 %v2122, 472
        %v2182 = vadd.s32 %v2122, 480
        %v2183 = vadd.s32 %v2122, 488
        %v2184 = vadd.s32 %v2122, 496
        %v2185 = vadd.s32 %v2122, 504
        %v2186 = vadd.s32 %v2122, 512
        %v2187 = vadd.s32 %v2122, 520
        %v2188 = vadd.s32 %v2122, 528
        %v2189 = vadd.s32 %v2122, 536
        %v2190 = vadd.s32 %v2122, 544
        %v2191 = vadd.s32 %v2122, 552
        %v2192 = vadd.s32 %v2122, 560
        %v2193 = vadd.s32 %v2122, 568
        %v2194 = vadd.s32 %v2122, 576
        %v2195 = vadd.s32 %v2122, 584
        %v2196 = vadd.s32 %v2122, 592
        %v2197 = vadd.s32 %v2122, 600
        %v2198 = vadd.s32 %v2122, 608
        %v2199 = vadd.s32 %v2122, 616
        %v2200 = vadd.s32 %v2122, 624
        %v2201 = vadd.s32 %v2122, 632
        %v2202 = vadd.s32 %v2122, 640
        %v2203 = vadd.s32 %v2122, 648
        %v2204 = vadd.s32 %v2122, 656
        %v2205 = vadd.s32 %v2122, 664
        %v2206 = vadd.s32 %v2122, 672
        %v2207 = vadd.s32 %v2122, 680
        %v2208 = vadd.s32 %v2122, 688
        %v2209 = vadd.s32 %v2122, 696
        %v2210 = vadd.s32 %v2122, 704
        %v2211 = vadd.s32 %v2122, 712
        %v2212 = vadd.s32 %v2122, 720
        %v2213 = vadd.s32 %v2122, 728
        %v2214 = vadd.s32 %v2122, 736
        %v2215 = vadd.s32 %v2122, 744
        %v2216 = vadd.s32 %v2122, 752
        %v2217 = vadd.s32 %v2122, 760
        %v2218 = vadd.s32 %v2122, 768
        %v2219 = vadd.s32 %v2122, 776
        %v2220 = vadd.s32 %v2122, 784
        %v2221 = vadd.s32 %v2122, 792
        %v2222 = vadd.s32 %v2122, 800
        %v2223 = vadd.s32 %v2122, 808
        %v2224 = vadd.s32 %v2122, 816
        %v2225 = vadd.s32 %v2122, 824
        %v2226 = vadd.s32 %v2122, 832
        %v2227 = vadd.s32 %v2122, 840
        %v2228 = vadd.s32 %v2122, 848
        %v2229 = vadd.s32 %v2122, 856
        %v2230 = vadd.s32 %v2122, 864
        %v2231 = vadd.s32 %v2122, 872
        %v2232 = vadd.s32 %v2122, 880
        %v2233 = vadd.s32 %v2122, 888
        %v2234 = vadd.s32 %v2122, 896
        %v2235 = vadd.s32 %v2122, 904
        %v2236 = vadd.s32 %v2122, 912
        %v2237 = vadd.s32 %v2122, 920
        %v2238 = vadd.s32 %v2122, 928
        %v2239 = vadd.s32 %v2122, 936
        %v2240 = vadd.s32 %v2122, 944
        %v2241 = vadd.s32 %v2122, 952
        %v2242 = vadd.s32 %v2122, 960
        %v2243 = vadd.s32 %v2122, 968
        %v2244 = vadd.s32 %v2122, 976
        %v2245 = vadd.s32 %v2122, 984
        %v2246 = vadd.s32 %v2122, 992
        %v2247 = vadd.s32 %v2122, 1000
        %v2248 = vadd.s32 %v2122, 1008
        %v2249 = vadd.s32 %v2122, 1016
        %s2250 = smul.u32 %s24, 1024
        %s2251 = ssub.s32 2000, %s2250
        %v2252 = vstv %s2251
        %vm2253 = vcmp.lt.s32.totalorder %v2122, %v2252
        %vm2254 = vcmp.lt.s32.totalorder %v2123, %v2252
        %vm2255 = vcmp.lt.s32.totalorder %v2124, %v2252
        %vm2256 = vcmp.lt.s32.totalorder %v2125, %v2252
        %vm2257 = vcmp.lt.s32.totalorder %v2126, %v2252
        %vm2258 = vcmp.lt.s32.totalorder %v2127, %v2252
        %vm2259 = vcmp.lt.s32.totalorder %v2128, %v2252
        %vm2260 = vcmp.lt.s32.totalorder %v2129, %v2252
        %vm2261 = vcmp.lt.s32.totalorder %v2130, %v2252
        %vm2262 = vcmp.lt.s32.totalorder %v2131, %v2252
        %vm2263 = vcmp.lt.s32.totalorder %v2132, %v2252
        %vm2264 = vcmp.lt.s32.totalorder %v2133, %v2252
        %vm2265 = vcmp.lt.s32.totalorder %v2134, %v2252
        %vm2266 = vcmp.lt.s32.totalorder %v2135, %v2252
        %vm2267 = vcmp.lt.s32.totalorder %v2136, %v2252
        %vm2268 = vcmp.lt.s32.totalorder %v2137, %v2252
        %vm2269 = vcmp.lt.s32.totalorder %v2138, %v2252
        %vm2270 = vcmp.lt.s32.totalorder %v2139, %v2252
        %vm2271 = vcmp.lt.s32.totalorder %v2140, %v2252
        %vm2272 = vcmp.lt.s32.totalorder %v2141, %v2252
        %vm2273 = vcmp.lt.s32.totalorder %v2142, %v2252
        %vm2274 = vcmp.lt.s32.totalorder %v2143, %v2252
        %vm2275 = vcmp.lt.s32.totalorder %v2144, %v2252
        %vm2276 = vcmp.lt.s32.totalorder %v2145, %v2252
        %vm2277 = vcmp.lt.s32.totalorder %v2146, %v2252
        %vm2278 = vcmp.lt.s32.totalorder %v2147, %v2252
        %vm2279 = vcmp.lt.s32.totalorder %v2148, %v2252
        %vm2280 = vcmp.lt.s32.totalorder %v2149, %v2252
        %vm2281 = vcmp.lt.s32.totalorder %v2150, %v2252
        %vm2282 = vcmp.lt.s32.totalorder %v2151, %v2252
        %vm2283 = vcmp.lt.s32.totalorder %v2152, %v2252
        %vm2284 = vcmp.lt.s32.totalorder %v2153, %v2252
        %vm2285 = vcmp.lt.s32.totalorder %v2154, %v2252
        %vm2286 = vcmp.lt.s32.totalorder %v2155, %v2252
        %vm2287 = vcmp.lt.s32.totalorder %v2156, %v2252
        %vm2288 = vcmp.lt.s32.totalorder %v2157, %v2252
        %vm2289 = vcmp.lt.s32.totalorder %v2158, %v2252
        %vm2290 = vcmp.lt.s32.totalorder %v2159, %v2252
        %vm2291 = vcmp.lt.s32.totalorder %v2160, %v2252
        %vm2292 = vcmp.lt.s32.totalorder %v2161, %v2252
        %vm2293 = vcmp.lt.s32.totalorder %v2162, %v2252
        %vm2294 = vcmp.lt.s32.totalorder %v2163, %v2252
        %vm2295 = vcmp.lt.s32.totalorder %v2164, %v2252
        %vm2296 = vcmp.lt.s32.totalorder %v2165, %v2252
        %vm2297 = vcmp.lt.s32.totalorder %v2166, %v2252
        %vm2298 = vcmp.lt.s32.totalorder %v2167, %v2252
        %vm2299 = vcmp.lt.s32.totalorder %v2168, %v2252
        %vm2300 = vcmp.lt.s32.totalorder %v2169, %v2252
        %vm2301 = vcmp.lt.s32.totalorder %v2170, %v2252
        %vm2302 = vcmp.lt.s32.totalorder %v2171, %v2252
        %vm2303 = vcmp.lt.s32.totalorder %v2172, %v2252
        %vm2304 = vcmp.lt.s32.totalorder %v2173, %v2252
        %vm2305 = vcmp.lt.s32.totalorder %v2174, %v2252
        %vm2306 = vcmp.lt.s32.totalorder %v2175, %v2252
        %vm2307 = vcmp.lt.s32.totalorder %v2176, %v2252
        %vm2308 = vcmp.lt.s32.totalorder %v2177, %v2252
        %vm2309 = vcmp.lt.s32.totalorder %v2178, %v2252
        %vm2310 = vcmp.lt.s32.totalorder %v2179, %v2252
        %vm2311 = vcmp.lt.s32.totalorder %v2180, %v2252
        %vm2312 = vcmp.lt.s32.totalorder %v2181, %v2252
        %vm2313 = vcmp.lt.s32.totalorder %v2182, %v2252
        %vm2314 = vcmp.lt.s32.totalorder %v2183, %v2252
        %vm2315 = vcmp.lt.s32.totalorder %v2184, %v2252
        %vm2316 = vcmp.lt.s32.totalorder %v2185, %v2252
        %vm2317 = vcmp.lt.s32.totalorder %v2186, %v2252
        %vm2318 = vcmp.lt.s32.totalorder %v2187, %v2252
        %vm2319 = vcmp.lt.s32.totalorder %v2188, %v2252
        %vm2320 = vcmp.lt.s32.totalorder %v2189, %v2252
        %vm2321 = vcmp.lt.s32.totalorder %v2190, %v2252
        %vm2322 = vcmp.lt.s32.totalorder %v2191, %v2252
        %vm2323 = vcmp.lt.s32.totalorder %v2192, %v2252
        %vm2324 = vcmp.lt.s32.totalorder %v2193, %v2252
        %vm2325 = vcmp.lt.s32.totalorder %v2194, %v2252
        %vm2326 = vcmp.lt.s32.totalorder %v2195, %v2252
        %vm2327 = vcmp.lt.s32.totalorder %v2196, %v2252
        %vm2328 = vcmp.lt.s32.totalorder %v2197, %v2252
        %vm2329 = vcmp.lt.s32.totalorder %v2198, %v2252
        %vm2330 = vcmp.lt.s32.totalorder %v2199, %v2252
        %vm2331 = vcmp.lt.s32.totalorder %v2200, %v2252
        %vm2332 = vcmp.lt.s32.totalorder %v2201, %v2252
        %vm2333 = vcmp.lt.s32.totalorder %v2202, %v2252
        %vm2334 = vcmp.lt.s32.totalorder %v2203, %v2252
        %vm2335 = vcmp.lt.s32.totalorder %v2204, %v2252
        %vm2336 = vcmp.lt.s32.totalorder %v2205, %v2252
        %vm2337 = vcmp.lt.s32.totalorder %v2206, %v2252
        %vm2338 = vcmp.lt.s32.totalorder %v2207, %v2252
        %vm2339 = vcmp.lt.s32.totalorder %v2208, %v2252
        %vm2340 = vcmp.lt.s32.totalorder %v2209, %v2252
        %vm2341 = vcmp.lt.s32.totalorder %v2210, %v2252
        %vm2342 = vcmp.lt.s32.totalorder %v2211, %v2252
        %vm2343 = vcmp.lt.s32.totalorder %v2212, %v2252
        %vm2344 = vcmp.lt.s32.totalorder %v2213, %v2252
        %vm2345 = vcmp.lt.s32.totalorder %v2214, %v2252
        %vm2346 = vcmp.lt.s32.totalorder %v2215, %v2252
        %vm2347 = vcmp.lt.s32.totalorder %v2216, %v2252
        %vm2348 = vcmp.lt.s32.totalorder %v2217, %v2252
        %vm2349 = vcmp.lt.s32.totalorder %v2218, %v2252
        %vm2350 = vcmp.lt.s32.totalorder %v2219, %v2252
        %vm2351 = vcmp.lt.s32.totalorder %v2220, %v2252
        %vm2352 = vcmp.lt.s32.totalorder %v2221, %v2252
        %vm2353 = vcmp.lt.s32.totalorder %v2222, %v2252
        %vm2354 = vcmp.lt.s32.totalorder %v2223, %v2252
        %vm2355 = vcmp.lt.s32.totalorder %v2224, %v2252
        %vm2356 = vcmp.lt.s32.totalorder %v2225, %v2252
        %vm2357 = vcmp.lt.s32.totalorder %v2226, %v2252
        %vm2358 = vcmp.lt.s32.totalorder %v2227, %v2252
        %vm2359 = vcmp.lt.s32.totalorder %v2228, %v2252
        %vm2360 = vcmp.lt.s32.totalorder %v2229, %v2252
        %vm2361 = vcmp.lt.s32.totalorder %v2230, %v2252
        %vm2362 = vcmp.lt.s32.totalorder %v2231, %v2252
        %vm2363 = vcmp.lt.s32.totalorder %v2232, %v2252
        %vm2364 = vcmp.lt.s32.totalorder %v2233, %v2252
        %vm2365 = vcmp.lt.s32.totalorder %v2234, %v2252
        %vm2366 = vcmp.lt.s32.totalorder %v2235, %v2252
        %vm2367 = vcmp.lt.s32.totalorder %v2236, %v2252
        %vm2368 = vcmp.lt.s32.totalorder %v2237, %v2252
        %vm2369 = vcmp.lt.s32.totalorder %v2238, %v2252
        %vm2370 = vcmp.lt.s32.totalorder %v2239, %v2252
        %vm2371 = vcmp.lt.s32.totalorder %v2240, %v2252
        %vm2372 = vcmp.lt.s32.totalorder %v2241, %v2252
        %vm2373 = vcmp.lt.s32.totalorder %v2242, %v2252
        %vm2374 = vcmp.lt.s32.totalorder %v2243, %v2252
        %vm2375 = vcmp.lt.s32.totalorder %v2244, %v2252
        %vm2376 = vcmp.lt.s32.totalorder %v2245, %v2252
        %vm2377 = vcmp.lt.s32.totalorder %v2246, %v2252
        %vm2378 = vcmp.lt.s32.totalorder %v2247, %v2252
        %vm2379 = vcmp.lt.s32.totalorder %v2248, %v2252
        %vm2380 = vcmp.lt.s32.totalorder %v2249, %v2252
        %vm2381 = vcmp.lt.s32.totalorder %v2122, 0
        %v2382 = vsub.s32 0, %v2122
        %v2383 = vsel %vm2381, %v2382, %v2122
        %v2384 = vshrl.u32 %v2383, 1
        %v2385 = vand.u32 %v2383, 1
        %v2386 = vsub.s32 0, %v2385
        %v2387 = vsel %vm2381, %v2386, %v2385
        %vm2388 = vcmp.lt.s32.totalorder %v2123, 0
        %v2389 = vsub.s32 0, %v2123
        %v2390 = vsel %vm2388, %v2389, %v2123
        %v2391 = vshrl.u32 %v2390, 1
        %v2392 = vand.u32 %v2390, 1
        %v2393 = vsub.s32 0, %v2392
        %v2394 = vsel %vm2388, %v2393, %v2392
        %vm2395 = vcmp.lt.s32.totalorder %v2124, 0
        %v2396 = vsub.s32 0, %v2124
        %v2397 = vsel %vm2395, %v2396, %v2124
        %v2398 = vshrl.u32 %v2397, 1
        %v2399 = vand.u32 %v2397, 1
        %v2400 = vsub.s32 0, %v2399
        %v2401 = vsel %vm2395, %v2400, %v2399
        %vm2402 = vcmp.lt.s32.totalorder %v2125, 0
        %v2403 = vsub.s32 0, %v2125
        %v2404 = vsel %vm2402, %v2403, %v2125
        %v2405 = vshrl.u32 %v2404, 1
        %v2406 = vand.u32 %v2404, 1
        %v2407 = vsub.s32 0, %v2406
        %v2408 = vsel %vm2402, %v2407, %v2406
        %vm2409 = vcmp.lt.s32.totalorder %v2126, 0
        %v2410 = vsub.s32 0, %v2126
        %v2411 = vsel %vm2409, %v2410, %v2126
        %v2412 = vshrl.u32 %v2411, 1
        %v2413 = vand.u32 %v2411, 1
        %v2414 = vsub.s32 0, %v2413
        %v2415 = vsel %vm2409, %v2414, %v2413
        %vm2416 = vcmp.lt.s32.totalorder %v2127, 0
        %v2417 = vsub.s32 0, %v2127
        %v2418 = vsel %vm2416, %v2417, %v2127
        %v2419 = vshrl.u32 %v2418, 1
        %v2420 = vand.u32 %v2418, 1
        %v2421 = vsub.s32 0, %v2420
        %v2422 = vsel %vm2416, %v2421, %v2420
        %vm2423 = vcmp.lt.s32.totalorder %v2128, 0
        %v2424 = vsub.s32 0, %v2128
        %v2425 = vsel %vm2423, %v2424, %v2128
        %v2426 = vshrl.u32 %v2425, 1
        %v2427 = vand.u32 %v2425, 1
        %v2428 = vsub.s32 0, %v2427
        %v2429 = vsel %vm2423, %v2428, %v2427
        %vm2430 = vcmp.lt.s32.totalorder %v2129, 0
        %v2431 = vsub.s32 0, %v2129
        %v2432 = vsel %vm2430, %v2431, %v2129
        %v2433 = vshrl.u32 %v2432, 1
        %v2434 = vand.u32 %v2432, 1
        %v2435 = vsub.s32 0, %v2434
        %v2436 = vsel %vm2430, %v2435, %v2434
        %vm2437 = vcmp.lt.s32.totalorder %v2130, 0
        %v2438 = vsub.s32 0, %v2130
        %v2439 = vsel %vm2437, %v2438, %v2130
        %v2440 = vshrl.u32 %v2439, 1
        %v2441 = vand.u32 %v2439, 1
        %v2442 = vsub.s32 0, %v2441
        %v2443 = vsel %vm2437, %v2442, %v2441
        %vm2444 = vcmp.lt.s32.totalorder %v2131, 0
        %v2445 = vsub.s32 0, %v2131
        %v2446 = vsel %vm2444, %v2445, %v2131
        %v2447 = vshrl.u32 %v2446, 1
        %v2448 = vand.u32 %v2446, 1
        %v2449 = vsub.s32 0, %v2448
        %v2450 = vsel %vm2444, %v2449, %v2448
        %vm2451 = vcmp.lt.s32.totalorder %v2132, 0
        %v2452 = vsub.s32 0, %v2132
        %v2453 = vsel %vm2451, %v2452, %v2132
        %v2454 = vshrl.u32 %v2453, 1
        %v2455 = vand.u32 %v2453, 1
        %v2456 = vsub.s32 0, %v2455
        %v2457 = vsel %vm2451, %v2456, %v2455
        %vm2458 = vcmp.lt.s32.totalorder %v2133, 0
        %v2459 = vsub.s32 0, %v2133
        %v2460 = vsel %vm2458, %v2459, %v2133
        %v2461 = vshrl.u32 %v2460, 1
        %v2462 = vand.u32 %v2460, 1
        %v2463 = vsub.s32 0, %v2462
        %v2464 = vsel %vm2458, %v2463, %v2462
        %vm2465 = vcmp.lt.s32.totalorder %v2134, 0
        %v2466 = vsub.s32 0, %v2134
        %v2467 = vsel %vm2465, %v2466, %v2134
        %v2468 = vshrl.u32 %v2467, 1
        %v2469 = vand.u32 %v2467, 1
        %v2470 = vsub.s32 0, %v2469
        %v2471 = vsel %vm2465, %v2470, %v2469
        %vm2472 = vcmp.lt.s32.totalorder %v2135, 0
        %v2473 = vsub.s32 0, %v2135
        %v2474 = vsel %vm2472, %v2473, %v2135
        %v2475 = vshrl.u32 %v2474, 1
        %v2476 = vand.u32 %v2474, 1
        %v2477 = vsub.s32 0, %v2476
        %v2478 = vsel %vm2472, %v2477, %v2476
        %vm2479 = vcmp.lt.s32.totalorder %v2136, 0
        %v2480 = vsub.s32 0, %v2136
        %v2481 = vsel %vm2479, %v2480, %v2136
        %v2482 = vshrl.u32 %v2481, 1
        %v2483 = vand.u32 %v2481, 1
        %v2484 = vsub.s32 0, %v2483
        %v2485 = vsel %vm2479, %v2484, %v2483
        %vm2486 = vcmp.lt.s32.totalorder %v2137, 0
        %v2487 = vsub.s32 0, %v2137
        %v2488 = vsel %vm2486, %v2487, %v2137
        %v2489 = vshrl.u32 %v2488, 1
        %v2490 = vand.u32 %v2488, 1
        %v2491 = vsub.s32 0, %v2490
        %v2492 = vsel %vm2486, %v2491, %v2490
        %vm2493 = vcmp.lt.s32.totalorder %v2138, 0
        %v2494 = vsub.s32 0, %v2138
        %v2495 = vsel %vm2493, %v2494, %v2138
        %v2496 = vshrl.u32 %v2495, 1
        %v2497 = vand.u32 %v2495, 1
        %v2498 = vsub.s32 0, %v2497
        %v2499 = vsel %vm2493, %v2498, %v2497
        %vm2500 = vcmp.lt.s32.totalorder %v2139, 0
        %v2501 = vsub.s32 0, %v2139
        %v2502 = vsel %vm2500, %v2501, %v2139
        %v2503 = vshrl.u32 %v2502, 1
        %v2504 = vand.u32 %v2502, 1
        %v2505 = vsub.s32 0, %v2504
        %v2506 = vsel %vm2500, %v2505, %v2504
        %vm2507 = vcmp.lt.s32.totalorder %v2140, 0
        %v2508 = vsub.s32 0, %v2140
        %v2509 = vsel %vm2507, %v2508, %v2140
        %v2510 = vshrl.u32 %v2509, 1
        %v2511 = vand.u32 %v2509, 1
        %v2512 = vsub.s32 0, %v2511
        %v2513 = vsel %vm2507, %v2512, %v2511
        %vm2514 = vcmp.lt.s32.totalorder %v2141, 0
        %v2515 = vsub.s32 0, %v2141
        %v2516 = vsel %vm2514, %v2515, %v2141
        %v2517 = vshrl.u32 %v2516, 1
        %v2518 = vand.u32 %v2516, 1
        %v2519 = vsub.s32 0, %v2518
        %v2520 = vsel %vm2514, %v2519, %v2518
        %vm2521 = vcmp.lt.s32.totalorder %v2142, 0
        %v2522 = vsub.s32 0, %v2142
        %v2523 = vsel %vm2521, %v2522, %v2142
        %v2524 = vshrl.u32 %v2523, 1
        %v2525 = vand.u32 %v2523, 1
        %v2526 = vsub.s32 0, %v2525
        %v2527 = vsel %vm2521, %v2526, %v2525
        %vm2528 = vcmp.lt.s32.totalorder %v2143, 0
        %v2529 = vsub.s32 0, %v2143
        %v2530 = vsel %vm2528, %v2529, %v2143
        %v2531 = vshrl.u32 %v2530, 1
        %v2532 = vand.u32 %v2530, 1
        %v2533 = vsub.s32 0, %v2532
        %v2534 = vsel %vm2528, %v2533, %v2532
        %vm2535 = vcmp.lt.s32.totalorder %v2144, 0
        %v2536 = vsub.s32 0, %v2144
        %v2537 = vsel %vm2535, %v2536, %v2144
        %v2538 = vshrl.u32 %v2537, 1
        %v2539 = vand.u32 %v2537, 1
        %v2540 = vsub.s32 0, %v2539
        %v2541 = vsel %vm2535, %v2540, %v2539
        %vm2542 = vcmp.lt.s32.totalorder %v2145, 0
        %v2543 = vsub.s32 0, %v2145
        %v2544 = vsel %vm2542, %v2543, %v2145
        %v2545 = vshrl.u32 %v2544, 1
        %v2546 = vand.u32 %v2544, 1
        %v2547 = vsub.s32 0, %v2546
        %v2548 = vsel %vm2542, %v2547, %v2546
        %vm2549 = vcmp.lt.s32.totalorder %v2146, 0
        %v2550 = vsub.s32 0, %v2146
        %v2551 = vsel %vm2549, %v2550, %v2146
        %v2552 = vshrl.u32 %v2551, 1
        %v2553 = vand.u32 %v2551, 1
        %v2554 = vsub.s32 0, %v2553
        %v2555 = vsel %vm2549, %v2554, %v2553
        %vm2556 = vcmp.lt.s32.totalorder %v2147, 0
        %v2557 = vsub.s32 0, %v2147
        %v2558 = vsel %vm2556, %v2557, %v2147
        %v2559 = vshrl.u32 %v2558, 1
        %v2560 = vand.u32 %v2558, 1
        %v2561 = vsub.s32 0, %v2560
        %v2562 = vsel %vm2556, %v2561, %v2560
        %vm2563 = vcmp.lt.s32.totalorder %v2148, 0
        %v2564 = vsub.s32 0, %v2148
        %v2565 = vsel %vm2563, %v2564, %v2148
        %v2566 = vshrl.u32 %v2565, 1
        %v2567 = vand.u32 %v2565, 1
        %v2568 = vsub.s32 0, %v2567
        %v2569 = vsel %vm2563, %v2568, %v2567
        %vm2570 = vcmp.lt.s32.totalorder %v2149, 0
        %v2571 = vsub.s32 0, %v2149
        %v2572 = vsel %vm2570, %v2571, %v2149
        %v2573 = vshrl.u32 %v2572, 1
        %v2574 = vand.u32 %v2572, 1
        %v2575 = vsub.s32 0, %v2574
        %v2576 = vsel %vm2570, %v2575, %v2574
        %vm2577 = vcmp.lt.s32.totalorder %v2150, 0
        %v2578 = vsub.s32 0, %v2150
        %v2579 = vsel %vm2577, %v2578, %v2150
        %v2580 = vshrl.u32 %v2579, 1
        %v2581 = vand.u32 %v2579, 1
        %v2582 = vsub.s32 0, %v2581
        %v2583 = vsel %vm2577, %v2582, %v2581
        %vm2584 = vcmp.lt.s32.totalorder %v2151, 0
        %v2585 = vsub.s32 0, %v2151
        %v2586 = vsel %vm2584, %v2585, %v2151
        %v2587 = vshrl.u32 %v2586, 1
        %v2588 = vand.u32 %v2586, 1
        %v2589 = vsub.s32 0, %v2588
        %v2590 = vsel %vm2584, %v2589, %v2588
        %vm2591 = vcmp.lt.s32.totalorder %v2152, 0
        %v2592 = vsub.s32 0, %v2152
        %v2593 = vsel %vm2591, %v2592, %v2152
        %v2594 = vshrl.u32 %v2593, 1
        %v2595 = vand.u32 %v2593, 1
        %v2596 = vsub.s32 0, %v2595
        %v2597 = vsel %vm2591, %v2596, %v2595
        %vm2598 = vcmp.lt.s32.totalorder %v2153, 0
        %v2599 = vsub.s32 0, %v2153
        %v2600 = vsel %vm2598, %v2599, %v2153
        %v2601 = vshrl.u32 %v2600, 1
        %v2602 = vand.u32 %v2600, 1
        %v2603 = vsub.s32 0, %v2602
        %v2604 = vsel %vm2598, %v2603, %v2602
        %vm2605 = vcmp.lt.s32.totalorder %v2154, 0
        %v2606 = vsub.s32 0, %v2154
        %v2607 = vsel %vm2605, %v2606, %v2154
        %v2608 = vshrl.u32 %v2607, 1
        %v2609 = vand.u32 %v2607, 1
        %v2610 = vsub.s32 0, %v2609
        %v2611 = vsel %vm2605, %v2610, %v2609
        %vm2612 = vcmp.lt.s32.totalorder %v2155, 0
        %v2613 = vsub.s32 0, %v2155
        %v2614 = vsel %vm2612, %v2613, %v2155
        %v2615 = vshrl.u32 %v2614, 1
        %v2616 = vand.u32 %v2614, 1
        %v2617 = vsub.s32 0, %v2616
        %v2618 = vsel %vm2612, %v2617, %v2616
        %vm2619 = vcmp.lt.s32.totalorder %v2156, 0
        %v2620 = vsub.s32 0, %v2156
        %v2621 = vsel %vm2619, %v2620, %v2156
        %v2622 = vshrl.u32 %v2621, 1
        %v2623 = vand.u32 %v2621, 1
        %v2624 = vsub.s32 0, %v2623
        %v2625 = vsel %vm2619, %v2624, %v2623
        %vm2626 = vcmp.lt.s32.totalorder %v2157, 0
        %v2627 = vsub.s32 0, %v2157
        %v2628 = vsel %vm2626, %v2627, %v2157
        %v2629 = vshrl.u32 %v2628, 1
        %v2630 = vand.u32 %v2628, 1
        %v2631 = vsub.s32 0, %v2630
        %v2632 = vsel %vm2626, %v2631, %v2630
        %vm2633 = vcmp.lt.s32.totalorder %v2158, 0
        %v2634 = vsub.s32 0, %v2158
        %v2635 = vsel %vm2633, %v2634, %v2158
        %v2636 = vshrl.u32 %v2635, 1
        %v2637 = vand.u32 %v2635, 1
        %v2638 = vsub.s32 0, %v2637
        %v2639 = vsel %vm2633, %v2638, %v2637
        %vm2640 = vcmp.lt.s32.totalorder %v2159, 0
        %v2641 = vsub.s32 0, %v2159
        %v2642 = vsel %vm2640, %v2641, %v2159
        %v2643 = vshrl.u32 %v2642, 1
        %v2644 = vand.u32 %v2642, 1
        %v2645 = vsub.s32 0, %v2644
        %v2646 = vsel %vm2640, %v2645, %v2644
        %vm2647 = vcmp.lt.s32.totalorder %v2160, 0
        %v2648 = vsub.s32 0, %v2160
        %v2649 = vsel %vm2647, %v2648, %v2160
        %v2650 = vshrl.u32 %v2649, 1
        %v2651 = vand.u32 %v2649, 1
        %v2652 = vsub.s32 0, %v2651
        %v2653 = vsel %vm2647, %v2652, %v2651
        %vm2654 = vcmp.lt.s32.totalorder %v2161, 0
        %v2655 = vsub.s32 0, %v2161
        %v2656 = vsel %vm2654, %v2655, %v2161
        %v2657 = vshrl.u32 %v2656, 1
        %v2658 = vand.u32 %v2656, 1
        %v2659 = vsub.s32 0, %v2658
        %v2660 = vsel %vm2654, %v2659, %v2658
        %vm2661 = vcmp.lt.s32.totalorder %v2162, 0
        %v2662 = vsub.s32 0, %v2162
        %v2663 = vsel %vm2661, %v2662, %v2162
        %v2664 = vshrl.u32 %v2663, 1
        %v2665 = vand.u32 %v2663, 1
        %v2666 = vsub.s32 0, %v2665
        %v2667 = vsel %vm2661, %v2666, %v2665
        %vm2668 = vcmp.lt.s32.totalorder %v2163, 0
        %v2669 = vsub.s32 0, %v2163
        %v2670 = vsel %vm2668, %v2669, %v2163
        %v2671 = vshrl.u32 %v2670, 1
        %v2672 = vand.u32 %v2670, 1
        %v2673 = vsub.s32 0, %v2672
        %v2674 = vsel %vm2668, %v2673, %v2672
        %vm2675 = vcmp.lt.s32.totalorder %v2164, 0
        %v2676 = vsub.s32 0, %v2164
        %v2677 = vsel %vm2675, %v2676, %v2164
        %v2678 = vshrl.u32 %v2677, 1
        %v2679 = vand.u32 %v2677, 1
        %v2680 = vsub.s32 0, %v2679
        %v2681 = vsel %vm2675, %v2680, %v2679
        %vm2682 = vcmp.lt.s32.totalorder %v2165, 0
        %v2683 = vsub.s32 0, %v2165
        %v2684 = vsel %vm2682, %v2683, %v2165
        %v2685 = vshrl.u32 %v2684, 1
        %v2686 = vand.u32 %v2684, 1
        %v2687 = vsub.s32 0, %v2686
        %v2688 = vsel %vm2682, %v2687, %v2686
        %vm2689 = vcmp.lt.s32.totalorder %v2166, 0
        %v2690 = vsub.s32 0, %v2166
        %v2691 = vsel %vm2689, %v2690, %v2166
        %v2692 = vshrl.u32 %v2691, 1
        %v2693 = vand.u32 %v2691, 1
        %v2694 = vsub.s32 0, %v2693
        %v2695 = vsel %vm2689, %v2694, %v2693
        %vm2696 = vcmp.lt.s32.totalorder %v2167, 0
        %v2697 = vsub.s32 0, %v2167
        %v2698 = vsel %vm2696, %v2697, %v2167
        %v2699 = vshrl.u32 %v2698, 1
        %v2700 = vand.u32 %v2698, 1
        %v2701 = vsub.s32 0, %v2700
        %v2702 = vsel %vm2696, %v2701, %v2700
        %vm2703 = vcmp.lt.s32.totalorder %v2168, 0
        %v2704 = vsub.s32 0, %v2168
        %v2705 = vsel %vm2703, %v2704, %v2168
        %v2706 = vshrl.u32 %v2705, 1
        %v2707 = vand.u32 %v2705, 1
        %v2708 = vsub.s32 0, %v2707
        %v2709 = vsel %vm2703, %v2708, %v2707
        %vm2710 = vcmp.lt.s32.totalorder %v2169, 0
        %v2711 = vsub.s32 0, %v2169
        %v2712 = vsel %vm2710, %v2711, %v2169
        %v2713 = vshrl.u32 %v2712, 1
        %v2714 = vand.u32 %v2712, 1
        %v2715 = vsub.s32 0, %v2714
        %v2716 = vsel %vm2710, %v2715, %v2714
        %vm2717 = vcmp.lt.s32.totalorder %v2170, 0
        %v2718 = vsub.s32 0, %v2170
        %v2719 = vsel %vm2717, %v2718, %v2170
        %v2720 = vshrl.u32 %v2719, 1
        %v2721 = vand.u32 %v2719, 1
        %v2722 = vsub.s32 0, %v2721
        %v2723 = vsel %vm2717, %v2722, %v2721
        %vm2724 = vcmp.lt.s32.totalorder %v2171, 0
        %v2725 = vsub.s32 0, %v2171
        %v2726 = vsel %vm2724, %v2725, %v2171
        %v2727 = vshrl.u32 %v2726, 1
        %v2728 = vand.u32 %v2726, 1
        %v2729 = vsub.s32 0, %v2728
        %v2730 = vsel %vm2724, %v2729, %v2728
        %vm2731 = vcmp.lt.s32.totalorder %v2172, 0
        %v2732 = vsub.s32 0, %v2172
        %v2733 = vsel %vm2731, %v2732, %v2172
        %v2734 = vshrl.u32 %v2733, 1
        %v2735 = vand.u32 %v2733, 1
        %v2736 = vsub.s32 0, %v2735
        %v2737 = vsel %vm2731, %v2736, %v2735
        %vm2738 = vcmp.lt.s32.totalorder %v2173, 0
        %v2739 = vsub.s32 0, %v2173
        %v2740 = vsel %vm2738, %v2739, %v2173
        %v2741 = vshrl.u32 %v2740, 1
        %v2742 = vand.u32 %v2740, 1
        %v2743 = vsub.s32 0, %v2742
        %v2744 = vsel %vm2738, %v2743, %v2742
        %vm2745 = vcmp.lt.s32.totalorder %v2174, 0
        %v2746 = vsub.s32 0, %v2174
        %v2747 = vsel %vm2745, %v2746, %v2174
        %v2748 = vshrl.u32 %v2747, 1
        %v2749 = vand.u32 %v2747, 1
        %v2750 = vsub.s32 0, %v2749
        %v2751 = vsel %vm2745, %v2750, %v2749
        %vm2752 = vcmp.lt.s32.totalorder %v2175, 0
        %v2753 = vsub.s32 0, %v2175
        %v2754 = vsel %vm2752, %v2753, %v2175
        %v2755 = vshrl.u32 %v2754, 1
        %v2756 = vand.u32 %v2754, 1
        %v2757 = vsub.s32 0, %v2756
        %v2758 = vsel %vm2752, %v2757, %v2756
        %vm2759 = vcmp.lt.s32.totalorder %v2176, 0
        %v2760 = vsub.s32 0, %v2176
        %v2761 = vsel %vm2759, %v2760, %v2176
        %v2762 = vshrl.u32 %v2761, 1
        %v2763 = vand.u32 %v2761, 1
        %v2764 = vsub.s32 0, %v2763
        %v2765 = vsel %vm2759, %v2764, %v2763
        %vm2766 = vcmp.lt.s32.totalorder %v2177, 0
        %v2767 = vsub.s32 0, %v2177
        %v2768 = vsel %vm2766, %v2767, %v2177
        %v2769 = vshrl.u32 %v2768, 1
        %v2770 = vand.u32 %v2768, 1
        %v2771 = vsub.s32 0, %v2770
        %v2772 = vsel %vm2766, %v2771, %v2770
        %vm2773 = vcmp.lt.s32.totalorder %v2178, 0
        %v2774 = vsub.s32 0, %v2178
        %v2775 = vsel %vm2773, %v2774, %v2178
        %v2776 = vshrl.u32 %v2775, 1
        %v2777 = vand.u32 %v2775, 1
        %v2778 = vsub.s32 0, %v2777
        %v2779 = vsel %vm2773, %v2778, %v2777
        %vm2780 = vcmp.lt.s32.totalorder %v2179, 0
        %v2781 = vsub.s32 0, %v2179
        %v2782 = vsel %vm2780, %v2781, %v2179
        %v2783 = vshrl.u32 %v2782, 1
        %v2784 = vand.u32 %v2782, 1
        %v2785 = vsub.s32 0, %v2784
        %v2786 = vsel %vm2780, %v2785, %v2784
        %vm2787 = vcmp.lt.s32.totalorder %v2180, 0
        %v2788 = vsub.s32 0, %v2180
        %v2789 = vsel %vm2787, %v2788, %v2180
        %v2790 = vshrl.u32 %v2789, 1
        %v2791 = vand.u32 %v2789, 1
        %v2792 = vsub.s32 0, %v2791
        %v2793 = vsel %vm2787, %v2792, %v2791
        %vm2794 = vcmp.lt.s32.totalorder %v2181, 0
        %v2795 = vsub.s32 0, %v2181
        %v2796 = vsel %vm2794, %v2795, %v2181
        %v2797 = vshrl.u32 %v2796, 1
        %v2798 = vand.u32 %v2796, 1
        %v2799 = vsub.s32 0, %v2798
        %v2800 = vsel %vm2794, %v2799, %v2798
        %vm2801 = vcmp.lt.s32.totalorder %v2182, 0
        %v2802 = vsub.s32 0, %v2182
        %v2803 = vsel %vm2801, %v2802, %v2182
        %v2804 = vshrl.u32 %v2803, 1
        %v2805 = vand.u32 %v2803, 1
        %v2806 = vsub.s32 0, %v2805
        %v2807 = vsel %vm2801, %v2806, %v2805
        %vm2808 = vcmp.lt.s32.totalorder %v2183, 0
        %v2809 = vsub.s32 0, %v2183
        %v2810 = vsel %vm2808, %v2809, %v2183
        %v2811 = vshrl.u32 %v2810, 1
        %v2812 = vand.u32 %v2810, 1
        %v2813 = vsub.s32 0, %v2812
        %v2814 = vsel %vm2808, %v2813, %v2812
        %vm2815 = vcmp.lt.s32.totalorder %v2184, 0
        %v2816 = vsub.s32 0, %v2184
        %v2817 = vsel %vm2815, %v2816, %v2184
        %v2818 = vshrl.u32 %v2817, 1
        %v2819 = vand.u32 %v2817, 1
        %v2820 = vsub.s32 0, %v2819
        %v2821 = vsel %vm2815, %v2820, %v2819
        %vm2822 = vcmp.lt.s32.totalorder %v2185, 0
        %v2823 = vsub.s32 0, %v2185
        %v2824 = vsel %vm2822, %v2823, %v2185
        %v2825 = vshrl.u32 %v2824, 1
        %v2826 = vand.u32 %v2824, 1
        %v2827 = vsub.s32 0, %v2826
        %v2828 = vsel %vm2822, %v2827, %v2826
        %vm2829 = vcmp.lt.s32.totalorder %v2186, 0
        %v2830 = vsub.s32 0, %v2186
        %v2831 = vsel %vm2829, %v2830, %v2186
        %v2832 = vshrl.u32 %v2831, 1
        %v2833 = vand.u32 %v2831, 1
        %v2834 = vsub.s32 0, %v2833
        %v2835 = vsel %vm2829, %v2834, %v2833
        %vm2836 = vcmp.lt.s32.totalorder %v2187, 0
        %v2837 = vsub.s32 0, %v2187
        %v2838 = vsel %vm2836, %v2837, %v2187
        %v2839 = vshrl.u32 %v2838, 1
        %v2840 = vand.u32 %v2838, 1
        %v2841 = vsub.s32 0, %v2840
        %v2842 = vsel %vm2836, %v2841, %v2840
        %vm2843 = vcmp.lt.s32.totalorder %v2188, 0
        %v2844 = vsub.s32 0, %v2188
        %v2845 = vsel %vm2843, %v2844, %v2188
        %v2846 = vshrl.u32 %v2845, 1
        %v2847 = vand.u32 %v2845, 1
        %v2848 = vsub.s32 0, %v2847
        %v2849 = vsel %vm2843, %v2848, %v2847
        %vm2850 = vcmp.lt.s32.totalorder %v2189, 0
        %v2851 = vsub.s32 0, %v2189
        %v2852 = vsel %vm2850, %v2851, %v2189
        %v2853 = vshrl.u32 %v2852, 1
        %v2854 = vand.u32 %v2852, 1
        %v2855 = vsub.s32 0, %v2854
        %v2856 = vsel %vm2850, %v2855, %v2854
        %vm2857 = vcmp.lt.s32.totalorder %v2190, 0
        %v2858 = vsub.s32 0, %v2190
        %v2859 = vsel %vm2857, %v2858, %v2190
        %v2860 = vshrl.u32 %v2859, 1
        %v2861 = vand.u32 %v2859, 1
        %v2862 = vsub.s32 0, %v2861
        %v2863 = vsel %vm2857, %v2862, %v2861
        %vm2864 = vcmp.lt.s32.totalorder %v2191, 0
        %v2865 = vsub.s32 0, %v2191
        %v2866 = vsel %vm2864, %v2865, %v2191
        %v2867 = vshrl.u32 %v2866, 1
        %v2868 = vand.u32 %v2866, 1
        %v2869 = vsub.s32 0, %v2868
        %v2870 = vsel %vm2864, %v2869, %v2868
        %vm2871 = vcmp.lt.s32.totalorder %v2192, 0
        %v2872 = vsub.s32 0, %v2192
        %v2873 = vsel %vm2871, %v2872, %v2192
        %v2874 = vshrl.u32 %v2873, 1
        %v2875 = vand.u32 %v2873, 1
        %v2876 = vsub.s32 0, %v2875
        %v2877 = vsel %vm2871, %v2876, %v2875
        %vm2878 = vcmp.lt.s32.totalorder %v2193, 0
        %v2879 = vsub.s32 0, %v2193
        %v2880 = vsel %vm2878, %v2879, %v2193
        %v2881 = vshrl.u32 %v2880, 1
        %v2882 = vand.u32 %v2880, 1
        %v2883 = vsub.s32 0, %v2882
        %v2884 = vsel %vm2878, %v2883, %v2882
        %vm2885 = vcmp.lt.s32.totalorder %v2194, 0
        %v2886 = vsub.s32 0, %v2194
        %v2887 = vsel %vm2885, %v2886, %v2194
        %v2888 = vshrl.u32 %v2887, 1
        %v2889 = vand.u32 %v2887, 1
        %v2890 = vsub.s32 0, %v2889
        %v2891 = vsel %vm2885, %v2890, %v2889
        %vm2892 = vcmp.lt.s32.totalorder %v2195, 0
        %v2893 = vsub.s32 0, %v2195
        %v2894 = vsel %vm2892, %v2893, %v2195
        %v2895 = vshrl.u32 %v2894, 1
        %v2896 = vand.u32 %v2894, 1
        %v2897 = vsub.s32 0, %v2896
        %v2898 = vsel %vm2892, %v2897, %v2896
        %vm2899 = vcmp.lt.s32.totalorder %v2196, 0
        %v2900 = vsub.s32 0, %v2196
        %v2901 = vsel %vm2899, %v2900, %v2196
        %v2902 = vshrl.u32 %v2901, 1
        %v2903 = vand.u32 %v2901, 1
        %v2904 = vsub.s32 0, %v2903
        %v2905 = vsel %vm2899, %v2904, %v2903
        %vm2906 = vcmp.lt.s32.totalorder %v2197, 0
        %v2907 = vsub.s32 0, %v2197
        %v2908 = vsel %vm2906, %v2907, %v2197
        %v2909 = vshrl.u32 %v2908, 1
        %v2910 = vand.u32 %v2908, 1
        %v2911 = vsub.s32 0, %v2910
        %v2912 = vsel %vm2906, %v2911, %v2910
        %vm2913 = vcmp.lt.s32.totalorder %v2198, 0
        %v2914 = vsub.s32 0, %v2198
        %v2915 = vsel %vm2913, %v2914, %v2198
        %v2916 = vshrl.u32 %v2915, 1
        %v2917 = vand.u32 %v2915, 1
        %v2918 = vsub.s32 0, %v2917
        %v2919 = vsel %vm2913, %v2918, %v2917
        %vm2920 = vcmp.lt.s32.totalorder %v2199, 0
        %v2921 = vsub.s32 0, %v2199
        %v2922 = vsel %vm2920, %v2921, %v2199
        %v2923 = vshrl.u32 %v2922, 1
        %v2924 = vand.u32 %v2922, 1
        %v2925 = vsub.s32 0, %v2924
        %v2926 = vsel %vm2920, %v2925, %v2924
        %vm2927 = vcmp.lt.s32.totalorder %v2200, 0
        %v2928 = vsub.s32 0, %v2200
        %v2929 = vsel %vm2927, %v2928, %v2200
        %v2930 = vshrl.u32 %v2929, 1
        %v2931 = vand.u32 %v2929, 1
        %v2932 = vsub.s32 0, %v2931
        %v2933 = vsel %vm2927, %v2932, %v2931
        %vm2934 = vcmp.lt.s32.totalorder %v2201, 0
        %v2935 = vsub.s32 0, %v2201
        %v2936 = vsel %vm2934, %v2935, %v2201
        %v2937 = vshrl.u32 %v2936, 1
        %v2938 = vand.u32 %v2936, 1
        %v2939 = vsub.s32 0, %v2938
        %v2940 = vsel %vm2934, %v2939, %v2938
        %vm2941 = vcmp.lt.s32.totalorder %v2202, 0
        %v2942 = vsub.s32 0, %v2202
        %v2943 = vsel %vm2941, %v2942, %v2202
        %v2944 = vshrl.u32 %v2943, 1
        %v2945 = vand.u32 %v2943, 1
        %v2946 = vsub.s32 0, %v2945
        %v2947 = vsel %vm2941, %v2946, %v2945
        %vm2948 = vcmp.lt.s32.totalorder %v2203, 0
        %v2949 = vsub.s32 0, %v2203
        %v2950 = vsel %vm2948, %v2949, %v2203
        %v2951 = vshrl.u32 %v2950, 1
        %v2952 = vand.u32 %v2950, 1
        %v2953 = vsub.s32 0, %v2952
        %v2954 = vsel %vm2948, %v2953, %v2952
        %vm2955 = vcmp.lt.s32.totalorder %v2204, 0
        %v2956 = vsub.s32 0, %v2204
        %v2957 = vsel %vm2955, %v2956, %v2204
        %v2958 = vshrl.u32 %v2957, 1
        %v2959 = vand.u32 %v2957, 1
        %v2960 = vsub.s32 0, %v2959
        %v2961 = vsel %vm2955, %v2960, %v2959
        %vm2962 = vcmp.lt.s32.totalorder %v2205, 0
        %v2963 = vsub.s32 0, %v2205
        %v2964 = vsel %vm2962, %v2963, %v2205
        %v2965 = vshrl.u32 %v2964, 1
        %v2966 = vand.u32 %v2964, 1
        %v2967 = vsub.s32 0, %v2966
        %v2968 = vsel %vm2962, %v2967, %v2966
        %vm2969 = vcmp.lt.s32.totalorder %v2206, 0
        %v2970 = vsub.s32 0, %v2206
        %v2971 = vsel %vm2969, %v2970, %v2206
        %v2972 = vshrl.u32 %v2971, 1
        %v2973 = vand.u32 %v2971, 1
        %v2974 = vsub.s32 0, %v2973
        %v2975 = vsel %vm2969, %v2974, %v2973
        %vm2976 = vcmp.lt.s32.totalorder %v2207, 0
        %v2977 = vsub.s32 0, %v2207
        %v2978 = vsel %vm2976, %v2977, %v2207
        %v2979 = vshrl.u32 %v2978, 1
        %v2980 = vand.u32 %v2978, 1
        %v2981 = vsub.s32 0, %v2980
        %v2982 = vsel %vm2976, %v2981, %v2980
        %vm2983 = vcmp.lt.s32.totalorder %v2208, 0
        %v2984 = vsub.s32 0, %v2208
        %v2985 = vsel %vm2983, %v2984, %v2208
        %v2986 = vshrl.u32 %v2985, 1
        %v2987 = vand.u32 %v2985, 1
        %v2988 = vsub.s32 0, %v2987
        %v2989 = vsel %vm2983, %v2988, %v2987
        %vm2990 = vcmp.lt.s32.totalorder %v2209, 0
        %v2991 = vsub.s32 0, %v2209
        %v2992 = vsel %vm2990, %v2991, %v2209
        %v2993 = vshrl.u32 %v2992, 1
        %v2994 = vand.u32 %v2992, 1
        %v2995 = vsub.s32 0, %v2994
        %v2996 = vsel %vm2990, %v2995, %v2994
        %vm2997 = vcmp.lt.s32.totalorder %v2210, 0
        %v2998 = vsub.s32 0, %v2210
        %v2999 = vsel %vm2997, %v2998, %v2210
        %v3000 = vshrl.u32 %v2999, 1
        %v3001 = vand.u32 %v2999, 1
        %v3002 = vsub.s32 0, %v3001
        %v3003 = vsel %vm2997, %v3002, %v3001
        %vm3004 = vcmp.lt.s32.totalorder %v2211, 0
        %v3005 = vsub.s32 0, %v2211
        %v3006 = vsel %vm3004, %v3005, %v2211
        %v3007 = vshrl.u32 %v3006, 1
        %v3008 = vand.u32 %v3006, 1
        %v3009 = vsub.s32 0, %v3008
        %v3010 = vsel %vm3004, %v3009, %v3008
        %vm3011 = vcmp.lt.s32.totalorder %v2212, 0
        %v3012 = vsub.s32 0, %v2212
        %v3013 = vsel %vm3011, %v3012, %v2212
        %v3014 = vshrl.u32 %v3013, 1
        %v3015 = vand.u32 %v3013, 1
        %v3016 = vsub.s32 0, %v3015
        %v3017 = vsel %vm3011, %v3016, %v3015
        %vm3018 = vcmp.lt.s32.totalorder %v2213, 0
        %v3019 = vsub.s32 0, %v2213
        %v3020 = vsel %vm3018, %v3019, %v2213
        %v3021 = vshrl.u32 %v3020, 1
        %v3022 = vand.u32 %v3020, 1
        %v3023 = vsub.s32 0, %v3022
        %v3024 = vsel %vm3018, %v3023, %v3022
        %vm3025 = vcmp.lt.s32.totalorder %v2214, 0
        %v3026 = vsub.s32 0, %v2214
        %v3027 = vsel %vm3025, %v3026, %v2214
        %v3028 = vshrl.u32 %v3027, 1
        %v3029 = vand.u32 %v3027, 1
        %v3030 = vsub.s32 0, %v3029
        %v3031 = vsel %vm3025, %v3030, %v3029
        %vm3032 = vcmp.lt.s32.totalorder %v2215, 0
        %v3033 = vsub.s32 0, %v2215
        %v3034 = vsel %vm3032, %v3033, %v2215
        %v3035 = vshrl.u32 %v3034, 1
        %v3036 = vand.u32 %v3034, 1
        %v3037 = vsub.s32 0, %v3036
        %v3038 = vsel %vm3032, %v3037, %v3036
        %vm3039 = vcmp.lt.s32.totalorder %v2216, 0
        %v3040 = vsub.s32 0, %v2216
        %v3041 = vsel %vm3039, %v3040, %v2216
        %v3042 = vshrl.u32 %v3041, 1
        %v3043 = vand.u32 %v3041, 1
        %v3044 = vsub.s32 0, %v3043
        %v3045 = vsel %vm3039, %v3044, %v3043
        %vm3046 = vcmp.lt.s32.totalorder %v2217, 0
        %v3047 = vsub.s32 0, %v2217
        %v3048 = vsel %vm3046, %v3047, %v2217
        %v3049 = vshrl.u32 %v3048, 1
        %v3050 = vand.u32 %v3048, 1
        %v3051 = vsub.s32 0, %v3050
        %v3052 = vsel %vm3046, %v3051, %v3050
        %vm3053 = vcmp.lt.s32.totalorder %v2218, 0
        %v3054 = vsub.s32 0, %v2218
        %v3055 = vsel %vm3053, %v3054, %v2218
        %v3056 = vshrl.u32 %v3055, 1
        %v3057 = vand.u32 %v3055, 1
        %v3058 = vsub.s32 0, %v3057
        %v3059 = vsel %vm3053, %v3058, %v3057
        %vm3060 = vcmp.lt.s32.totalorder %v2219, 0
        %v3061 = vsub.s32 0, %v2219
        %v3062 = vsel %vm3060, %v3061, %v2219
        %v3063 = vshrl.u32 %v3062, 1
        %v3064 = vand.u32 %v3062, 1
        %v3065 = vsub.s32 0, %v3064
        %v3066 = vsel %vm3060, %v3065, %v3064
        %vm3067 = vcmp.lt.s32.totalorder %v2220, 0
        %v3068 = vsub.s32 0, %v2220
        %v3069 = vsel %vm3067, %v3068, %v2220
        %v3070 = vshrl.u32 %v3069, 1
        %v3071 = vand.u32 %v3069, 1
        %v3072 = vsub.s32 0, %v3071
        %v3073 = vsel %vm3067, %v3072, %v3071
        %vm3074 = vcmp.lt.s32.totalorder %v2221, 0
        %v3075 = vsub.s32 0, %v2221
        %v3076 = vsel %vm3074, %v3075, %v2221
        %v3077 = vshrl.u32 %v3076, 1
        %v3078 = vand.u32 %v3076, 1
        %v3079 = vsub.s32 0, %v3078
        %v3080 = vsel %vm3074, %v3079, %v3078
        %vm3081 = vcmp.lt.s32.totalorder %v2222, 0
        %v3082 = vsub.s32 0, %v2222
        %v3083 = vsel %vm3081, %v3082, %v2222
        %v3084 = vshrl.u32 %v3083, 1
        %v3085 = vand.u32 %v3083, 1
        %v3086 = vsub.s32 0, %v3085
        %v3087 = vsel %vm3081, %v3086, %v3085
        %vm3088 = vcmp.lt.s32.totalorder %v2223, 0
        %v3089 = vsub.s32 0, %v2223
        %v3090 = vsel %vm3088, %v3089, %v2223
        %v3091 = vshrl.u32 %v3090, 1
        %v3092 = vand.u32 %v3090, 1
        %v3093 = vsub.s32 0, %v3092
        %v3094 = vsel %vm3088, %v3093, %v3092
        %vm3095 = vcmp.lt.s32.totalorder %v2224, 0
        %v3096 = vsub.s32 0, %v2224
        %v3097 = vsel %vm3095, %v3096, %v2224
        %v3098 = vshrl.u32 %v3097, 1
        %v3099 = vand.u32 %v3097, 1
        %v3100 = vsub.s32 0, %v3099
        %v3101 = vsel %vm3095, %v3100, %v3099
        %vm3102 = vcmp.lt.s32.totalorder %v2225, 0
        %v3103 = vsub.s32 0, %v2225
        %v3104 = vsel %vm3102, %v3103, %v2225
        %v3105 = vshrl.u32 %v3104, 1
        %v3106 = vand.u32 %v3104, 1
        %v3107 = vsub.s32 0, %v3106
        %v3108 = vsel %vm3102, %v3107, %v3106
        %vm3109 = vcmp.lt.s32.totalorder %v2226, 0
        %v3110 = vsub.s32 0, %v2226
        %v3111 = vsel %vm3109, %v3110, %v2226
        %v3112 = vshrl.u32 %v3111, 1
        %v3113 = vand.u32 %v3111, 1
        %v3114 = vsub.s32 0, %v3113
        %v3115 = vsel %vm3109, %v3114, %v3113
        %vm3116 = vcmp.lt.s32.totalorder %v2227, 0
        %v3117 = vsub.s32 0, %v2227
        %v3118 = vsel %vm3116, %v3117, %v2227
        %v3119 = vshrl.u32 %v3118, 1
        %v3120 = vand.u32 %v3118, 1
        %v3121 = vsub.s32 0, %v3120
        %v3122 = vsel %vm3116, %v3121, %v3120
        %vm3123 = vcmp.lt.s32.totalorder %v2228, 0
        %v3124 = vsub.s32 0, %v2228
        %v3125 = vsel %vm3123, %v3124, %v2228
        %v3126 = vshrl.u32 %v3125, 1
        %v3127 = vand.u32 %v3125, 1
        %v3128 = vsub.s32 0, %v3127
        %v3129 = vsel %vm3123, %v3128, %v3127
        %vm3130 = vcmp.lt.s32.totalorder %v2229, 0
        %v3131 = vsub.s32 0, %v2229
        %v3132 = vsel %vm3130, %v3131, %v2229
        %v3133 = vshrl.u32 %v3132, 1
        %v3134 = vand.u32 %v3132, 1
        %v3135 = vsub.s32 0, %v3134
        %v3136 = vsel %vm3130, %v3135, %v3134
        %vm3137 = vcmp.lt.s32.totalorder %v2230, 0
        %v3138 = vsub.s32 0, %v2230
        %v3139 = vsel %vm3137, %v3138, %v2230
        %v3140 = vshrl.u32 %v3139, 1
        %v3141 = vand.u32 %v3139, 1
        %v3142 = vsub.s32 0, %v3141
        %v3143 = vsel %vm3137, %v3142, %v3141
        %vm3144 = vcmp.lt.s32.totalorder %v2231, 0
        %v3145 = vsub.s32 0, %v2231
        %v3146 = vsel %vm3144, %v3145, %v2231
        %v3147 = vshrl.u32 %v3146, 1
        %v3148 = vand.u32 %v3146, 1
        %v3149 = vsub.s32 0, %v3148
        %v3150 = vsel %vm3144, %v3149, %v3148
        %vm3151 = vcmp.lt.s32.totalorder %v2232, 0
        %v3152 = vsub.s32 0, %v2232
        %v3153 = vsel %vm3151, %v3152, %v2232
        %v3154 = vshrl.u32 %v3153, 1
        %v3155 = vand.u32 %v3153, 1
        %v3156 = vsub.s32 0, %v3155
        %v3157 = vsel %vm3151, %v3156, %v3155
        %vm3158 = vcmp.lt.s32.totalorder %v2233, 0
        %v3159 = vsub.s32 0, %v2233
        %v3160 = vsel %vm3158, %v3159, %v2233
        %v3161 = vshrl.u32 %v3160, 1
        %v3162 = vand.u32 %v3160, 1
        %v3163 = vsub.s32 0, %v3162
        %v3164 = vsel %vm3158, %v3163, %v3162
        %vm3165 = vcmp.lt.s32.totalorder %v2234, 0
        %v3166 = vsub.s32 0, %v2234
        %v3167 = vsel %vm3165, %v3166, %v2234
        %v3168 = vshrl.u32 %v3167, 1
        %v3169 = vand.u32 %v3167, 1
        %v3170 = vsub.s32 0, %v3169
        %v3171 = vsel %vm3165, %v3170, %v3169
        %vm3172 = vcmp.lt.s32.totalorder %v2235, 0
        %v3173 = vsub.s32 0, %v2235
        %v3174 = vsel %vm3172, %v3173, %v2235
        %v3175 = vshrl.u32 %v3174, 1
        %v3176 = vand.u32 %v3174, 1
        %v3177 = vsub.s32 0, %v3176
        %v3178 = vsel %vm3172, %v3177, %v3176
        %vm3179 = vcmp.lt.s32.totalorder %v2236, 0
        %v3180 = vsub.s32 0, %v2236
        %v3181 = vsel %vm3179, %v3180, %v2236
        %v3182 = vshrl.u32 %v3181, 1
        %v3183 = vand.u32 %v3181, 1
        %v3184 = vsub.s32 0, %v3183
        %v3185 = vsel %vm3179, %v3184, %v3183
        %vm3186 = vcmp.lt.s32.totalorder %v2237, 0
        %v3187 = vsub.s32 0, %v2237
        %v3188 = vsel %vm3186, %v3187, %v2237
        %v3189 = vshrl.u32 %v3188, 1
        %v3190 = vand.u32 %v3188, 1
        %v3191 = vsub.s32 0, %v3190
        %v3192 = vsel %vm3186, %v3191, %v3190
        %vm3193 = vcmp.lt.s32.totalorder %v2238, 0
        %v3194 = vsub.s32 0, %v2238
        %v3195 = vsel %vm3193, %v3194, %v2238
        %v3196 = vshrl.u32 %v3195, 1
        %v3197 = vand.u32 %v3195, 1
        %v3198 = vsub.s32 0, %v3197
        %v3199 = vsel %vm3193, %v3198, %v3197
        %vm3200 = vcmp.lt.s32.totalorder %v2239, 0
        %v3201 = vsub.s32 0, %v2239
        %v3202 = vsel %vm3200, %v3201, %v2239
        %v3203 = vshrl.u32 %v3202, 1
        %v3204 = vand.u32 %v3202, 1
        %v3205 = vsub.s32 0, %v3204
        %v3206 = vsel %vm3200, %v3205, %v3204
        %vm3207 = vcmp.lt.s32.totalorder %v2240, 0
        %v3208 = vsub.s32 0, %v2240
        %v3209 = vsel %vm3207, %v3208, %v2240
        %v3210 = vshrl.u32 %v3209, 1
        %v3211 = vand.u32 %v3209, 1
        %v3212 = vsub.s32 0, %v3211
        %v3213 = vsel %vm3207, %v3212, %v3211
        %vm3214 = vcmp.lt.s32.totalorder %v2241, 0
        %v3215 = vsub.s32 0, %v2241
        %v3216 = vsel %vm3214, %v3215, %v2241
        %v3217 = vshrl.u32 %v3216, 1
        %v3218 = vand.u32 %v3216, 1
        %v3219 = vsub.s32 0, %v3218
        %v3220 = vsel %vm3214, %v3219, %v3218
        %vm3221 = vcmp.lt.s32.totalorder %v2242, 0
        %v3222 = vsub.s32 0, %v2242
        %v3223 = vsel %vm3221, %v3222, %v2242
        %v3224 = vshrl.u32 %v3223, 1
        %v3225 = vand.u32 %v3223, 1
        %v3226 = vsub.s32 0, %v3225
        %v3227 = vsel %vm3221, %v3226, %v3225
        %vm3228 = vcmp.lt.s32.totalorder %v2243, 0
        %v3229 = vsub.s32 0, %v2243
        %v3230 = vsel %vm3228, %v3229, %v2243
        %v3231 = vshrl.u32 %v3230, 1
        %v3232 = vand.u32 %v3230, 1
        %v3233 = vsub.s32 0, %v3232
        %v3234 = vsel %vm3228, %v3233, %v3232
        %vm3235 = vcmp.lt.s32.totalorder %v2244, 0
        %v3236 = vsub.s32 0, %v2244
        %v3237 = vsel %vm3235, %v3236, %v2244
        %v3238 = vshrl.u32 %v3237, 1
        %v3239 = vand.u32 %v3237, 1
        %v3240 = vsub.s32 0, %v3239
        %v3241 = vsel %vm3235, %v3240, %v3239
        %vm3242 = vcmp.lt.s32.totalorder %v2245, 0
        %v3243 = vsub.s32 0, %v2245
        %v3244 = vsel %vm3242, %v3243, %v2245
        %v3245 = vshrl.u32 %v3244, 1
        %v3246 = vand.u32 %v3244, 1
        %v3247 = vsub.s32 0, %v3246
        %v3248 = vsel %vm3242, %v3247, %v3246
        %vm3249 = vcmp.lt.s32.totalorder %v2246, 0
        %v3250 = vsub.s32 0, %v2246
        %v3251 = vsel %vm3249, %v3250, %v2246
        %v3252 = vshrl.u32 %v3251, 1
        %v3253 = vand.u32 %v3251, 1
        %v3254 = vsub.s32 0, %v3253
        %v3255 = vsel %vm3249, %v3254, %v3253
        %vm3256 = vcmp.lt.s32.totalorder %v2247, 0
        %v3257 = vsub.s32 0, %v2247
        %v3258 = vsel %vm3256, %v3257, %v2247
        %v3259 = vshrl.u32 %v3258, 1
        %v3260 = vand.u32 %v3258, 1
        %v3261 = vsub.s32 0, %v3260
        %v3262 = vsel %vm3256, %v3261, %v3260
        %vm3263 = vcmp.lt.s32.totalorder %v2248, 0
        %v3264 = vsub.s32 0, %v2248
        %v3265 = vsel %vm3263, %v3264, %v2248
        %v3266 = vshrl.u32 %v3265, 1
        %v3267 = vand.u32 %v3265, 1
        %v3268 = vsub.s32 0, %v3267
        %v3269 = vsel %vm3263, %v3268, %v3267
        %vm3270 = vcmp.lt.s32.totalorder %v2249, 0
        %v3271 = vsub.s32 0, %v2249
        %v3272 = vsel %vm3270, %v3271, %v2249
        %v3273 = vshrl.u32 %v3272, 1
        %v3274 = vand.u32 %v3272, 1
        %v3275 = vsub.s32 0, %v3274
        %v3276 = vsel %vm3270, %v3275, %v3274
        %vm3277 = vcmp.ne.s32.totalorder %v2387, 0
        %vm3278 = vcmp.ne.s32.totalorder %v2394, 0
        %vm3279 = vcmp.ne.s32.totalorder %v2401, 0
        %vm3280 = vcmp.ne.s32.totalorder %v2408, 0
        %vm3281 = vcmp.ne.s32.totalorder %v2415, 0
        %vm3282 = vcmp.ne.s32.totalorder %v2422, 0
        %vm3283 = vcmp.ne.s32.totalorder %v2429, 0
        %vm3284 = vcmp.ne.s32.totalorder %v2436, 0
        %vm3285 = vcmp.ne.s32.totalorder %v2443, 0
        %vm3286 = vcmp.ne.s32.totalorder %v2450, 0
        %vm3287 = vcmp.ne.s32.totalorder %v2457, 0
        %vm3288 = vcmp.ne.s32.totalorder %v2464, 0
        %vm3289 = vcmp.ne.s32.totalorder %v2471, 0
        %vm3290 = vcmp.ne.s32.totalorder %v2478, 0
        %vm3291 = vcmp.ne.s32.totalorder %v2485, 0
        %vm3292 = vcmp.ne.s32.totalorder %v2492, 0
        %vm3293 = vcmp.ne.s32.totalorder %v2499, 0
        %vm3294 = vcmp.ne.s32.totalorder %v2506, 0
        %vm3295 = vcmp.ne.s32.totalorder %v2513, 0
        %vm3296 = vcmp.ne.s32.totalorder %v2520, 0
        %vm3297 = vcmp.ne.s32.totalorder %v2527, 0
        %vm3298 = vcmp.ne.s32.totalorder %v2534, 0
        %vm3299 = vcmp.ne.s32.totalorder %v2541, 0
        %vm3300 = vcmp.ne.s32.totalorder %v2548, 0
        %vm3301 = vcmp.ne.s32.totalorder %v2555, 0
        %vm3302 = vcmp.ne.s32.totalorder %v2562, 0
        %vm3303 = vcmp.ne.s32.totalorder %v2569, 0
        %vm3304 = vcmp.ne.s32.totalorder %v2576, 0
        %vm3305 = vcmp.ne.s32.totalorder %v2583, 0
        %vm3306 = vcmp.ne.s32.totalorder %v2590, 0
        %vm3307 = vcmp.ne.s32.totalorder %v2597, 0
        %vm3308 = vcmp.ne.s32.totalorder %v2604, 0
        %vm3309 = vcmp.ne.s32.totalorder %v2611, 0
        %vm3310 = vcmp.ne.s32.totalorder %v2618, 0
        %vm3311 = vcmp.ne.s32.totalorder %v2625, 0
        %vm3312 = vcmp.ne.s32.totalorder %v2632, 0
        %vm3313 = vcmp.ne.s32.totalorder %v2639, 0
        %vm3314 = vcmp.ne.s32.totalorder %v2646, 0
        %vm3315 = vcmp.ne.s32.totalorder %v2653, 0
        %vm3316 = vcmp.ne.s32.totalorder %v2660, 0
        %vm3317 = vcmp.ne.s32.totalorder %v2667, 0
        %vm3318 = vcmp.ne.s32.totalorder %v2674, 0
        %vm3319 = vcmp.ne.s32.totalorder %v2681, 0
        %vm3320 = vcmp.ne.s32.totalorder %v2688, 0
        %vm3321 = vcmp.ne.s32.totalorder %v2695, 0
        %vm3322 = vcmp.ne.s32.totalorder %v2702, 0
        %vm3323 = vcmp.ne.s32.totalorder %v2709, 0
        %vm3324 = vcmp.ne.s32.totalorder %v2716, 0
        %vm3325 = vcmp.ne.s32.totalorder %v2723, 0
        %vm3326 = vcmp.ne.s32.totalorder %v2730, 0
        %vm3327 = vcmp.ne.s32.totalorder %v2737, 0
        %vm3328 = vcmp.ne.s32.totalorder %v2744, 0
        %vm3329 = vcmp.ne.s32.totalorder %v2751, 0
        %vm3330 = vcmp.ne.s32.totalorder %v2758, 0
        %vm3331 = vcmp.ne.s32.totalorder %v2765, 0
        %vm3332 = vcmp.ne.s32.totalorder %v2772, 0
        %vm3333 = vcmp.ne.s32.totalorder %v2779, 0
        %vm3334 = vcmp.ne.s32.totalorder %v2786, 0
        %vm3335 = vcmp.ne.s32.totalorder %v2793, 0
        %vm3336 = vcmp.ne.s32.totalorder %v2800, 0
        %vm3337 = vcmp.ne.s32.totalorder %v2807, 0
        %vm3338 = vcmp.ne.s32.totalorder %v2814, 0
        %vm3339 = vcmp.ne.s32.totalorder %v2821, 0
        %vm3340 = vcmp.ne.s32.totalorder %v2828, 0
        %vm3341 = vcmp.ne.s32.totalorder %v2835, 0
        %vm3342 = vcmp.ne.s32.totalorder %v2842, 0
        %vm3343 = vcmp.ne.s32.totalorder %v2849, 0
        %vm3344 = vcmp.ne.s32.totalorder %v2856, 0
        %vm3345 = vcmp.ne.s32.totalorder %v2863, 0
        %vm3346 = vcmp.ne.s32.totalorder %v2870, 0
        %vm3347 = vcmp.ne.s32.totalorder %v2877, 0
        %vm3348 = vcmp.ne.s32.totalorder %v2884, 0
        %vm3349 = vcmp.ne.s32.totalorder %v2891, 0
        %vm3350 = vcmp.ne.s32.totalorder %v2898, 0
        %vm3351 = vcmp.ne.s32.totalorder %v2905, 0
        %vm3352 = vcmp.ne.s32.totalorder %v2912, 0
        %vm3353 = vcmp.ne.s32.totalorder %v2919, 0
        %vm3354 = vcmp.ne.s32.totalorder %v2926, 0
        %vm3355 = vcmp.ne.s32.totalorder %v2933, 0
        %vm3356 = vcmp.ne.s32.totalorder %v2940, 0
        %vm3357 = vcmp.ne.s32.totalorder %v2947, 0
        %vm3358 = vcmp.ne.s32.totalorder %v2954, 0
        %vm3359 = vcmp.ne.s32.totalorder %v2961, 0
        %vm3360 = vcmp.ne.s32.totalorder %v2968, 0
        %vm3361 = vcmp.ne.s32.totalorder %v2975, 0
        %vm3362 = vcmp.ne.s32.totalorder %v2982, 0
        %vm3363 = vcmp.ne.s32.totalorder %v2989, 0
        %vm3364 = vcmp.ne.s32.totalorder %v2996, 0
        %vm3365 = vcmp.ne.s32.totalorder %v3003, 0
        %vm3366 = vcmp.ne.s32.totalorder %v3010, 0
        %vm3367 = vcmp.ne.s32.totalorder %v3017, 0
        %vm3368 = vcmp.ne.s32.totalorder %v3024, 0
        %vm3369 = vcmp.ne.s32.totalorder %v3031, 0
        %vm3370 = vcmp.ne.s32.totalorder %v3038, 0
        %vm3371 = vcmp.ne.s32.totalorder %v3045, 0
        %vm3372 = vcmp.ne.s32.totalorder %v3052, 0
        %vm3373 = vcmp.ne.s32.totalorder %v3059, 0
        %vm3374 = vcmp.ne.s32.totalorder %v3066, 0
        %vm3375 = vcmp.ne.s32.totalorder %v3073, 0
        %vm3376 = vcmp.ne.s32.totalorder %v3080, 0
        %vm3377 = vcmp.ne.s32.totalorder %v3087, 0
        %vm3378 = vcmp.ne.s32.totalorder %v3094, 0
        %vm3379 = vcmp.ne.s32.totalorder %v3101, 0
        %vm3380 = vcmp.ne.s32.totalorder %v3108, 0
        %vm3381 = vcmp.ne.s32.totalorder %v3115, 0
        %vm3382 = vcmp.ne.s32.totalorder %v3122, 0
        %vm3383 = vcmp.ne.s32.totalorder %v3129, 0
        %vm3384 = vcmp.ne.s32.totalorder %v3136, 0
        %vm3385 = vcmp.ne.s32.totalorder %v3143, 0
        %vm3386 = vcmp.ne.s32.totalorder %v3150, 0
        %vm3387 = vcmp.ne.s32.totalorder %v3157, 0
        %vm3388 = vcmp.ne.s32.totalorder %v3164, 0
        %vm3389 = vcmp.ne.s32.totalorder %v3171, 0
        %vm3390 = vcmp.ne.s32.totalorder %v3178, 0
        %vm3391 = vcmp.ne.s32.totalorder %v3185, 0
        %vm3392 = vcmp.ne.s32.totalorder %v3192, 0
        %vm3393 = vcmp.ne.s32.totalorder %v3199, 0
        %vm3394 = vcmp.ne.s32.totalorder %v3206, 0
        %vm3395 = vcmp.ne.s32.totalorder %v3213, 0
        %vm3396 = vcmp.ne.s32.totalorder %v3220, 0
        %vm3397 = vcmp.ne.s32.totalorder %v3227, 0
        %vm3398 = vcmp.ne.s32.totalorder %v3234, 0
        %vm3399 = vcmp.ne.s32.totalorder %v3241, 0
        %vm3400 = vcmp.ne.s32.totalorder %v3248, 0
        %vm3401 = vcmp.ne.s32.totalorder %v3255, 0
        %vm3402 = vcmp.ne.s32.totalorder %v3262, 0
        %vm3403 = vcmp.ne.s32.totalorder %v3269, 0
        %vm3404 = vcmp.ne.s32.totalorder %v3276, 0
        %vm3405 = vcmp.lt.s32.totalorder %v2387, 0
        %vm3406 = vcmp.lt.s32.totalorder %v2394, 0
        %vm3407 = vcmp.lt.s32.totalorder %v2401, 0
        %vm3408 = vcmp.lt.s32.totalorder %v2408, 0
        %vm3409 = vcmp.lt.s32.totalorder %v2415, 0
        %vm3410 = vcmp.lt.s32.totalorder %v2422, 0
        %vm3411 = vcmp.lt.s32.totalorder %v2429, 0
        %vm3412 = vcmp.lt.s32.totalorder %v2436, 0
        %vm3413 = vcmp.lt.s32.totalorder %v2443, 0
        %vm3414 = vcmp.lt.s32.totalorder %v2450, 0
        %vm3415 = vcmp.lt.s32.totalorder %v2457, 0
        %vm3416 = vcmp.lt.s32.totalorder %v2464, 0
        %vm3417 = vcmp.lt.s32.totalorder %v2471, 0
        %vm3418 = vcmp.lt.s32.totalorder %v2478, 0
        %vm3419 = vcmp.lt.s32.totalorder %v2485, 0
        %vm3420 = vcmp.lt.s32.totalorder %v2492, 0
        %vm3421 = vcmp.lt.s32.totalorder %v2499, 0
        %vm3422 = vcmp.lt.s32.totalorder %v2506, 0
        %vm3423 = vcmp.lt.s32.totalorder %v2513, 0
        %vm3424 = vcmp.lt.s32.totalorder %v2520, 0
        %vm3425 = vcmp.lt.s32.totalorder %v2527, 0
        %vm3426 = vcmp.lt.s32.totalorder %v2534, 0
        %vm3427 = vcmp.lt.s32.totalorder %v2541, 0
        %vm3428 = vcmp.lt.s32.totalorder %v2548, 0
        %vm3429 = vcmp.lt.s32.totalorder %v2555, 0
        %vm3430 = vcmp.lt.s32.totalorder %v2562, 0
        %vm3431 = vcmp.lt.s32.totalorder %v2569, 0
        %vm3432 = vcmp.lt.s32.totalorder %v2576, 0
        %vm3433 = vcmp.lt.s32.totalorder %v2583, 0
        %vm3434 = vcmp.lt.s32.totalorder %v2590, 0
        %vm3435 = vcmp.lt.s32.totalorder %v2597, 0
        %vm3436 = vcmp.lt.s32.totalorder %v2604, 0
        %vm3437 = vcmp.lt.s32.totalorder %v2611, 0
        %vm3438 = vcmp.lt.s32.totalorder %v2618, 0
        %vm3439 = vcmp.lt.s32.totalorder %v2625, 0
        %vm3440 = vcmp.lt.s32.totalorder %v2632, 0
        %vm3441 = vcmp.lt.s32.totalorder %v2639, 0
        %vm3442 = vcmp.lt.s32.totalorder %v2646, 0
        %vm3443 = vcmp.lt.s32.totalorder %v2653, 0
        %vm3444 = vcmp.lt.s32.totalorder %v2660, 0
        %vm3445 = vcmp.lt.s32.totalorder %v2667, 0
        %vm3446 = vcmp.lt.s32.totalorder %v2674, 0
        %vm3447 = vcmp.lt.s32.totalorder %v2681, 0
        %vm3448 = vcmp.lt.s32.totalorder %v2688, 0
        %vm3449 = vcmp.lt.s32.totalorder %v2695, 0
        %vm3450 = vcmp.lt.s32.totalorder %v2702, 0
        %vm3451 = vcmp.lt.s32.totalorder %v2709, 0
        %vm3452 = vcmp.lt.s32.totalorder %v2716, 0
        %vm3453 = vcmp.lt.s32.totalorder %v2723, 0
        %vm3454 = vcmp.lt.s32.totalorder %v2730, 0
        %vm3455 = vcmp.lt.s32.totalorder %v2737, 0
        %vm3456 = vcmp.lt.s32.totalorder %v2744, 0
        %vm3457 = vcmp.lt.s32.totalorder %v2751, 0
        %vm3458 = vcmp.lt.s32.totalorder %v2758, 0
        %vm3459 = vcmp.lt.s32.totalorder %v2765, 0
        %vm3460 = vcmp.lt.s32.totalorder %v2772, 0
        %vm3461 = vcmp.lt.s32.totalorder %v2779, 0
        %vm3462 = vcmp.lt.s32.totalorder %v2786, 0
        %vm3463 = vcmp.lt.s32.totalorder %v2793, 0
        %vm3464 = vcmp.lt.s32.totalorder %v2800, 0
        %vm3465 = vcmp.lt.s32.totalorder %v2807, 0
        %vm3466 = vcmp.lt.s32.totalorder %v2814, 0
        %vm3467 = vcmp.lt.s32.totalorder %v2821, 0
        %vm3468 = vcmp.lt.s32.totalorder %v2828, 0
        %vm3469 = vcmp.lt.s32.totalorder %v2835, 0
        %vm3470 = vcmp.lt.s32.totalorder %v2842, 0
        %vm3471 = vcmp.lt.s32.totalorder %v2849, 0
        %vm3472 = vcmp.lt.s32.totalorder %v2856, 0
        %vm3473 = vcmp.lt.s32.totalorder %v2863, 0
        %vm3474 = vcmp.lt.s32.totalorder %v2870, 0
        %vm3475 = vcmp.lt.s32.totalorder %v2877, 0
        %vm3476 = vcmp.lt.s32.totalorder %v2884, 0
        %vm3477 = vcmp.lt.s32.totalorder %v2891, 0
        %vm3478 = vcmp.lt.s32.totalorder %v2898, 0
        %vm3479 = vcmp.lt.s32.totalorder %v2905, 0
        %vm3480 = vcmp.lt.s32.totalorder %v2912, 0
        %vm3481 = vcmp.lt.s32.totalorder %v2919, 0
        %vm3482 = vcmp.lt.s32.totalorder %v2926, 0
        %vm3483 = vcmp.lt.s32.totalorder %v2933, 0
        %vm3484 = vcmp.lt.s32.totalorder %v2940, 0
        %vm3485 = vcmp.lt.s32.totalorder %v2947, 0
        %vm3486 = vcmp.lt.s32.totalorder %v2954, 0
        %vm3487 = vcmp.lt.s32.totalorder %v2961, 0
        %vm3488 = vcmp.lt.s32.totalorder %v2968, 0
        %vm3489 = vcmp.lt.s32.totalorder %v2975, 0
        %vm3490 = vcmp.lt.s32.totalorder %v2982, 0
        %vm3491 = vcmp.lt.s32.totalorder %v2989, 0
        %vm3492 = vcmp.lt.s32.totalorder %v2996, 0
        %vm3493 = vcmp.lt.s32.totalorder %v3003, 0
        %vm3494 = vcmp.lt.s32.totalorder %v3010, 0
        %vm3495 = vcmp.lt.s32.totalorder %v3017, 0
        %vm3496 = vcmp.lt.s32.totalorder %v3024, 0
        %vm3497 = vcmp.lt.s32.totalorder %v3031, 0
        %vm3498 = vcmp.lt.s32.totalorder %v3038, 0
        %vm3499 = vcmp.lt.s32.totalorder %v3045, 0
        %vm3500 = vcmp.lt.s32.totalorder %v3052, 0
        %vm3501 = vcmp.lt.s32.totalorder %v3059, 0
        %vm3502 = vcmp.lt.s32.totalorder %v3066, 0
        %vm3503 = vcmp.lt.s32.totalorder %v3073, 0
        %vm3504 = vcmp.lt.s32.totalorder %v3080, 0
        %vm3505 = vcmp.lt.s32.totalorder %v3087, 0
        %vm3506 = vcmp.lt.s32.totalorder %v3094, 0
        %vm3507 = vcmp.lt.s32.totalorder %v3101, 0
        %vm3508 = vcmp.lt.s32.totalorder %v3108, 0
        %vm3509 = vcmp.lt.s32.totalorder %v3115, 0
        %vm3510 = vcmp.lt.s32.totalorder %v3122, 0
        %vm3511 = vcmp.lt.s32.totalorder %v3129, 0
        %vm3512 = vcmp.lt.s32.totalorder %v3136, 0
        %vm3513 = vcmp.lt.s32.totalorder %v3143, 0
        %vm3514 = vcmp.lt.s32.totalorder %v3150, 0
        %vm3515 = vcmp.lt.s32.totalorder %v3157, 0
        %vm3516 = vcmp.lt.s32.totalorder %v3164, 0
        %vm3517 = vcmp.lt.s32.totalorder %v3171, 0
        %vm3518 = vcmp.lt.s32.totalorder %v3178, 0
        %vm3519 = vcmp.lt.s32.totalorder %v3185, 0
        %vm3520 = vcmp.lt.s32.totalorder %v3192, 0
        %vm3521 = vcmp.lt.s32.totalorder %v3199, 0
        %vm3522 = vcmp.lt.s32.totalorder %v3206, 0
        %vm3523 = vcmp.lt.s32.totalorder %v3213, 0
        %vm3524 = vcmp.lt.s32.totalorder %v3220, 0
        %vm3525 = vcmp.lt.s32.totalorder %v3227, 0
        %vm3526 = vcmp.lt.s32.totalorder %v3234, 0
        %vm3527 = vcmp.lt.s32.totalorder %v3241, 0
        %vm3528 = vcmp.lt.s32.totalorder %v3248, 0
        %vm3529 = vcmp.lt.s32.totalorder %v3255, 0
        %vm3530 = vcmp.lt.s32.totalorder %v3262, 0
        %vm3531 = vcmp.lt.s32.totalorder %v3269, 0
        %vm3532 = vcmp.lt.s32.totalorder %v3276, 0
        %vm3533 = vmand %vm3405, %vm3277
        %vm3534 = vmand %vm3406, %vm3278
        %vm3535 = vmand %vm3407, %vm3279
        %vm3536 = vmand %vm3408, %vm3280
        %vm3537 = vmand %vm3409, %vm3281
        %vm3538 = vmand %vm3410, %vm3282
        %vm3539 = vmand %vm3411, %vm3283
        %vm3540 = vmand %vm3412, %vm3284
        %vm3541 = vmand %vm3413, %vm3285
        %vm3542 = vmand %vm3414, %vm3286
        %vm3543 = vmand %vm3415, %vm3287
        %vm3544 = vmand %vm3416, %vm3288
        %vm3545 = vmand %vm3417, %vm3289
        %vm3546 = vmand %vm3418, %vm3290
        %vm3547 = vmand %vm3419, %vm3291
        %vm3548 = vmand %vm3420, %vm3292
        %vm3549 = vmand %vm3421, %vm3293
        %vm3550 = vmand %vm3422, %vm3294
        %vm3551 = vmand %vm3423, %vm3295
        %vm3552 = vmand %vm3424, %vm3296
        %vm3553 = vmand %vm3425, %vm3297
        %vm3554 = vmand %vm3426, %vm3298
        %vm3555 = vmand %vm3427, %vm3299
        %vm3556 = vmand %vm3428, %vm3300
        %vm3557 = vmand %vm3429, %vm3301
        %vm3558 = vmand %vm3430, %vm3302
        %vm3559 = vmand %vm3431, %vm3303
        %vm3560 = vmand %vm3432, %vm3304
        %vm3561 = vmand %vm3433, %vm3305
        %vm3562 = vmand %vm3434, %vm3306
        %vm3563 = vmand %vm3435, %vm3307
        %vm3564 = vmand %vm3436, %vm3308
        %vm3565 = vmand %vm3437, %vm3309
        %vm3566 = vmand %vm3438, %vm3310
        %vm3567 = vmand %vm3439, %vm3311
        %vm3568 = vmand %vm3440, %vm3312
        %vm3569 = vmand %vm3441, %vm3313
        %vm3570 = vmand %vm3442, %vm3314
        %vm3571 = vmand %vm3443, %vm3315
        %vm3572 = vmand %vm3444, %vm3316
        %vm3573 = vmand %vm3445, %vm3317
        %vm3574 = vmand %vm3446, %vm3318
        %vm3575 = vmand %vm3447, %vm3319
        %vm3576 = vmand %vm3448, %vm3320
        %vm3577 = vmand %vm3449, %vm3321
        %vm3578 = vmand %vm3450, %vm3322
        %vm3579 = vmand %vm3451, %vm3323
        %vm3580 = vmand %vm3452, %vm3324
        %vm3581 = vmand %vm3453, %vm3325
        %vm3582 = vmand %vm3454, %vm3326
        %vm3583 = vmand %vm3455, %vm3327
        %vm3584 = vmand %vm3456, %vm3328
        %vm3585 = vmand %vm3457, %vm3329
        %vm3586 = vmand %vm3458, %vm3330
        %vm3587 = vmand %vm3459, %vm3331
        %vm3588 = vmand %vm3460, %vm3332
        %vm3589 = vmand %vm3461, %vm3333
        %vm3590 = vmand %vm3462, %vm3334
        %vm3591 = vmand %vm3463, %vm3335
        %vm3592 = vmand %vm3464, %vm3336
        %vm3593 = vmand %vm3465, %vm3337
        %vm3594 = vmand %vm3466, %vm3338
        %vm3595 = vmand %vm3467, %vm3339
        %vm3596 = vmand %vm3468, %vm3340
        %vm3597 = vmand %vm3469, %vm3341
        %vm3598 = vmand %vm3470, %vm3342
        %vm3599 = vmand %vm3471, %vm3343
        %vm3600 = vmand %vm3472, %vm3344
        %vm3601 = vmand %vm3473, %vm3345
        %vm3602 = vmand %vm3474, %vm3346
        %vm3603 = vmand %vm3475, %vm3347
        %vm3604 = vmand %vm3476, %vm3348
        %vm3605 = vmand %vm3477, %vm3349
        %vm3606 = vmand %vm3478, %vm3350
        %vm3607 = vmand %vm3479, %vm3351
        %vm3608 = vmand %vm3480, %vm3352
        %vm3609 = vmand %vm3481, %vm3353
        %vm3610 = vmand %vm3482, %vm3354
        %vm3611 = vmand %vm3483, %vm3355
        %vm3612 = vmand %vm3484, %vm3356
        %vm3613 = vmand %vm3485, %vm3357
        %vm3614 = vmand %vm3486, %vm3358
        %vm3615 = vmand %vm3487, %vm3359
        %vm3616 = vmand %vm3488, %vm3360
        %vm3617 = vmand %vm3489, %vm3361
        %vm3618 = vmand %vm3490, %vm3362
        %vm3619 = vmand %vm3491, %vm3363
        %vm3620 = vmand %vm3492, %vm3364
        %vm3621 = vmand %vm3493, %vm3365
        %vm3622 = vmand %vm3494, %vm3366
        %vm3623 = vmand %vm3495, %vm3367
        %vm3624 = vmand %vm3496, %vm3368
        %vm3625 = vmand %vm3497, %vm3369
        %vm3626 = vmand %vm3498, %vm3370
        %vm3627 = vmand %vm3499, %vm3371
        %vm3628 = vmand %vm3500, %vm3372
        %vm3629 = vmand %vm3501, %vm3373
        %vm3630 = vmand %vm3502, %vm3374
        %vm3631 = vmand %vm3503, %vm3375
        %vm3632 = vmand %vm3504, %vm3376
        %vm3633 = vmand %vm3505, %vm3377
        %vm3634 = vmand %vm3506, %vm3378
        %vm3635 = vmand %vm3507, %vm3379
        %vm3636 = vmand %vm3508, %vm3380
        %vm3637 = vmand %vm3509, %vm3381
        %vm3638 = vmand %vm3510, %vm3382
        %vm3639 = vmand %vm3511, %vm3383
        %vm3640 = vmand %vm3512, %vm3384
        %vm3641 = vmand %vm3513, %vm3385
        %vm3642 = vmand %vm3514, %vm3386
        %vm3643 = vmand %vm3515, %vm3387
        %vm3644 = vmand %vm3516, %vm3388
        %vm3645 = vmand %vm3517, %vm3389
        %vm3646 = vmand %vm3518, %vm3390
        %vm3647 = vmand %vm3519, %vm3391
        %vm3648 = vmand %vm3520, %vm3392
        %vm3649 = vmand %vm3521, %vm3393
        %vm3650 = vmand %vm3522, %vm3394
        %vm3651 = vmand %vm3523, %vm3395
        %vm3652 = vmand %vm3524, %vm3396
        %vm3653 = vmand %vm3525, %vm3397
        %vm3654 = vmand %vm3526, %vm3398
        %vm3655 = vmand %vm3527, %vm3399
        %vm3656 = vmand %vm3528, %vm3400
        %vm3657 = vmand %vm3529, %vm3401
        %vm3658 = vmand %vm3530, %vm3402
        %vm3659 = vmand %vm3531, %vm3403
        %vm3660 = vmand %vm3532, %vm3404
        %v3661 = vadd.s32 %v2387, 2
        %v3662 = vadd.s32 %v2394, 2
        %v3663 = vadd.s32 %v2401, 2
        %v3664 = vadd.s32 %v2408, 2
        %v3665 = vadd.s32 %v2415, 2
        %v3666 = vadd.s32 %v2422, 2
        %v3667 = vadd.s32 %v2429, 2
        %v3668 = vadd.s32 %v2436, 2
        %v3669 = vadd.s32 %v2443, 2
        %v3670 = vadd.s32 %v2450, 2
        %v3671 = vadd.s32 %v2457, 2
        %v3672 = vadd.s32 %v2464, 2
        %v3673 = vadd.s32 %v2471, 2
        %v3674 = vadd.s32 %v2478, 2
        %v3675 = vadd.s32 %v2485, 2
        %v3676 = vadd.s32 %v2492, 2
        %v3677 = vadd.s32 %v2499, 2
        %v3678 = vadd.s32 %v2506, 2
        %v3679 = vadd.s32 %v2513, 2
        %v3680 = vadd.s32 %v2520, 2
        %v3681 = vadd.s32 %v2527, 2
        %v3682 = vadd.s32 %v2534, 2
        %v3683 = vadd.s32 %v2541, 2
        %v3684 = vadd.s32 %v2548, 2
        %v3685 = vadd.s32 %v2555, 2
        %v3686 = vadd.s32 %v2562, 2
        %v3687 = vadd.s32 %v2569, 2
        %v3688 = vadd.s32 %v2576, 2
        %v3689 = vadd.s32 %v2583, 2
        %v3690 = vadd.s32 %v2590, 2
        %v3691 = vadd.s32 %v2597, 2
        %v3692 = vadd.s32 %v2604, 2
        %v3693 = vadd.s32 %v2611, 2
        %v3694 = vadd.s32 %v2618, 2
        %v3695 = vadd.s32 %v2625, 2
        %v3696 = vadd.s32 %v2632, 2
        %v3697 = vadd.s32 %v2639, 2
        %v3698 = vadd.s32 %v2646, 2
        %v3699 = vadd.s32 %v2653, 2
        %v3700 = vadd.s32 %v2660, 2
        %v3701 = vadd.s32 %v2667, 2
        %v3702 = vadd.s32 %v2674, 2
        %v3703 = vadd.s32 %v2681, 2
        %v3704 = vadd.s32 %v2688, 2
        %v3705 = vadd.s32 %v2695, 2
        %v3706 = vadd.s32 %v2702, 2
        %v3707 = vadd.s32 %v2709, 2
        %v3708 = vadd.s32 %v2716, 2
        %v3709 = vadd.s32 %v2723, 2
        %v3710 = vadd.s32 %v2730, 2
        %v3711 = vadd.s32 %v2737, 2
        %v3712 = vadd.s32 %v2744, 2
        %v3713 = vadd.s32 %v2751, 2
        %v3714 = vadd.s32 %v2758, 2
        %v3715 = vadd.s32 %v2765, 2
        %v3716 = vadd.s32 %v2772, 2
        %v3717 = vadd.s32 %v2779, 2
        %v3718 = vadd.s32 %v2786, 2
        %v3719 = vadd.s32 %v2793, 2
        %v3720 = vadd.s32 %v2800, 2
        %v3721 = vadd.s32 %v2807, 2
        %v3722 = vadd.s32 %v2814, 2
        %v3723 = vadd.s32 %v2821, 2
        %v3724 = vadd.s32 %v2828, 2
        %v3725 = vadd.s32 %v2835, 2
        %v3726 = vadd.s32 %v2842, 2
        %v3727 = vadd.s32 %v2849, 2
        %v3728 = vadd.s32 %v2856, 2
        %v3729 = vadd.s32 %v2863, 2
        %v3730 = vadd.s32 %v2870, 2
        %v3731 = vadd.s32 %v2877, 2
        %v3732 = vadd.s32 %v2884, 2
        %v3733 = vadd.s32 %v2891, 2
        %v3734 = vadd.s32 %v2898, 2
        %v3735 = vadd.s32 %v2905, 2
        %v3736 = vadd.s32 %v2912, 2
        %v3737 = vadd.s32 %v2919, 2
        %v3738 = vadd.s32 %v2926, 2
        %v3739 = vadd.s32 %v2933, 2
        %v3740 = vadd.s32 %v2940, 2
        %v3741 = vadd.s32 %v2947, 2
        %v3742 = vadd.s32 %v2954, 2
        %v3743 = vadd.s32 %v2961, 2
        %v3744 = vadd.s32 %v2968, 2
        %v3745 = vadd.s32 %v2975, 2
        %v3746 = vadd.s32 %v2982, 2
        %v3747 = vadd.s32 %v2989, 2
        %v3748 = vadd.s32 %v2996, 2
        %v3749 = vadd.s32 %v3003, 2
        %v3750 = vadd.s32 %v3010, 2
        %v3751 = vadd.s32 %v3017, 2
        %v3752 = vadd.s32 %v3024, 2
        %v3753 = vadd.s32 %v3031, 2
        %v3754 = vadd.s32 %v3038, 2
        %v3755 = vadd.s32 %v3045, 2
        %v3756 = vadd.s32 %v3052, 2
        %v3757 = vadd.s32 %v3059, 2
        %v3758 = vadd.s32 %v3066, 2
        %v3759 = vadd.s32 %v3073, 2
        %v3760 = vadd.s32 %v3080, 2
        %v3761 = vadd.s32 %v3087, 2
        %v3762 = vadd.s32 %v3094, 2
        %v3763 = vadd.s32 %v3101, 2
        %v3764 = vadd.s32 %v3108, 2
        %v3765 = vadd.s32 %v3115, 2
        %v3766 = vadd.s32 %v3122, 2
        %v3767 = vadd.s32 %v3129, 2
        %v3768 = vadd.s32 %v3136, 2
        %v3769 = vadd.s32 %v3143, 2
        %v3770 = vadd.s32 %v3150, 2
        %v3771 = vadd.s32 %v3157, 2
        %v3772 = vadd.s32 %v3164, 2
        %v3773 = vadd.s32 %v3171, 2
        %v3774 = vadd.s32 %v3178, 2
        %v3775 = vadd.s32 %v3185, 2
        %v3776 = vadd.s32 %v3192, 2
        %v3777 = vadd.s32 %v3199, 2
        %v3778 = vadd.s32 %v3206, 2
        %v3779 = vadd.s32 %v3213, 2
        %v3780 = vadd.s32 %v3220, 2
        %v3781 = vadd.s32 %v3227, 2
        %v3782 = vadd.s32 %v3234, 2
        %v3783 = vadd.s32 %v3241, 2
        %v3784 = vadd.s32 %v3248, 2
        %v3785 = vadd.s32 %v3255, 2
        %v3786 = vadd.s32 %v3262, 2
        %v3787 = vadd.s32 %v3269, 2
        %v3788 = vadd.s32 %v3276, 2
        %v3789 = vsel %vm3533, %v3661, %v2387
        %v3790 = vsel %vm3534, %v3662, %v2394
        %v3791 = vsel %vm3535, %v3663, %v2401
        %v3792 = vsel %vm3536, %v3664, %v2408
        %v3793 = vsel %vm3537, %v3665, %v2415
        %v3794 = vsel %vm3538, %v3666, %v2422
        %v3795 = vsel %vm3539, %v3667, %v2429
        %v3796 = vsel %vm3540, %v3668, %v2436
        %v3797 = vsel %vm3541, %v3669, %v2443
        %v3798 = vsel %vm3542, %v3670, %v2450
        %v3799 = vsel %vm3543, %v3671, %v2457
        %v3800 = vsel %vm3544, %v3672, %v2464
        %v3801 = vsel %vm3545, %v3673, %v2471
        %v3802 = vsel %vm3546, %v3674, %v2478
        %v3803 = vsel %vm3547, %v3675, %v2485
        %v3804 = vsel %vm3548, %v3676, %v2492
        %v3805 = vsel %vm3549, %v3677, %v2499
        %v3806 = vsel %vm3550, %v3678, %v2506
        %v3807 = vsel %vm3551, %v3679, %v2513
        %v3808 = vsel %vm3552, %v3680, %v2520
        %v3809 = vsel %vm3553, %v3681, %v2527
        %v3810 = vsel %vm3554, %v3682, %v2534
        %v3811 = vsel %vm3555, %v3683, %v2541
        %v3812 = vsel %vm3556, %v3684, %v2548
        %v3813 = vsel %vm3557, %v3685, %v2555
        %v3814 = vsel %vm3558, %v3686, %v2562
        %v3815 = vsel %vm3559, %v3687, %v2569
        %v3816 = vsel %vm3560, %v3688, %v2576
        %v3817 = vsel %vm3561, %v3689, %v2583
        %v3818 = vsel %vm3562, %v3690, %v2590
        %v3819 = vsel %vm3563, %v3691, %v2597
        %v3820 = vsel %vm3564, %v3692, %v2604
        %v3821 = vsel %vm3565, %v3693, %v2611
        %v3822 = vsel %vm3566, %v3694, %v2618
        %v3823 = vsel %vm3567, %v3695, %v2625
        %v3824 = vsel %vm3568, %v3696, %v2632
        %v3825 = vsel %vm3569, %v3697, %v2639
        %v3826 = vsel %vm3570, %v3698, %v2646
        %v3827 = vsel %vm3571, %v3699, %v2653
        %v3828 = vsel %vm3572, %v3700, %v2660
        %v3829 = vsel %vm3573, %v3701, %v2667
        %v3830 = vsel %vm3574, %v3702, %v2674
        %v3831 = vsel %vm3575, %v3703, %v2681
        %v3832 = vsel %vm3576, %v3704, %v2688
        %v3833 = vsel %vm3577, %v3705, %v2695
        %v3834 = vsel %vm3578, %v3706, %v2702
        %v3835 = vsel %vm3579, %v3707, %v2709
        %v3836 = vsel %vm3580, %v3708, %v2716
        %v3837 = vsel %vm3581, %v3709, %v2723
        %v3838 = vsel %vm3582, %v3710, %v2730
        %v3839 = vsel %vm3583, %v3711, %v2737
        %v3840 = vsel %vm3584, %v3712, %v2744
        %v3841 = vsel %vm3585, %v3713, %v2751
        %v3842 = vsel %vm3586, %v3714, %v2758
        %v3843 = vsel %vm3587, %v3715, %v2765
        %v3844 = vsel %vm3588, %v3716, %v2772
        %v3845 = vsel %vm3589, %v3717, %v2779
        %v3846 = vsel %vm3590, %v3718, %v2786
        %v3847 = vsel %vm3591, %v3719, %v2793
        %v3848 = vsel %vm3592, %v3720, %v2800
        %v3849 = vsel %vm3593, %v3721, %v2807
        %v3850 = vsel %vm3594, %v3722, %v2814
        %v3851 = vsel %vm3595, %v3723, %v2821
        %v3852 = vsel %vm3596, %v3724, %v2828
        %v3853 = vsel %vm3597, %v3725, %v2835
        %v3854 = vsel %vm3598, %v3726, %v2842
        %v3855 = vsel %vm3599, %v3727, %v2849
        %v3856 = vsel %vm3600, %v3728, %v2856
        %v3857 = vsel %vm3601, %v3729, %v2863
        %v3858 = vsel %vm3602, %v3730, %v2870
        %v3859 = vsel %vm3603, %v3731, %v2877
        %v3860 = vsel %vm3604, %v3732, %v2884
        %v3861 = vsel %vm3605, %v3733, %v2891
        %v3862 = vsel %vm3606, %v3734, %v2898
        %v3863 = vsel %vm3607, %v3735, %v2905
        %v3864 = vsel %vm3608, %v3736, %v2912
        %v3865 = vsel %vm3609, %v3737, %v2919
        %v3866 = vsel %vm3610, %v3738, %v2926
        %v3867 = vsel %vm3611, %v3739, %v2933
        %v3868 = vsel %vm3612, %v3740, %v2940
        %v3869 = vsel %vm3613, %v3741, %v2947
        %v3870 = vsel %vm3614, %v3742, %v2954
        %v3871 = vsel %vm3615, %v3743, %v2961
        %v3872 = vsel %vm3616, %v3744, %v2968
        %v3873 = vsel %vm3617, %v3745, %v2975
        %v3874 = vsel %vm3618, %v3746, %v2982
        %v3875 = vsel %vm3619, %v3747, %v2989
        %v3876 = vsel %vm3620, %v3748, %v2996
        %v3877 = vsel %vm3621, %v3749, %v3003
        %v3878 = vsel %vm3622, %v3750, %v3010
        %v3879 = vsel %vm3623, %v3751, %v3017
        %v3880 = vsel %vm3624, %v3752, %v3024
        %v3881 = vsel %vm3625, %v3753, %v3031
        %v3882 = vsel %vm3626, %v3754, %v3038
        %v3883 = vsel %vm3627, %v3755, %v3045
        %v3884 = vsel %vm3628, %v3756, %v3052
        %v3885 = vsel %vm3629, %v3757, %v3059
        %v3886 = vsel %vm3630, %v3758, %v3066
        %v3887 = vsel %vm3631, %v3759, %v3073
        %v3888 = vsel %vm3632, %v3760, %v3080
        %v3889 = vsel %vm3633, %v3761, %v3087
        %v3890 = vsel %vm3634, %v3762, %v3094
        %v3891 = vsel %vm3635, %v3763, %v3101
        %v3892 = vsel %vm3636, %v3764, %v3108
        %v3893 = vsel %vm3637, %v3765, %v3115
        %v3894 = vsel %vm3638, %v3766, %v3122
        %v3895 = vsel %vm3639, %v3767, %v3129
        %v3896 = vsel %vm3640, %v3768, %v3136
        %v3897 = vsel %vm3641, %v3769, %v3143
        %v3898 = vsel %vm3642, %v3770, %v3150
        %v3899 = vsel %vm3643, %v3771, %v3157
        %v3900 = vsel %vm3644, %v3772, %v3164
        %v3901 = vsel %vm3645, %v3773, %v3171
        %v3902 = vsel %vm3646, %v3774, %v3178
        %v3903 = vsel %vm3647, %v3775, %v3185
        %v3904 = vsel %vm3648, %v3776, %v3192
        %v3905 = vsel %vm3649, %v3777, %v3199
        %v3906 = vsel %vm3650, %v3778, %v3206
        %v3907 = vsel %vm3651, %v3779, %v3213
        %v3908 = vsel %vm3652, %v3780, %v3220
        %v3909 = vsel %vm3653, %v3781, %v3227
        %v3910 = vsel %vm3654, %v3782, %v3234
        %v3911 = vsel %vm3655, %v3783, %v3241
        %v3912 = vsel %vm3656, %v3784, %v3248
        %v3913 = vsel %vm3657, %v3785, %v3255
        %v3914 = vsel %vm3658, %v3786, %v3262
        %v3915 = vsel %vm3659, %v3787, %v3269
        %v3916 = vsel %vm3660, %v3788, %v3276
        %vm3917 = vcmp.eq.s32.totalorder %v3789, 0
        %vm3918 = vcmp.eq.s32.totalorder %v3790, 0
        %vm3919 = vcmp.eq.s32.totalorder %v3791, 0
        %vm3920 = vcmp.eq.s32.totalorder %v3792, 0
        %vm3921 = vcmp.eq.s32.totalorder %v3793, 0
        %vm3922 = vcmp.eq.s32.totalorder %v3794, 0
        %vm3923 = vcmp.eq.s32.totalorder %v3795, 0
        %vm3924 = vcmp.eq.s32.totalorder %v3796, 0
        %vm3925 = vcmp.eq.s32.totalorder %v3797, 0
        %vm3926 = vcmp.eq.s32.totalorder %v3798, 0
        %vm3927 = vcmp.eq.s32.totalorder %v3799, 0
        %vm3928 = vcmp.eq.s32.totalorder %v3800, 0
        %vm3929 = vcmp.eq.s32.totalorder %v3801, 0
        %vm3930 = vcmp.eq.s32.totalorder %v3802, 0
        %vm3931 = vcmp.eq.s32.totalorder %v3803, 0
        %vm3932 = vcmp.eq.s32.totalorder %v3804, 0
        %vm3933 = vcmp.eq.s32.totalorder %v3805, 0
        %vm3934 = vcmp.eq.s32.totalorder %v3806, 0
        %vm3935 = vcmp.eq.s32.totalorder %v3807, 0
        %vm3936 = vcmp.eq.s32.totalorder %v3808, 0
        %vm3937 = vcmp.eq.s32.totalorder %v3809, 0
        %vm3938 = vcmp.eq.s32.totalorder %v3810, 0
        %vm3939 = vcmp.eq.s32.totalorder %v3811, 0
        %vm3940 = vcmp.eq.s32.totalorder %v3812, 0
        %vm3941 = vcmp.eq.s32.totalorder %v3813, 0
        %vm3942 = vcmp.eq.s32.totalorder %v3814, 0
        %vm3943 = vcmp.eq.s32.totalorder %v3815, 0
        %vm3944 = vcmp.eq.s32.totalorder %v3816, 0
        %vm3945 = vcmp.eq.s32.totalorder %v3817, 0
        %vm3946 = vcmp.eq.s32.totalorder %v3818, 0
        %vm3947 = vcmp.eq.s32.totalorder %v3819, 0
        %vm3948 = vcmp.eq.s32.totalorder %v3820, 0
        %vm3949 = vcmp.eq.s32.totalorder %v3821, 0
        %vm3950 = vcmp.eq.s32.totalorder %v3822, 0
        %vm3951 = vcmp.eq.s32.totalorder %v3823, 0
        %vm3952 = vcmp.eq.s32.totalorder %v3824, 0
        %vm3953 = vcmp.eq.s32.totalorder %v3825, 0
        %vm3954 = vcmp.eq.s32.totalorder %v3826, 0
        %vm3955 = vcmp.eq.s32.totalorder %v3827, 0
        %vm3956 = vcmp.eq.s32.totalorder %v3828, 0
        %vm3957 = vcmp.eq.s32.totalorder %v3829, 0
        %vm3958 = vcmp.eq.s32.totalorder %v3830, 0
        %vm3959 = vcmp.eq.s32.totalorder %v3831, 0
        %vm3960 = vcmp.eq.s32.totalorder %v3832, 0
        %vm3961 = vcmp.eq.s32.totalorder %v3833, 0
        %vm3962 = vcmp.eq.s32.totalorder %v3834, 0
        %vm3963 = vcmp.eq.s32.totalorder %v3835, 0
        %vm3964 = vcmp.eq.s32.totalorder %v3836, 0
        %vm3965 = vcmp.eq.s32.totalorder %v3837, 0
        %vm3966 = vcmp.eq.s32.totalorder %v3838, 0
        %vm3967 = vcmp.eq.s32.totalorder %v3839, 0
        %vm3968 = vcmp.eq.s32.totalorder %v3840, 0
        %vm3969 = vcmp.eq.s32.totalorder %v3841, 0
        %vm3970 = vcmp.eq.s32.totalorder %v3842, 0
        %vm3971 = vcmp.eq.s32.totalorder %v3843, 0
        %vm3972 = vcmp.eq.s32.totalorder %v3844, 0
        %vm3973 = vcmp.eq.s32.totalorder %v3845, 0
        %vm3974 = vcmp.eq.s32.totalorder %v3846, 0
        %vm3975 = vcmp.eq.s32.totalorder %v3847, 0
        %vm3976 = vcmp.eq.s32.totalorder %v3848, 0
        %vm3977 = vcmp.eq.s32.totalorder %v3849, 0
        %vm3978 = vcmp.eq.s32.totalorder %v3850, 0
        %vm3979 = vcmp.eq.s32.totalorder %v3851, 0
        %vm3980 = vcmp.eq.s32.totalorder %v3852, 0
        %vm3981 = vcmp.eq.s32.totalorder %v3853, 0
        %vm3982 = vcmp.eq.s32.totalorder %v3854, 0
        %vm3983 = vcmp.eq.s32.totalorder %v3855, 0
        %vm3984 = vcmp.eq.s32.totalorder %v3856, 0
        %vm3985 = vcmp.eq.s32.totalorder %v3857, 0
        %vm3986 = vcmp.eq.s32.totalorder %v3858, 0
        %vm3987 = vcmp.eq.s32.totalorder %v3859, 0
        %vm3988 = vcmp.eq.s32.totalorder %v3860, 0
        %vm3989 = vcmp.eq.s32.totalorder %v3861, 0
        %vm3990 = vcmp.eq.s32.totalorder %v3862, 0
        %vm3991 = vcmp.eq.s32.totalorder %v3863, 0
        %vm3992 = vcmp.eq.s32.totalorder %v3864, 0
        %vm3993 = vcmp.eq.s32.totalorder %v3865, 0
        %vm3994 = vcmp.eq.s32.totalorder %v3866, 0
        %vm3995 = vcmp.eq.s32.totalorder %v3867, 0
        %vm3996 = vcmp.eq.s32.totalorder %v3868, 0
        %vm3997 = vcmp.eq.s32.totalorder %v3869, 0
        %vm3998 = vcmp.eq.s32.totalorder %v3870, 0
        %vm3999 = vcmp.eq.s32.totalorder %v3871, 0
        %vm4000 = vcmp.eq.s32.totalorder %v3872, 0
        %vm4001 = vcmp.eq.s32.totalorder %v3873, 0
        %vm4002 = vcmp.eq.s32.totalorder %v3874, 0
        %vm4003 = vcmp.eq.s32.totalorder %v3875, 0
        %vm4004 = vcmp.eq.s32.totalorder %v3876, 0
        %vm4005 = vcmp.eq.s32.totalorder %v3877, 0
        %vm4006 = vcmp.eq.s32.totalorder %v3878, 0
        %vm4007 = vcmp.eq.s32.totalorder %v3879, 0
        %vm4008 = vcmp.eq.s32.totalorder %v3880, 0
        %vm4009 = vcmp.eq.s32.totalorder %v3881, 0
        %vm4010 = vcmp.eq.s32.totalorder %v3882, 0
        %vm4011 = vcmp.eq.s32.totalorder %v3883, 0
        %vm4012 = vcmp.eq.s32.totalorder %v3884, 0
        %vm4013 = vcmp.eq.s32.totalorder %v3885, 0
        %vm4014 = vcmp.eq.s32.totalorder %v3886, 0
        %vm4015 = vcmp.eq.s32.totalorder %v3887, 0
        %vm4016 = vcmp.eq.s32.totalorder %v3888, 0
        %vm4017 = vcmp.eq.s32.totalorder %v3889, 0
        %vm4018 = vcmp.eq.s32.totalorder %v3890, 0
        %vm4019 = vcmp.eq.s32.totalorder %v3891, 0
        %vm4020 = vcmp.eq.s32.totalorder %v3892, 0
        %vm4021 = vcmp.eq.s32.totalorder %v3893, 0
        %vm4022 = vcmp.eq.s32.totalorder %v3894, 0
        %vm4023 = vcmp.eq.s32.totalorder %v3895, 0
        %vm4024 = vcmp.eq.s32.totalorder %v3896, 0
        %vm4025 = vcmp.eq.s32.totalorder %v3897, 0
        %vm4026 = vcmp.eq.s32.totalorder %v3898, 0
        %vm4027 = vcmp.eq.s32.totalorder %v3899, 0
        %vm4028 = vcmp.eq.s32.totalorder %v3900, 0
        %vm4029 = vcmp.eq.s32.totalorder %v3901, 0
        %vm4030 = vcmp.eq.s32.totalorder %v3902, 0
        %vm4031 = vcmp.eq.s32.totalorder %v3903, 0
        %vm4032 = vcmp.eq.s32.totalorder %v3904, 0
        %vm4033 = vcmp.eq.s32.totalorder %v3905, 0
        %vm4034 = vcmp.eq.s32.totalorder %v3906, 0
        %vm4035 = vcmp.eq.s32.totalorder %v3907, 0
        %vm4036 = vcmp.eq.s32.totalorder %v3908, 0
        %vm4037 = vcmp.eq.s32.totalorder %v3909, 0
        %vm4038 = vcmp.eq.s32.totalorder %v3910, 0
        %vm4039 = vcmp.eq.s32.totalorder %v3911, 0
        %vm4040 = vcmp.eq.s32.totalorder %v3912, 0
        %vm4041 = vcmp.eq.s32.totalorder %v3913, 0
        %vm4042 = vcmp.eq.s32.totalorder %v3914, 0
        %vm4043 = vcmp.eq.s32.totalorder %v3915, 0
        %vm4044 = vcmp.eq.s32.totalorder %v3916, 0
        %v4045 = vld [vmem:[#allocation2] sm:$0x1]
        %vm4046 = vmand %vm2253, %vm3917
        %vm4047 = vmand %vm2254, %vm3918
        %vm4048 = vmand %vm2255, %vm3919
        %vm4049 = vmand %vm2256, %vm3920
        %vm4050 = vmand %vm2257, %vm3921
        %vm4051 = vmand %vm2258, %vm3922
        %vm4052 = vmand %vm2259, %vm3923
        %vm4053 = vmand %vm2260, %vm3924
        %vm4054 = vmand %vm2261, %vm3925
        %vm4055 = vmand %vm2262, %vm3926
        %vm4056 = vmand %vm2263, %vm3927
        %vm4057 = vmand %vm2264, %vm3928
        %vm4058 = vmand %vm2265, %vm3929
        %vm4059 = vmand %vm2266, %vm3930
        %vm4060 = vmand %vm2267, %vm3931
        %vm4061 = vmand %vm2268, %vm3932
        %vm4062 = vmand %vm2269, %vm3933
        %vm4063 = vmand %vm2270, %vm3934
        %vm4064 = vmand %vm2271, %vm3935
        %vm4065 = vmand %vm2272, %vm3936
        %vm4066 = vmand %vm2273, %vm3937
        %vm4067 = vmand %vm2274, %vm3938
        %vm4068 = vmand %vm2275, %vm3939
        %vm4069 = vmand %vm2276, %vm3940
        %vm4070 = vmand %vm2277, %vm3941
        %vm4071 = vmand %vm2278, %vm3942
        %vm4072 = vmand %vm2279, %vm3943
        %vm4073 = vmand %vm2280, %vm3944
        %vm4074 = vmand %vm2281, %vm3945
        %vm4075 = vmand %vm2282, %vm3946
        %vm4076 = vmand %vm2283, %vm3947
        %vm4077 = vmand %vm2284, %vm3948
        %vm4078 = vmand %vm2285, %vm3949
        %vm4079 = vmand %vm2286, %vm3950
        %vm4080 = vmand %vm2287, %vm3951
        %vm4081 = vmand %vm2288, %vm3952
        %vm4082 = vmand %vm2289, %vm3953
        %vm4083 = vmand %vm2290, %vm3954
        %vm4084 = vmand %vm2291, %vm3955
        %vm4085 = vmand %vm2292, %vm3956
        %vm4086 = vmand %vm2293, %vm3957
        %vm4087 = vmand %vm2294, %vm3958
        %vm4088 = vmand %vm2295, %vm3959
        %vm4089 = vmand %vm2296, %vm3960
        %vm4090 = vmand %vm2297, %vm3961
        %vm4091 = vmand %vm2298, %vm3962
        %vm4092 = vmand %vm2299, %vm3963
        %vm4093 = vmand %vm2300, %vm3964
        %vm4094 = vmand %vm2301, %vm3965
        %vm4095 = vmand %vm2302, %vm3966
        %vm4096 = vmand %vm2303, %vm3967
        %vm4097 = vmand %vm2304, %vm3968
        %vm4098 = vmand %vm2305, %vm3969
        %vm4099 = vmand %vm2306, %vm3970
        %vm4100 = vmand %vm2307, %vm3971
        %vm4101 = vmand %vm2308, %vm3972
        %vm4102 = vmand %vm2309, %vm3973
        %vm4103 = vmand %vm2310, %vm3974
        %vm4104 = vmand %vm2311, %vm3975
        %vm4105 = vmand %vm2312, %vm3976
        %vm4106 = vmand %vm2313, %vm3977
        %vm4107 = vmand %vm2314, %vm3978
        %vm4108 = vmand %vm2315, %vm3979
        %vm4109 = vmand %vm2316, %vm3980
        %vm4110 = vmand %vm2317, %vm3981
        %vm4111 = vmand %vm2318, %vm3982
        %vm4112 = vmand %vm2319, %vm3983
        %vm4113 = vmand %vm2320, %vm3984
        %vm4114 = vmand %vm2321, %vm3985
        %vm4115 = vmand %vm2322, %vm3986
        %vm4116 = vmand %vm2323, %vm3987
        %vm4117 = vmand %vm2324, %vm3988
        %vm4118 = vmand %vm2325, %vm3989
        %vm4119 = vmand %vm2326, %vm3990
        %vm4120 = vmand %vm2327, %vm3991
        %vm4121 = vmand %vm2328, %vm3992
        %vm4122 = vmand %vm2329, %vm3993
        %vm4123 = vmand %vm2330, %vm3994
        %vm4124 = vmand %vm2331, %vm3995
        %vm4125 = vmand %vm2332, %vm3996
        %vm4126 = vmand %vm2333, %vm3997
        %vm4127 = vmand %vm2334, %vm3998
        %vm4128 = vmand %vm2335, %vm3999
        %vm4129 = vmand %vm2336, %vm4000
        %vm4130 = vmand %vm2337, %vm4001
        %vm4131 = vmand %vm2338, %vm4002
        %vm4132 = vmand %vm2339, %vm4003
        %vm4133 = vmand %vm2340, %vm4004
        %vm4134 = vmand %vm2341, %vm4005
        %vm4135 = vmand %vm2342, %vm4006
        %vm4136 = vmand %vm2343, %vm4007
        %vm4137 = vmand %vm2344, %vm4008
        %vm4138 = vmand %vm2345, %vm4009
        %vm4139 = vmand %vm2346, %vm4010
        %vm4140 = vmand %vm2347, %vm4011
        %vm4141 = vmand %vm2348, %vm4012
        %vm4142 = vmand %vm2349, %vm4013
        %vm4143 = vmand %vm2350, %vm4014
        %vm4144 = vmand %vm2351, %vm4015
        %vm4145 = vmand %vm2352, %vm4016
        %vm4146 = vmand %vm2353, %vm4017
        %vm4147 = vmand %vm2354, %vm4018
        %vm4148 = vmand %vm2355, %vm4019
        %vm4149 = vmand %vm2356, %vm4020
        %vm4150 = vmand %vm2357, %vm4021
        %vm4151 = vmand %vm2358, %vm4022
        %vm4152 = vmand %vm2359, %vm4023
        %vm4153 = vmand %vm2360, %vm4024
        %vm4154 = vmand %vm2361, %vm4025
        %vm4155 = vmand %vm2362, %vm4026
        %vm4156 = vmand %vm2363, %vm4027
        %vm4157 = vmand %vm2364, %vm4028
        %vm4158 = vmand %vm2365, %vm4029
        %vm4159 = vmand %vm2366, %vm4030
        %vm4160 = vmand %vm2367, %vm4031
        %vm4161 = vmand %vm2368, %vm4032
        %vm4162 = vmand %vm2369, %vm4033
        %vm4163 = vmand %vm2370, %vm4034
        %vm4164 = vmand %vm2371, %vm4035
        %vm4165 = vmand %vm2372, %vm4036
        %vm4166 = vmand %vm2373, %vm4037
        %vm4167 = vmand %vm2374, %vm4038
        %vm4168 = vmand %vm2375, %vm4039
        %vm4169 = vmand %vm2376, %vm4040
        %vm4170 = vmand %vm2377, %vm4041
        %vm4171 = vmand %vm2378, %vm4042
        %vm4172 = vmand %vm2379, %vm4043
        %vm4173 = vmand %vm2380, %vm4044
        %v4174 = vsel %vm4046, 1, 0
        %v4175 = vsel %vm4047, 1, 0
        %v4176 = vsel %vm4048, 1, 0
        %v4177 = vsel %vm4049, 1, 0
        %v4178 = vsel %vm4050, 1, 0
        %v4179 = vsel %vm4051, 1, 0
        %v4180 = vsel %vm4052, 1, 0
        %v4181 = vsel %vm4053, 1, 0
        %v4182 = vsel %vm4054, 1, 0
        %v4183 = vsel %vm4055, 1, 0
        %v4184 = vsel %vm4056, 1, 0
        %v4185 = vsel %vm4057, 1, 0
        %v4186 = vsel %vm4058, 1, 0
        %v4187 = vsel %vm4059, 1, 0
        %v4188 = vsel %vm4060, 1, 0
        %v4189 = vsel %vm4061, 1, 0
        %v4190 = vsel %vm4062, 1, 0
        %v4191 = vsel %vm4063, 1, 0
        %v4192 = vsel %vm4064, 1, 0
        %v4193 = vsel %vm4065, 1, 0
        %v4194 = vsel %vm4066, 1, 0
        %v4195 = vsel %vm4067, 1, 0
        %v4196 = vsel %vm4068, 1, 0
        %v4197 = vsel %vm4069, 1, 0
        %v4198 = vsel %vm4070, 1, 0
        %v4199 = vsel %vm4071, 1, 0
        %v4200 = vsel %vm4072, 1, 0
        %v4201 = vsel %vm4073, 1, 0
        %v4202 = vsel %vm4074, 1, 0
        %v4203 = vsel %vm4075, 1, 0
        %v4204 = vsel %vm4076, 1, 0
        %v4205 = vsel %vm4077, 1, 0
        %v4206 = vsel %vm4078, 1, 0
        %v4207 = vsel %vm4079, 1, 0
        %v4208 = vsel %vm4080, 1, 0
        %v4209 = vsel %vm4081, 1, 0
        %v4210 = vsel %vm4082, 1, 0
        %v4211 = vsel %vm4083, 1, 0
        %v4212 = vsel %vm4084, 1, 0
        %v4213 = vsel %vm4085, 1, 0
        %v4214 = vsel %vm4086, 1, 0
        %v4215 = vsel %vm4087, 1, 0
        %v4216 = vsel %vm4088, 1, 0
        %v4217 = vsel %vm4089, 1, 0
        %v4218 = vsel %vm4090, 1, 0
        %v4219 = vsel %vm4091, 1, 0
        %v4220 = vsel %vm4092, 1, 0
        %v4221 = vsel %vm4093, 1, 0
        %v4222 = vsel %vm4094, 1, 0
        %v4223 = vsel %vm4095, 1, 0
        %v4224 = vsel %vm4096, 1, 0
        %v4225 = vsel %vm4097, 1, 0
        %v4226 = vsel %vm4098, 1, 0
        %v4227 = vsel %vm4099, 1, 0
        %v4228 = vsel %vm4100, 1, 0
        %v4229 = vsel %vm4101, 1, 0
        %v4230 = vsel %vm4102, 1, 0
        %v4231 = vsel %vm4103, 1, 0
        %v4232 = vsel %vm4104, 1, 0
        %v4233 = vsel %vm4105, 1, 0
        %v4234 = vsel %vm4106, 1, 0
        %v4235 = vsel %vm4107, 1, 0
        %v4236 = vsel %vm4108, 1, 0
        %v4237 = vsel %vm4109, 1, 0
        %v4238 = vsel %vm4110, 1, 0
        %v4239 = vsel %vm4111, 1, 0
        %v4240 = vsel %vm4112, 1, 0
        %v4241 = vsel %vm4113, 1, 0
        %v4242 = vsel %vm4114, 1, 0
        %v4243 = vsel %vm4115, 1, 0
        %v4244 = vsel %vm4116, 1, 0
        %v4245 = vsel %vm4117, 1, 0
        %v4246 = vsel %vm4118, 1, 0
        %v4247 = vsel %vm4119, 1, 0
        %v4248 = vsel %vm4120, 1, 0
        %v4249 = vsel %vm4121, 1, 0
        %v4250 = vsel %vm4122, 1, 0
        %v4251 = vsel %vm4123, 1, 0
        %v4252 = vsel %vm4124, 1, 0
        %v4253 = vsel %vm4125, 1, 0
        %v4254 = vsel %vm4126, 1, 0
        %v4255 = vsel %vm4127, 1, 0
        %v4256 = vsel %vm4128, 1, 0
        %v4257 = vsel %vm4129, 1, 0
        %v4258 = vsel %vm4130, 1, 0
        %v4259 = vsel %vm4131, 1, 0
        %v4260 = vsel %vm4132, 1, 0
        %v4261 = vsel %vm4133, 1, 0
        %v4262 = vsel %vm4134, 1, 0
        %v4263 = vsel %vm4135, 1, 0
        %v4264 = vsel %vm4136, 1, 0
        %v4265 = vsel %vm4137, 1, 0
        %v4266 = vsel %vm4138, 1, 0
        %v4267 = vsel %vm4139, 1, 0
        %v4268 = vsel %vm4140, 1, 0
        %v4269 = vsel %vm4141, 1, 0
        %v4270 = vsel %vm4142, 1, 0
        %v4271 = vsel %vm4143, 1, 0
        %v4272 = vsel %vm4144, 1, 0
        %v4273 = vsel %vm4145, 1, 0
        %v4274 = vsel %vm4146, 1, 0
        %v4275 = vsel %vm4147, 1, 0
        %v4276 = vsel %vm4148, 1, 0
        %v4277 = vsel %vm4149, 1, 0
        %v4278 = vsel %vm4150, 1, 0
        %v4279 = vsel %vm4151, 1, 0
        %v4280 = vsel %vm4152, 1, 0
        %v4281 = vsel %vm4153, 1, 0
        %v4282 = vsel %vm4154, 1, 0
        %v4283 = vsel %vm4155, 1, 0
        %v4284 = vsel %vm4156, 1, 0
        %v4285 = vsel %vm4157, 1, 0
        %v4286 = vsel %vm4158, 1, 0
        %v4287 = vsel %vm4159, 1, 0
        %v4288 = vsel %vm4160, 1, 0
        %v4289 = vsel %vm4161, 1, 0
        %v4290 = vsel %vm4162, 1, 0
        %v4291 = vsel %vm4163, 1, 0
        %v4292 = vsel %vm4164, 1, 0
        %v4293 = vsel %vm4165, 1, 0
        %v4294 = vsel %vm4166, 1, 0
        %v4295 = vsel %vm4167, 1, 0
        %v4296 = vsel %vm4168, 1, 0
        %v4297 = vsel %vm4169, 1, 0
        %v4298 = vsel %vm4170, 1, 0
        %v4299 = vsel %vm4171, 1, 0
        %v4300 = vsel %vm4172, 1, 0
        %v4301 = vsel %vm4173, 1, 0
        %vm4302 = vcmp.eq.s32.totalorder %v4174, 1
        %vm4303 = vcmp.eq.s32.totalorder %v4175, 1
        %vm4304 = vcmp.eq.s32.totalorder %v4176, 1
        %vm4305 = vcmp.eq.s32.totalorder %v4177, 1
        %vm4306 = vcmp.eq.s32.totalorder %v4178, 1
        %vm4307 = vcmp.eq.s32.totalorder %v4179, 1
        %vm4308 = vcmp.eq.s32.totalorder %v4180, 1
        %vm4309 = vcmp.eq.s32.totalorder %v4181, 1
        %vm4310 = vcmp.eq.s32.totalorder %v4182, 1
        %vm4311 = vcmp.eq.s32.totalorder %v4183, 1
        %vm4312 = vcmp.eq.s32.totalorder %v4184, 1
        %vm4313 = vcmp.eq.s32.totalorder %v4185, 1
        %vm4314 = vcmp.eq.s32.totalorder %v4186, 1
        %vm4315 = vcmp.eq.s32.totalorder %v4187, 1
        %vm4316 = vcmp.eq.s32.totalorder %v4188, 1
        %vm4317 = vcmp.eq.s32.totalorder %v4189, 1
        %vm4318 = vcmp.eq.s32.totalorder %v4190, 1
        %vm4319 = vcmp.eq.s32.totalorder %v4191, 1
        %vm4320 = vcmp.eq.s32.totalorder %v4192, 1
        %vm4321 = vcmp.eq.s32.totalorder %v4193, 1
        %vm4322 = vcmp.eq.s32.totalorder %v4194, 1
        %vm4323 = vcmp.eq.s32.totalorder %v4195, 1
        %vm4324 = vcmp.eq.s32.totalorder %v4196, 1
        %vm4325 = vcmp.eq.s32.totalorder %v4197, 1
        %vm4326 = vcmp.eq.s32.totalorder %v4198, 1
        %vm4327 = vcmp.eq.s32.totalorder %v4199, 1
        %vm4328 = vcmp.eq.s32.totalorder %v4200, 1
        %vm4329 = vcmp.eq.s32.totalorder %v4201, 1
        %vm4330 = vcmp.eq.s32.totalorder %v4202, 1
        %vm4331 = vcmp.eq.s32.totalorder %v4203, 1
        %vm4332 = vcmp.eq.s32.totalorder %v4204, 1
        %vm4333 = vcmp.eq.s32.totalorder %v4205, 1
        %vm4334 = vcmp.eq.s32.totalorder %v4206, 1
        %vm4335 = vcmp.eq.s32.totalorder %v4207, 1
        %vm4336 = vcmp.eq.s32.totalorder %v4208, 1
        %vm4337 = vcmp.eq.s32.totalorder %v4209, 1
        %vm4338 = vcmp.eq.s32.totalorder %v4210, 1
        %vm4339 = vcmp.eq.s32.totalorder %v4211, 1
        %vm4340 = vcmp.eq.s32.totalorder %v4212, 1
        %vm4341 = vcmp.eq.s32.totalorder %v4213, 1
        %vm4342 = vcmp.eq.s32.totalorder %v4214, 1
        %vm4343 = vcmp.eq.s32.totalorder %v4215, 1
        %vm4344 = vcmp.eq.s32.totalorder %v4216, 1
        %vm4345 = vcmp.eq.s32.totalorder %v4217, 1
        %vm4346 = vcmp.eq.s32.totalorder %v4218, 1
        %vm4347 = vcmp.eq.s32.totalorder %v4219, 1
        %vm4348 = vcmp.eq.s32.totalorder %v4220, 1
        %vm4349 = vcmp.eq.s32.totalorder %v4221, 1
        %vm4350 = vcmp.eq.s32.totalorder %v4222, 1
        %vm4351 = vcmp.eq.s32.totalorder %v4223, 1
        %vm4352 = vcmp.eq.s32.totalorder %v4224, 1
        %vm4353 = vcmp.eq.s32.totalorder %v4225, 1
        %vm4354 = vcmp.eq.s32.totalorder %v4226, 1
        %vm4355 = vcmp.eq.s32.totalorder %v4227, 1
        %vm4356 = vcmp.eq.s32.totalorder %v4228, 1
        %vm4357 = vcmp.eq.s32.totalorder %v4229, 1
        %vm4358 = vcmp.eq.s32.totalorder %v4230, 1
        %vm4359 = vcmp.eq.s32.totalorder %v4231, 1
        %vm4360 = vcmp.eq.s32.totalorder %v4232, 1
        %vm4361 = vcmp.eq.s32.totalorder %v4233, 1
        %vm4362 = vcmp.eq.s32.totalorder %v4234, 1
        %vm4363 = vcmp.eq.s32.totalorder %v4235, 1
        %vm4364 = vcmp.eq.s32.totalorder %v4236, 1
        %vm4365 = vcmp.eq.s32.totalorder %v4237, 1
        %vm4366 = vcmp.eq.s32.totalorder %v4238, 1
        %vm4367 = vcmp.eq.s32.totalorder %v4239, 1
        %vm4368 = vcmp.eq.s32.totalorder %v4240, 1
        %vm4369 = vcmp.eq.s32.totalorder %v4241, 1
        %vm4370 = vcmp.eq.s32.totalorder %v4242, 1
        %vm4371 = vcmp.eq.s32.totalorder %v4243, 1
        %vm4372 = vcmp.eq.s32.totalorder %v4244, 1
        %vm4373 = vcmp.eq.s32.totalorder %v4245, 1
        %vm4374 = vcmp.eq.s32.totalorder %v4246, 1
        %vm4375 = vcmp.eq.s32.totalorder %v4247, 1
        %vm4376 = vcmp.eq.s32.totalorder %v4248, 1
        %vm4377 = vcmp.eq.s32.totalorder %v4249, 1
        %vm4378 = vcmp.eq.s32.totalorder %v4250, 1
        %vm4379 = vcmp.eq.s32.totalorder %v4251, 1
        %vm4380 = vcmp.eq.s32.totalorder %v4252, 1
        %vm4381 = vcmp.eq.s32.totalorder %v4253, 1
        %vm4382 = vcmp.eq.s32.totalorder %v4254, 1
        %vm4383 = vcmp.eq.s32.totalorder %v4255, 1
        %vm4384 = vcmp.eq.s32.totalorder %v4256, 1
        %vm4385 = vcmp.eq.s32.totalorder %v4257, 1
        %vm4386 = vcmp.eq.s32.totalorder %v4258, 1
        %vm4387 = vcmp.eq.s32.totalorder %v4259, 1
        %vm4388 = vcmp.eq.s32.totalorder %v4260, 1
        %vm4389 = vcmp.eq.s32.totalorder %v4261, 1
        %vm4390 = vcmp.eq.s32.totalorder %v4262, 1
        %vm4391 = vcmp.eq.s32.totalorder %v4263, 1
        %vm4392 = vcmp.eq.s32.totalorder %v4264, 1
        %vm4393 = vcmp.eq.s32.totalorder %v4265, 1
        %vm4394 = vcmp.eq.s32.totalorder %v4266, 1
        %vm4395 = vcmp.eq.s32.totalorder %v4267, 1
        %vm4396 = vcmp.eq.s32.totalorder %v4268, 1
        %vm4397 = vcmp.eq.s32.totalorder %v4269, 1
        %vm4398 = vcmp.eq.s32.totalorder %v4270, 1
        %vm4399 = vcmp.eq.s32.totalorder %v4271, 1
        %vm4400 = vcmp.eq.s32.totalorder %v4272, 1
        %vm4401 = vcmp.eq.s32.totalorder %v4273, 1
        %vm4402 = vcmp.eq.s32.totalorder %v4274, 1
        %vm4403 = vcmp.eq.s32.totalorder %v4275, 1
        %vm4404 = vcmp.eq.s32.totalorder %v4276, 1
        %vm4405 = vcmp.eq.s32.totalorder %v4277, 1
        %vm4406 = vcmp.eq.s32.totalorder %v4278, 1
        %vm4407 = vcmp.eq.s32.totalorder %v4279, 1
        %vm4408 = vcmp.eq.s32.totalorder %v4280, 1
        %vm4409 = vcmp.eq.s32.totalorder %v4281, 1
        %vm4410 = vcmp.eq.s32.totalorder %v4282, 1
        %vm4411 = vcmp.eq.s32.totalorder %v4283, 1
        %vm4412 = vcmp.eq.s32.totalorder %v4284, 1
        %vm4413 = vcmp.eq.s32.totalorder %v4285, 1
        %vm4414 = vcmp.eq.s32.totalorder %v4286, 1
        %vm4415 = vcmp.eq.s32.totalorder %v4287, 1
        %vm4416 = vcmp.eq.s32.totalorder %v4288, 1
        %vm4417 = vcmp.eq.s32.totalorder %v4289, 1
        %vm4418 = vcmp.eq.s32.totalorder %v4290, 1
        %vm4419 = vcmp.eq.s32.totalorder %v4291, 1
        %vm4420 = vcmp.eq.s32.totalorder %v4292, 1
        %vm4421 = vcmp.eq.s32.totalorder %v4293, 1
        %vm4422 = vcmp.eq.s32.totalorder %v4294, 1
        %vm4423 = vcmp.eq.s32.totalorder %v4295, 1
        %vm4424 = vcmp.eq.s32.totalorder %v4296, 1
        %vm4425 = vcmp.eq.s32.totalorder %v4297, 1
        %vm4426 = vcmp.eq.s32.totalorder %v4298, 1
        %vm4427 = vcmp.eq.s32.totalorder %v4299, 1
        %vm4428 = vcmp.eq.s32.totalorder %v4300, 1
        %vm4429 = vcmp.eq.s32.totalorder %v4301, 1
        %v4430 = vsel %vm4302, %v1674, 0.0
        %v4431 = vsel %vm4303, %v1676, 0.0
        %v4432 = vsel %vm4304, %v1679, 0.0
        %v4433 = vsel %vm4305, %v1681, 0.0
        %v4434 = vsel %vm4306, %v1684, 0.0
        %v4435 = vsel %vm4307, %v1686, 0.0
        %v4436 = vsel %vm4308, %v1689, 0.0
        %v4437 = vsel %vm4309, %v1691, 0.0
        %v4438 = vsel %vm4310, %v1694, 0.0
        %v4439 = vsel %vm4311, %v1696, 0.0
        %v4440 = vsel %vm4312, %v1699, 0.0
        %v4441 = vsel %vm4313, %v1701, 0.0
        %v4442 = vsel %vm4314, %v1704, 0.0
        %v4443 = vsel %vm4315, %v1706, 0.0
        %v4444 = vsel %vm4316, %v1709, 0.0
        %v4445 = vsel %vm4317, %v1711, 0.0
        %v4446 = vsel %vm4318, %v1714, 0.0
        %v4447 = vsel %vm4319, %v1716, 0.0
        %v4448 = vsel %vm4320, %v1719, 0.0
        %v4449 = vsel %vm4321, %v1721, 0.0
        %v4450 = vsel %vm4322, %v1724, 0.0
        %v4451 = vsel %vm4323, %v1726, 0.0
        %v4452 = vsel %vm4324, %v1729, 0.0
        %v4453 = vsel %vm4325, %v1731, 0.0
        %v4454 = vsel %vm4326, %v1734, 0.0
        %v4455 = vsel %vm4327, %v1736, 0.0
        %v4456 = vsel %vm4328, %v1739, 0.0
        %v4457 = vsel %vm4329, %v1741, 0.0
        %v4458 = vsel %vm4330, %v1744, 0.0
        %v4459 = vsel %vm4331, %v1746, 0.0
        %v4460 = vsel %vm4332, %v1749, 0.0
        %v4461 = vsel %vm4333, %v1751, 0.0
        %v4462 = vsel %vm4334, %v1754, 0.0
        %v4463 = vsel %vm4335, %v1756, 0.0
        %v4464 = vsel %vm4336, %v1759, 0.0
        %v4465 = vsel %vm4337, %v1761, 0.0
        %v4466 = vsel %vm4338, %v1764, 0.0
        %v4467 = vsel %vm4339, %v1766, 0.0
        %v4468 = vsel %vm4340, %v1769, 0.0
        %v4469 = vsel %vm4341, %v1771, 0.0
        %v4470 = vsel %vm4342, %v1774, 0.0
        %v4471 = vsel %vm4343, %v1776, 0.0
        %v4472 = vsel %vm4344, %v1779, 0.0
        %v4473 = vsel %vm4345, %v1781, 0.0
        %v4474 = vsel %vm4346, %v1784, 0.0
        %v4475 = vsel %vm4347, %v1786, 0.0
        %v4476 = vsel %vm4348, %v1789, 0.0
        %v4477 = vsel %vm4349, %v1791, 0.0
        %v4478 = vsel %vm4350, %v1794, 0.0
        %v4479 = vsel %vm4351, %v1796, 0.0
        %v4480 = vsel %vm4352, %v1799, 0.0
        %v4481 = vsel %vm4353, %v1801, 0.0
        %v4482 = vsel %vm4354, %v1804, 0.0
        %v4483 = vsel %vm4355, %v1806, 0.0
        %v4484 = vsel %vm4356, %v1809, 0.0
        %v4485 = vsel %vm4357, %v1811, 0.0
        %v4486 = vsel %vm4358, %v1814, 0.0
        %v4487 = vsel %vm4359, %v1816, 0.0
        %v4488 = vsel %vm4360, %v1819, 0.0
        %v4489 = vsel %vm4361, %v1821, 0.0
        %v4490 = vsel %vm4362, %v1824, 0.0
        %v4491 = vsel %vm4363, %v1826, 0.0
        %v4492 = vsel %vm4364, %v1829, 0.0
        %v4493 = vsel %vm4365, %v1831, 0.0
        %v4494 = vsel %vm4366, %v1834, 0.0
        %v4495 = vsel %vm4367, %v1836, 0.0
        %v4496 = vsel %vm4368, %v1839, 0.0
        %v4497 = vsel %vm4369, %v1841, 0.0
        %v4498 = vsel %vm4370, %v1844, 0.0
        %v4499 = vsel %vm4371, %v1846, 0.0
        %v4500 = vsel %vm4372, %v1849, 0.0
        %v4501 = vsel %vm4373, %v1851, 0.0
        %v4502 = vsel %vm4374, %v1854, 0.0
        %v4503 = vsel %vm4375, %v1856, 0.0
        %v4504 = vsel %vm4376, %v1859, 0.0
        %v4505 = vsel %vm4377, %v1861, 0.0
        %v4506 = vsel %vm4378, %v1864, 0.0
        %v4507 = vsel %vm4379, %v1866, 0.0
        %v4508 = vsel %vm4380, %v1869, 0.0
        %v4509 = vsel %vm4381, %v1871, 0.0
        %v4510 = vsel %vm4382, %v1874, 0.0
        %v4511 = vsel %vm4383, %v1876, 0.0
        %v4512 = vsel %vm4384, %v1879, 0.0
        %v4513 = vsel %vm4385, %v1881, 0.0
        %v4514 = vsel %vm4386, %v1884, 0.0
        %v4515 = vsel %vm4387, %v1886, 0.0
        %v4516 = vsel %vm4388, %v1889, 0.0
        %v4517 = vsel %vm4389, %v1891, 0.0
        %v4518 = vsel %vm4390, %v1894, 0.0
        %v4519 = vsel %vm4391, %v1896, 0.0
        %v4520 = vsel %vm4392, %v1899, 0.0
        %v4521 = vsel %vm4393, %v1901, 0.0
        %v4522 = vsel %vm4394, %v1904, 0.0
        %v4523 = vsel %vm4395, %v1906, 0.0
        %v4524 = vsel %vm4396, %v1909, 0.0
        %v4525 = vsel %vm4397, %v1911, 0.0
        %v4526 = vsel %vm4398, %v1914, 0.0
        %v4527 = vsel %vm4399, %v1916, 0.0
        %v4528 = vsel %vm4400, %v1919, 0.0
        %v4529 = vsel %vm4401, %v1921, 0.0
        %v4530 = vsel %vm4402, %v1924, 0.0
        %v4531 = vsel %vm4403, %v1926, 0.0
        %v4532 = vsel %vm4404, %v1929, 0.0
        %v4533 = vsel %vm4405, %v1931, 0.0
        %v4534 = vsel %vm4406, %v1934, 0.0
        %v4535 = vsel %vm4407, %v1936, 0.0
        %v4536 = vsel %vm4408, %v1939, 0.0
        %v4537 = vsel %vm4409, %v1941, 0.0
        %v4538 = vsel %vm4410, %v1944, 0.0
        %v4539 = vsel %vm4411, %v1946, 0.0
        %v4540 = vsel %vm4412, %v1949, 0.0
        %v4541 = vsel %vm4413, %v1951, 0.0
        %v4542 = vsel %vm4414, %v1954, 0.0
        %v4543 = vsel %vm4415, %v1956, 0.0
        %v4544 = vsel %vm4416, %v1959, 0.0
        %v4545 = vsel %vm4417, %v1961, 0.0
        %v4546 = vsel %vm4418, %v1964, 0.0
        %v4547 = vsel %vm4419, %v1966, 0.0
        %v4548 = vsel %vm4420, %v1969, 0.0
        %v4549 = vsel %vm4421, %v1971, 0.0
        %v4550 = vsel %vm4422, %v1974, 0.0
        %v4551 = vsel %vm4423, %v1976, 0.0
        %v4552 = vsel %vm4424, %v1979, 0.0
        %v4553 = vsel %vm4425, %v1981, 0.0
        %v4554 = vsel %vm4426, %v1984, 0.0
        %v4555 = vsel %vm4427, %v1986, 0.0
        %v4556 = vsel %vm4428, %v1989, 0.0
        %v4557 = vsel %vm4429, %v1991, 0.0
        %v4558 = vadd.f32 %v4430, %v4431
        %v4559 = vadd.f32 %v4558, %v4432
        %v4560 = vadd.f32 %v4559, %v4433
        %v4561 = vadd.f32 %v4560, %v4434
        %v4562 = vadd.f32 %v4561, %v4435
        %v4563 = vadd.f32 %v4562, %v4436
        %v4564 = vadd.f32 %v4563, %v4437
        %v4565 = vadd.f32 %v4564, %v4438
        %v4566 = vadd.f32 %v4565, %v4439
        %v4567 = vadd.f32 %v4566, %v4440
        %v4568 = vadd.f32 %v4567, %v4441
        %v4569 = vadd.f32 %v4568, %v4442
        %v4570 = vadd.f32 %v4569, %v4443
        %v4571 = vadd.f32 %v4570, %v4444
        %v4572 = vadd.f32 %v4571, %v4445
        %v4573 = vadd.f32 %v4572, %v4446
        %v4574 = vadd.f32 %v4573, %v4447
        %v4575 = vadd.f32 %v4574, %v4448
        %v4576 = vadd.f32 %v4575, %v4449
        %v4577 = vadd.f32 %v4576, %v4450
        %v4578 = vadd.f32 %v4577, %v4451
        %v4579 = vadd.f32 %v4578, %v4452
        %v4580 = vadd.f32 %v4579, %v4453
        %v4581 = vadd.f32 %v4580, %v4454
        %v4582 = vadd.f32 %v4581, %v4455
        %v4583 = vadd.f32 %v4582, %v4456
        %v4584 = vadd.f32 %v4583, %v4457
        %v4585 = vadd.f32 %v4584, %v4458
        %v4586 = vadd.f32 %v4585, %v4459
        %v4587 = vadd.f32 %v4586, %v4460
        %v4588 = vadd.f32 %v4587, %v4461
        %v4589 = vadd.f32 %v4588, %v4462
        %v4590 = vadd.f32 %v4589, %v4463
        %v4591 = vadd.f32 %v4590, %v4464
        %v4592 = vadd.f32 %v4591, %v4465
        %v4593 = vadd.f32 %v4592, %v4466
        %v4594 = vadd.f32 %v4593, %v4467
        %v4595 = vadd.f32 %v4594, %v4468
        %v4596 = vadd.f32 %v4595, %v4469
        %v4597 = vadd.f32 %v4596, %v4470
        %v4598 = vadd.f32 %v4597, %v4471
        %v4599 = vadd.f32 %v4598, %v4472
        %v4600 = vadd.f32 %v4599, %v4473
        %v4601 = vadd.f32 %v4600, %v4474
        %v4602 = vadd.f32 %v4601, %v4475
        %v4603 = vadd.f32 %v4602, %v4476
        %v4604 = vadd.f32 %v4603, %v4477
        %v4605 = vadd.f32 %v4604, %v4478
        %v4606 = vadd.f32 %v4605, %v4479
        %v4607 = vadd.f32 %v4606, %v4480
        %v4608 = vadd.f32 %v4607, %v4481
        %v4609 = vadd.f32 %v4608, %v4482
        %v4610 = vadd.f32 %v4609, %v4483
        %v4611 = vadd.f32 %v4610, %v4484
        %v4612 = vadd.f32 %v4611, %v4485
        %v4613 = vadd.f32 %v4612, %v4486
        %v4614 = vadd.f32 %v4613, %v4487
        %v4615 = vadd.f32 %v4614, %v4488
        %v4616 = vadd.f32 %v4615, %v4489
        %v4617 = vadd.f32 %v4616, %v4490
        %v4618 = vadd.f32 %v4617, %v4491
        %v4619 = vadd.f32 %v4618, %v4492
        %v4620 = vadd.f32 %v4619, %v4493
        %v4621 = vadd.f32 %v4620, %v4494
        %v4622 = vadd.f32 %v4621, %v4495
        %v4623 = vadd.f32 %v4622, %v4496
        %v4624 = vadd.f32 %v4623, %v4497
        %v4625 = vadd.f32 %v4624, %v4498
        %v4626 = vadd.f32 %v4625, %v4499
        %v4627 = vadd.f32 %v4626, %v4500
        %v4628 = vadd.f32 %v4627, %v4501
        %v4629 = vadd.f32 %v4628, %v4502
        %v4630 = vadd.f32 %v4629, %v4503
        %v4631 = vadd.f32 %v4630, %v4504
        %v4632 = vadd.f32 %v4631, %v4505
        %v4633 = vadd.f32 %v4632, %v4506
        %v4634 = vadd.f32 %v4633, %v4507
        %v4635 = vadd.f32 %v4634, %v4508
        %v4636 = vadd.f32 %v4635, %v4509
        %v4637 = vadd.f32 %v4636, %v4510
        %v4638 = vadd.f32 %v4637, %v4511
        %v4639 = vadd.f32 %v4638, %v4512
        %v4640 = vadd.f32 %v4639, %v4513
        %v4641 = vadd.f32 %v4640, %v4514
        %v4642 = vadd.f32 %v4641, %v4515
        %v4643 = vadd.f32 %v4642, %v4516
        %v4644 = vadd.f32 %v4643, %v4517
        %v4645 = vadd.f32 %v4644, %v4518
        %v4646 = vadd.f32 %v4645, %v4519
        %v4647 = vadd.f32 %v4646, %v4520
        %v4648 = vadd.f32 %v4647, %v4521
        %v4649 = vadd.f32 %v4648, %v4522
        %v4650 = vadd.f32 %v4649, %v4523
        %v4651 = vadd.f32 %v4650, %v4524
        %v4652 = vadd.f32 %v4651, %v4525
        %v4653 = vadd.f32 %v4652, %v4526
        %v4654 = vadd.f32 %v4653, %v4527
        %v4655 = vadd.f32 %v4654, %v4528
        %v4656 = vadd.f32 %v4655, %v4529
        %v4657 = vadd.f32 %v4656, %v4530
        %v4658 = vadd.f32 %v4657, %v4531
        %v4659 = vadd.f32 %v4658, %v4532
        %v4660 = vadd.f32 %v4659, %v4533
        %v4661 = vadd.f32 %v4660, %v4534
        %v4662 = vadd.f32 %v4661, %v4535
        %v4663 = vadd.f32 %v4662, %v4536
        %v4664 = vadd.f32 %v4663, %v4537
        %v4665 = vadd.f32 %v4664, %v4538
        %v4666 = vadd.f32 %v4665, %v4539
        %v4667 = vadd.f32 %v4666, %v4540
        %v4668 = vadd.f32 %v4667, %v4541
        %v4669 = vadd.f32 %v4668, %v4542
        %v4670 = vadd.f32 %v4669, %v4543
        %v4671 = vadd.f32 %v4670, %v4544
        %v4672 = vadd.f32 %v4671, %v4545
        %v4673 = vadd.f32 %v4672, %v4546
        %v4674 = vadd.f32 %v4673, %v4547
        %v4675 = vadd.f32 %v4674, %v4548
        %v4676 = vadd.f32 %v4675, %v4549
        %v4677 = vadd.f32 %v4676, %v4550
        %v4678 = vadd.f32 %v4677, %v4551
        %v4679 = vadd.f32 %v4678, %v4552
        %v4680 = vadd.f32 %v4679, %v4553
        %v4681 = vadd.f32 %v4680, %v4554
        %v4682 = vadd.f32 %v4681, %v4555
        %v4683 = vadd.f32 %v4682, %v4556
        %v4684 = vadd.f32 %v4683, %v4557
        %v4685 = vrot.slane %v4684, 4
        %v4686 = vadd.f32 %v4684, %v4685
        %v4687 = vrot.slane %v4686, 2
        %v4688 = vadd.f32 %v4686, %v4687
        %v4689 = vrot.slane %v4688, 1
        %v4690 = vadd.f32 %v4688, %v4689
        %v4691 = vadd.f32 %v4045, %v4690
        %4692 = vst [vmem:[#allocation2] sm:$0x1] %v4691
        %v4693 = vld [vmem:[#allocation3] sm:$0x1]
        %vm4694 = vmxor %vm3917, 1
        %vm4695 = vmxor %vm3918, 1
        %vm4696 = vmxor %vm3919, 1
        %vm4697 = vmxor %vm3920, 1
        %vm4698 = vmxor %vm3921, 1
        %vm4699 = vmxor %vm3922, 1
        %vm4700 = vmxor %vm3923, 1
        %vm4701 = vmxor %vm3924, 1
        %vm4702 = vmxor %vm3925, 1
        %vm4703 = vmxor %vm3926, 1
        %vm4704 = vmxor %vm3927, 1
        %vm4705 = vmxor %vm3928, 1
        %vm4706 = vmxor %vm3929, 1
        %vm4707 = vmxor %vm3930, 1
        %vm4708 = vmxor %vm3931, 1
        %vm4709 = vmxor %vm3932, 1
        %vm4710 = vmxor %vm3933, 1
        %vm4711 = vmxor %vm3934, 1
        %vm4712 = vmxor %vm3935, 1
        %vm4713 = vmxor %vm3936, 1
        %vm4714 = vmxor %vm3937, 1
        %vm4715 = vmxor %vm3938, 1
        %vm4716 = vmxor %vm3939, 1
        %vm4717 = vmxor %vm3940, 1
        %vm4718 = vmxor %vm3941, 1
        %vm4719 = vmxor %vm3942, 1
        %vm4720 = vmxor %vm3943, 1
        %vm4721 = vmxor %vm3944, 1
        %vm4722 = vmxor %vm3945, 1
        %vm4723 = vmxor %vm3946, 1
        %vm4724 = vmxor %vm3947, 1
        %vm4725 = vmxor %vm3948, 1
        %vm4726 = vmxor %vm3949, 1
        %vm4727 = vmxor %vm3950, 1
        %vm4728 = vmxor %vm3951, 1
        %vm4729 = vmxor %vm3952, 1
        %vm4730 = vmxor %vm3953, 1
        %vm4731 = vmxor %vm3954, 1
        %vm4732 = vmxor %vm3955, 1
        %vm4733 = vmxor %vm3956, 1
        %vm4734 = vmxor %vm3957, 1
        %vm4735 = vmxor %vm3958, 1
        %vm4736 = vmxor %vm3959, 1
        %vm4737 = vmxor %vm3960, 1
        %vm4738 = vmxor %vm3961, 1
        %vm4739 = vmxor %vm3962, 1
        %vm4740 = vmxor %vm3963, 1
        %vm4741 = vmxor %vm3964, 1
        %vm4742 = vmxor %vm3965, 1
        %vm4743 = vmxor %vm3966, 1
        %vm4744 = vmxor %vm3967, 1
        %vm4745 = vmxor %vm3968, 1
        %vm4746 = vmxor %vm3969, 1
        %vm4747 = vmxor %vm3970, 1
        %vm4748 = vmxor %vm3971, 1
        %vm4749 = vmxor %vm3972, 1
        %vm4750 = vmxor %vm3973, 1
        %vm4751 = vmxor %vm3974, 1
        %vm4752 = vmxor %vm3975, 1
        %vm4753 = vmxor %vm3976, 1
        %vm4754 = vmxor %vm3977, 1
        %vm4755 = vmxor %vm3978, 1
        %vm4756 = vmxor %vm3979, 1
        %vm4757 = vmxor %vm3980, 1
        %vm4758 = vmxor %vm3981, 1
        %vm4759 = vmxor %vm3982, 1
        %vm4760 = vmxor %vm3983, 1
        %vm4761 = vmxor %vm3984, 1
        %vm4762 = vmxor %vm3985, 1
        %vm4763 = vmxor %vm3986, 1
        %vm4764 = vmxor %vm3987, 1
        %vm4765 = vmxor %vm3988, 1
        %vm4766 = vmxor %vm3989, 1
        %vm4767 = vmxor %vm3990, 1
        %vm4768 = vmxor %vm3991, 1
        %vm4769 = vmxor %vm3992, 1
        %vm4770 = vmxor %vm3993, 1
        %vm4771 = vmxor %vm3994, 1
        %vm4772 = vmxor %vm3995, 1
        %vm4773 = vmxor %vm3996, 1
        %vm4774 = vmxor %vm3997, 1
        %vm4775 = vmxor %vm3998, 1
        %vm4776 = vmxor %vm3999, 1
        %vm4777 = vmxor %vm4000, 1
        %vm4778 = vmxor %vm4001, 1
        %vm4779 = vmxor %vm4002, 1
        %vm4780 = vmxor %vm4003, 1
        %vm4781 = vmxor %vm4004, 1
        %vm4782 = vmxor %vm4005, 1
        %vm4783 = vmxor %vm4006, 1
        %vm4784 = vmxor %vm4007, 1
        %vm4785 = vmxor %vm4008, 1
        %vm4786 = vmxor %vm4009, 1
        %vm4787 = vmxor %vm4010, 1
        %vm4788 = vmxor %vm4011, 1
        %vm4789 = vmxor %vm4012, 1
        %vm4790 = vmxor %vm4013, 1
        %vm4791 = vmxor %vm4014, 1
        %vm4792 = vmxor %vm4015, 1
        %vm4793 = vmxor %vm4016, 1
        %vm4794 = vmxor %vm4017, 1
        %vm4795 = vmxor %vm4018, 1
        %vm4796 = vmxor %vm4019, 1
        %vm4797 = vmxor %vm4020, 1
        %vm4798 = vmxor %vm4021, 1
        %vm4799 = vmxor %vm4022, 1
        %vm4800 = vmxor %vm4023, 1
        %vm4801 = vmxor %vm4024, 1
        %vm4802 = vmxor %vm4025, 1
        %vm4803 = vmxor %vm4026, 1
        %vm4804 = vmxor %vm4027, 1
        %vm4805 = vmxor %vm4028, 1
        %vm4806 = vmxor %vm4029, 1
        %vm4807 = vmxor %vm4030, 1
        %vm4808 = vmxor %vm4031, 1
        %vm4809 = vmxor %vm4032, 1
        %vm4810 = vmxor %vm4033, 1
        %vm4811 = vmxor %vm4034, 1
        %vm4812 = vmxor %vm4035, 1
        %vm4813 = vmxor %vm4036, 1
        %vm4814 = vmxor %vm4037, 1
        %vm4815 = vmxor %vm4038, 1
        %vm4816 = vmxor %vm4039, 1
        %vm4817 = vmxor %vm4040, 1
        %vm4818 = vmxor %vm4041, 1
        %vm4819 = vmxor %vm4042, 1
        %vm4820 = vmxor %vm4043, 1
        %vm4821 = vmxor %vm4044, 1
        %vm4822 = vmand %vm2253, %vm4694
        %vm4823 = vmand %vm2254, %vm4695
        %vm4824 = vmand %vm2255, %vm4696
        %vm4825 = vmand %vm2256, %vm4697
        %vm4826 = vmand %vm2257, %vm4698
        %vm4827 = vmand %vm2258, %vm4699
        %vm4828 = vmand %vm2259, %vm4700
        %vm4829 = vmand %vm2260, %vm4701
        %vm4830 = vmand %vm2261, %vm4702
        %vm4831 = vmand %vm2262, %vm4703
        %vm4832 = vmand %vm2263, %vm4704
        %vm4833 = vmand %vm2264, %vm4705
        %vm4834 = vmand %vm2265, %vm4706
        %vm4835 = vmand %vm2266, %vm4707
        %vm4836 = vmand %vm2267, %vm4708
        %vm4837 = vmand %vm2268, %vm4709
        %vm4838 = vmand %vm2269, %vm4710
        %vm4839 = vmand %vm2270, %vm4711
        %vm4840 = vmand %vm2271, %vm4712
        %vm4841 = vmand %vm2272, %vm4713
        %vm4842 = vmand %vm2273, %vm4714
        %vm4843 = vmand %vm2274, %vm4715
        %vm4844 = vmand %vm2275, %vm4716
        %vm4845 = vmand %vm2276, %vm4717
        %vm4846 = vmand %vm2277, %vm4718
        %vm4847 = vmand %vm2278, %vm4719
        %vm4848 = vmand %vm2279, %vm4720
        %vm4849 = vmand %vm2280, %vm4721
        %vm4850 = vmand %vm2281, %vm4722
        %vm4851 = vmand %vm2282, %vm4723
        %vm4852 = vmand %vm2283, %vm4724
        %vm4853 = vmand %vm2284, %vm4725
        %vm4854 = vmand %vm2285, %vm4726
        %vm4855 = vmand %vm2286, %vm4727
        %vm4856 = vmand %vm2287, %vm4728
        %vm4857 = vmand %vm2288, %vm4729
        %vm4858 = vmand %vm2289, %vm4730
        %vm4859 = vmand %vm2290, %vm4731
        %vm4860 = vmand %vm2291, %vm4732
        %vm4861 = vmand %vm2292, %vm4733
        %vm4862 = vmand %vm2293, %vm4734
        %vm4863 = vmand %vm2294, %vm4735
        %vm4864 = vmand %vm2295, %vm4736
        %vm4865 = vmand %vm2296, %vm4737
        %vm4866 = vmand %vm2297, %vm4738
        %vm4867 = vmand %vm2298, %vm4739
        %vm4868 = vmand %vm2299, %vm4740
        %vm4869 = vmand %vm2300, %vm4741
        %vm4870 = vmand %vm2301, %vm4742
        %vm4871 = vmand %vm2302, %vm4743
        %vm4872 = vmand %vm2303, %vm4744
        %vm4873 = vmand %vm2304, %vm4745
        %vm4874 = vmand %vm2305, %vm4746
        %vm4875 = vmand %vm2306, %vm4747
        %vm4876 = vmand %vm2307, %vm4748
        %vm4877 = vmand %vm2308, %vm4749
        %vm4878 = vmand %vm2309, %vm4750
        %vm4879 = vmand %vm2310, %vm4751
        %vm4880 = vmand %vm2311, %vm4752
        %vm4881 = vmand %vm2312, %vm4753
        %vm4882 = vmand %vm2313, %vm4754
        %vm4883 = vmand %vm2314, %vm4755
        %vm4884 = vmand %vm2315, %vm4756
        %vm4885 = vmand %vm2316, %vm4757
        %vm4886 = vmand %vm2317, %vm4758
        %vm4887 = vmand %vm2318, %vm4759
        %vm4888 = vmand %vm2319, %vm4760
        %vm4889 = vmand %vm2320, %vm4761
        %vm4890 = vmand %vm2321, %vm4762
        %vm4891 = vmand %vm2322, %vm4763
        %vm4892 = vmand %vm2323, %vm4764
        %vm4893 = vmand %vm2324, %vm4765
        %vm4894 = vmand %vm2325, %vm4766
        %vm4895 = vmand %vm2326, %vm4767
        %vm4896 = vmand %vm2327, %vm4768
        %vm4897 = vmand %vm2328, %vm4769
        %vm4898 = vmand %vm2329, %vm4770
        %vm4899 = vmand %vm2330, %vm4771
        %vm4900 = vmand %vm2331, %vm4772
        %vm4901 = vmand %vm2332, %vm4773
        %vm4902 = vmand %vm2333, %vm4774
        %vm4903 = vmand %vm2334, %vm4775
        %vm4904 = vmand %vm2335, %vm4776
        %vm4905 = vmand %vm2336, %vm4777
        %vm4906 = vmand %vm2337, %vm4778
        %vm4907 = vmand %vm2338, %vm4779
        %vm4908 = vmand %vm2339, %vm4780
        %vm4909 = vmand %vm2340, %vm4781
        %vm4910 = vmand %vm2341, %vm4782
        %vm4911 = vmand %vm2342, %vm4783
        %vm4912 = vmand %vm2343, %vm4784
        %vm4913 = vmand %vm2344, %vm4785
        %vm4914 = vmand %vm2345, %vm4786
        %vm4915 = vmand %vm2346, %vm4787
        %vm4916 = vmand %vm2347, %vm4788
        %vm4917 = vmand %vm2348, %vm4789
        %vm4918 = vmand %vm2349, %vm4790
        %vm4919 = vmand %vm2350, %vm4791
        %vm4920 = vmand %vm2351, %vm4792
        %vm4921 = vmand %vm2352, %vm4793
        %vm4922 = vmand %vm2353, %vm4794
        %vm4923 = vmand %vm2354, %vm4795
        %vm4924 = vmand %vm2355, %vm4796
        %vm4925 = vmand %vm2356, %vm4797
        %vm4926 = vmand %vm2357, %vm4798
        %vm4927 = vmand %vm2358, %vm4799
        %vm4928 = vmand %vm2359, %vm4800
        %vm4929 = vmand %vm2360, %vm4801
        %vm4930 = vmand %vm2361, %vm4802
        %vm4931 = vmand %vm2362, %vm4803
        %vm4932 = vmand %vm2363, %vm4804
        %vm4933 = vmand %vm2364, %vm4805
        %vm4934 = vmand %vm2365, %vm4806
        %vm4935 = vmand %vm2366, %vm4807
        %vm4936 = vmand %vm2367, %vm4808
        %vm4937 = vmand %vm2368, %vm4809
        %vm4938 = vmand %vm2369, %vm4810
        %vm4939 = vmand %vm2370, %vm4811
        %vm4940 = vmand %vm2371, %vm4812
        %vm4941 = vmand %vm2372, %vm4813
        %vm4942 = vmand %vm2373, %vm4814
        %vm4943 = vmand %vm2374, %vm4815
        %vm4944 = vmand %vm2375, %vm4816
        %vm4945 = vmand %vm2376, %vm4817
        %vm4946 = vmand %vm2377, %vm4818
        %vm4947 = vmand %vm2378, %vm4819
        %vm4948 = vmand %vm2379, %vm4820
        %vm4949 = vmand %vm2380, %vm4821
        %v4950 = vsel %vm4822, 1, 0
        %v4951 = vsel %vm4823, 1, 0
        %v4952 = vsel %vm4824, 1, 0
        %v4953 = vsel %vm4825, 1, 0
        %v4954 = vsel %vm4826, 1, 0
        %v4955 = vsel %vm4827, 1, 0
        %v4956 = vsel %vm4828, 1, 0
        %v4957 = vsel %vm4829, 1, 0
        %v4958 = vsel %vm4830, 1, 0
        %v4959 = vsel %vm4831, 1, 0
        %v4960 = vsel %vm4832, 1, 0
        %v4961 = vsel %vm4833, 1, 0
        %v4962 = vsel %vm4834, 1, 0
        %v4963 = vsel %vm4835, 1, 0
        %v4964 = vsel %vm4836, 1, 0
        %v4965 = vsel %vm4837, 1, 0
        %v4966 = vsel %vm4838, 1, 0
        %v4967 = vsel %vm4839, 1, 0
        %v4968 = vsel %vm4840, 1, 0
        %v4969 = vsel %vm4841, 1, 0
        %v4970 = vsel %vm4842, 1, 0
        %v4971 = vsel %vm4843, 1, 0
        %v4972 = vsel %vm4844, 1, 0
        %v4973 = vsel %vm4845, 1, 0
        %v4974 = vsel %vm4846, 1, 0
        %v4975 = vsel %vm4847, 1, 0
        %v4976 = vsel %vm4848, 1, 0
        %v4977 = vsel %vm4849, 1, 0
        %v4978 = vsel %vm4850, 1, 0
        %v4979 = vsel %vm4851, 1, 0
        %v4980 = vsel %vm4852, 1, 0
        %v4981 = vsel %vm4853, 1, 0
        %v4982 = vsel %vm4854, 1, 0
        %v4983 = vsel %vm4855, 1, 0
        %v4984 = vsel %vm4856, 1, 0
        %v4985 = vsel %vm4857, 1, 0
        %v4986 = vsel %vm4858, 1, 0
        %v4987 = vsel %vm4859, 1, 0
        %v4988 = vsel %vm4860, 1, 0
        %v4989 = vsel %vm4861, 1, 0
        %v4990 = vsel %vm4862, 1, 0
        %v4991 = vsel %vm4863, 1, 0
        %v4992 = vsel %vm4864, 1, 0
        %v4993 = vsel %vm4865, 1, 0
        %v4994 = vsel %vm4866, 1, 0
        %v4995 = vsel %vm4867, 1, 0
        %v4996 = vsel %vm4868, 1, 0
        %v4997 = vsel %vm4869, 1, 0
        %v4998 = vsel %vm4870, 1, 0
        %v4999 = vsel %vm4871, 1, 0
        %v5000 = vsel %vm4872, 1, 0
        %v5001 = vsel %vm4873, 1, 0
        %v5002 = vsel %vm4874, 1, 0
        %v5003 = vsel %vm4875, 1, 0
        %v5004 = vsel %vm4876, 1, 0
        %v5005 = vsel %vm4877, 1, 0
        %v5006 = vsel %vm4878, 1, 0
        %v5007 = vsel %vm4879, 1, 0
        %v5008 = vsel %vm4880, 1, 0
        %v5009 = vsel %vm4881, 1, 0
        %v5010 = vsel %vm4882, 1, 0
        %v5011 = vsel %vm4883, 1, 0
        %v5012 = vsel %vm4884, 1, 0
        %v5013 = vsel %vm4885, 1, 0
        %v5014 = vsel %vm4886, 1, 0
        %v5015 = vsel %vm4887, 1, 0
        %v5016 = vsel %vm4888, 1, 0
        %v5017 = vsel %vm4889, 1, 0
        %v5018 = vsel %vm4890, 1, 0
        %v5019 = vsel %vm4891, 1, 0
        %v5020 = vsel %vm4892, 1, 0
        %v5021 = vsel %vm4893, 1, 0
        %v5022 = vsel %vm4894, 1, 0
        %v5023 = vsel %vm4895, 1, 0
        %v5024 = vsel %vm4896, 1, 0
        %v5025 = vsel %vm4897, 1, 0
        %v5026 = vsel %vm4898, 1, 0
        %v5027 = vsel %vm4899, 1, 0
        %v5028 = vsel %vm4900, 1, 0
        %v5029 = vsel %vm4901, 1, 0
        %v5030 = vsel %vm4902, 1, 0
        %v5031 = vsel %vm4903, 1, 0
        %v5032 = vsel %vm4904, 1, 0
        %v5033 = vsel %vm4905, 1, 0
        %v5034 = vsel %vm4906, 1, 0
        %v5035 = vsel %vm4907, 1, 0
        %v5036 = vsel %vm4908, 1, 0
        %v5037 = vsel %vm4909, 1, 0
        %v5038 = vsel %vm4910, 1, 0
        %v5039 = vsel %vm4911, 1, 0
        %v5040 = vsel %vm4912, 1, 0
        %v5041 = vsel %vm4913, 1, 0
        %v5042 = vsel %vm4914, 1, 0
        %v5043 = vsel %vm4915, 1, 0
        %v5044 = vsel %vm4916, 1, 0
        %v5045 = vsel %vm4917, 1, 0
        %v5046 = vsel %vm4918, 1, 0
        %v5047 = vsel %vm4919, 1, 0
        %v5048 = vsel %vm4920, 1, 0
        %v5049 = vsel %vm4921, 1, 0
        %v5050 = vsel %vm4922, 1, 0
        %v5051 = vsel %vm4923, 1, 0
        %v5052 = vsel %vm4924, 1, 0
        %v5053 = vsel %vm4925, 1, 0
        %v5054 = vsel %vm4926, 1, 0
        %v5055 = vsel %vm4927, 1, 0
        %v5056 = vsel %vm4928, 1, 0
        %v5057 = vsel %vm4929, 1, 0
        %v5058 = vsel %vm4930, 1, 0
        %v5059 = vsel %vm4931, 1, 0
        %v5060 = vsel %vm4932, 1, 0
        %v5061 = vsel %vm4933, 1, 0
        %v5062 = vsel %vm4934, 1, 0
        %v5063 = vsel %vm4935, 1, 0
        %v5064 = vsel %vm4936, 1, 0
        %v5065 = vsel %vm4937, 1, 0
        %v5066 = vsel %vm4938, 1, 0
        %v5067 = vsel %vm4939, 1, 0
        %v5068 = vsel %vm4940, 1, 0
        %v5069 = vsel %vm4941, 1, 0
        %v5070 = vsel %vm4942, 1, 0
        %v5071 = vsel %vm4943, 1, 0
        %v5072 = vsel %vm4944, 1, 0
        %v5073 = vsel %vm4945, 1, 0
        %v5074 = vsel %vm4946, 1, 0
        %v5075 = vsel %vm4947, 1, 0
        %v5076 = vsel %vm4948, 1, 0
        %v5077 = vsel %vm4949, 1, 0
        %vm5078 = vcmp.eq.s32.totalorder %v4950, 1
        %vm5079 = vcmp.eq.s32.totalorder %v4951, 1
        %vm5080 = vcmp.eq.s32.totalorder %v4952, 1
        %vm5081 = vcmp.eq.s32.totalorder %v4953, 1
        %vm5082 = vcmp.eq.s32.totalorder %v4954, 1
        %vm5083 = vcmp.eq.s32.totalorder %v4955, 1
        %vm5084 = vcmp.eq.s32.totalorder %v4956, 1
        %vm5085 = vcmp.eq.s32.totalorder %v4957, 1
        %vm5086 = vcmp.eq.s32.totalorder %v4958, 1
        %vm5087 = vcmp.eq.s32.totalorder %v4959, 1
        %vm5088 = vcmp.eq.s32.totalorder %v4960, 1
        %vm5089 = vcmp.eq.s32.totalorder %v4961, 1
        %vm5090 = vcmp.eq.s32.totalorder %v4962, 1
        %vm5091 = vcmp.eq.s32.totalorder %v4963, 1
        %vm5092 = vcmp.eq.s32.totalorder %v4964, 1
        %vm5093 = vcmp.eq.s32.totalorder %v4965, 1
        %vm5094 = vcmp.eq.s32.totalorder %v4966, 1
        %vm5095 = vcmp.eq.s32.totalorder %v4967, 1
        %vm5096 = vcmp.eq.s32.totalorder %v4968, 1
        %vm5097 = vcmp.eq.s32.totalorder %v4969, 1
        %vm5098 = vcmp.eq.s32.totalorder %v4970, 1
        %vm5099 = vcmp.eq.s32.totalorder %v4971, 1
        %vm5100 = vcmp.eq.s32.totalorder %v4972, 1
        %vm5101 = vcmp.eq.s32.totalorder %v4973, 1
        %vm5102 = vcmp.eq.s32.totalorder %v4974, 1
        %vm5103 = vcmp.eq.s32.totalorder %v4975, 1
        %vm5104 = vcmp.eq.s32.totalorder %v4976, 1
        %vm5105 = vcmp.eq.s32.totalorder %v4977, 1
        %vm5106 = vcmp.eq.s32.totalorder %v4978, 1
        %vm5107 = vcmp.eq.s32.totalorder %v4979, 1
        %vm5108 = vcmp.eq.s32.totalorder %v4980, 1
        %vm5109 = vcmp.eq.s32.totalorder %v4981, 1
        %vm5110 = vcmp.eq.s32.totalorder %v4982, 1
        %vm5111 = vcmp.eq.s32.totalorder %v4983, 1
        %vm5112 = vcmp.eq.s32.totalorder %v4984, 1
        %vm5113 = vcmp.eq.s32.totalorder %v4985, 1
        %vm5114 = vcmp.eq.s32.totalorder %v4986, 1
        %vm5115 = vcmp.eq.s32.totalorder %v4987, 1
        %vm5116 = vcmp.eq.s32.totalorder %v4988, 1
        %vm5117 = vcmp.eq.s32.totalorder %v4989, 1
        %vm5118 = vcmp.eq.s32.totalorder %v4990, 1
        %vm5119 = vcmp.eq.s32.totalorder %v4991, 1
        %vm5120 = vcmp.eq.s32.totalorder %v4992, 1
        %vm5121 = vcmp.eq.s32.totalorder %v4993, 1
        %vm5122 = vcmp.eq.s32.totalorder %v4994, 1
        %vm5123 = vcmp.eq.s32.totalorder %v4995, 1
        %vm5124 = vcmp.eq.s32.totalorder %v4996, 1
        %vm5125 = vcmp.eq.s32.totalorder %v4997, 1
        %vm5126 = vcmp.eq.s32.totalorder %v4998, 1
        %vm5127 = vcmp.eq.s32.totalorder %v4999, 1
        %vm5128 = vcmp.eq.s32.totalorder %v5000, 1
        %vm5129 = vcmp.eq.s32.totalorder %v5001, 1
        %vm5130 = vcmp.eq.s32.totalorder %v5002, 1
        %vm5131 = vcmp.eq.s32.totalorder %v5003, 1
        %vm5132 = vcmp.eq.s32.totalorder %v5004, 1
        %vm5133 = vcmp.eq.s32.totalorder %v5005, 1
        %vm5134 = vcmp.eq.s32.totalorder %v5006, 1
        %vm5135 = vcmp.eq.s32.totalorder %v5007, 1
        %vm5136 = vcmp.eq.s32.totalorder %v5008, 1
        %vm5137 = vcmp.eq.s32.totalorder %v5009, 1
        %vm5138 = vcmp.eq.s32.totalorder %v5010, 1
        %vm5139 = vcmp.eq.s32.totalorder %v5011, 1
        %vm5140 = vcmp.eq.s32.totalorder %v5012, 1
        %vm5141 = vcmp.eq.s32.totalorder %v5013, 1
        %vm5142 = vcmp.eq.s32.totalorder %v5014, 1
        %vm5143 = vcmp.eq.s32.totalorder %v5015, 1
        %vm5144 = vcmp.eq.s32.totalorder %v5016, 1
        %vm5145 = vcmp.eq.s32.totalorder %v5017, 1
        %vm5146 = vcmp.eq.s32.totalorder %v5018, 1
        %vm5147 = vcmp.eq.s32.totalorder %v5019, 1
        %vm5148 = vcmp.eq.s32.totalorder %v5020, 1
        %vm5149 = vcmp.eq.s32.totalorder %v5021, 1
        %vm5150 = vcmp.eq.s32.totalorder %v5022, 1
        %vm5151 = vcmp.eq.s32.totalorder %v5023, 1
        %vm5152 = vcmp.eq.s32.totalorder %v5024, 1
        %vm5153 = vcmp.eq.s32.totalorder %v5025, 1
        %vm5154 = vcmp.eq.s32.totalorder %v5026, 1
        %vm5155 = vcmp.eq.s32.totalorder %v5027, 1
        %vm5156 = vcmp.eq.s32.totalorder %v5028, 1
        %vm5157 = vcmp.eq.s32.totalorder %v5029, 1
        %vm5158 = vcmp.eq.s32.totalorder %v5030, 1
        %vm5159 = vcmp.eq.s32.totalorder %v5031, 1
        %vm5160 = vcmp.eq.s32.totalorder %v5032, 1
        %vm5161 = vcmp.eq.s32.totalorder %v5033, 1
        %vm5162 = vcmp.eq.s32.totalorder %v5034, 1
        %vm5163 = vcmp.eq.s32.totalorder %v5035, 1
        %vm5164 = vcmp.eq.s32.totalorder %v5036, 1
        %vm5165 = vcmp.eq.s32.totalorder %v5037, 1
        %vm5166 = vcmp.eq.s32.totalorder %v5038, 1
        %vm5167 = vcmp.eq.s32.totalorder %v5039, 1
        %vm5168 = vcmp.eq.s32.totalorder %v5040, 1
        %vm5169 = vcmp.eq.s32.totalorder %v5041, 1
        %vm5170 = vcmp.eq.s32.totalorder %v5042, 1
        %vm5171 = vcmp.eq.s32.totalorder %v5043, 1
        %vm5172 = vcmp.eq.s32.totalorder %v5044, 1
        %vm5173 = vcmp.eq.s32.totalorder %v5045, 1
        %vm5174 = vcmp.eq.s32.totalorder %v5046, 1
        %vm5175 = vcmp.eq.s32.totalorder %v5047, 1
        %vm5176 = vcmp.eq.s32.totalorder %v5048, 1
        %vm5177 = vcmp.eq.s32.totalorder %v5049, 1
        %vm5178 = vcmp.eq.s32.totalorder %v5050, 1
        %vm5179 = vcmp.eq.s32.totalorder %v5051, 1
        %vm5180 = vcmp.eq.s32.totalorder %v5052, 1
        %vm5181 = vcmp.eq.s32.totalorder %v5053, 1
        %vm5182 = vcmp.eq.s32.totalorder %v5054, 1
        %vm5183 = vcmp.eq.s32.totalorder %v5055, 1
        %vm5184 = vcmp.eq.s32.totalorder %v5056, 1
        %vm5185 = vcmp.eq.s32.totalorder %v5057, 1
        %vm5186 = vcmp.eq.s32.totalorder %v5058, 1
        %vm5187 = vcmp.eq.s32.totalorder %v5059, 1
        %vm5188 = vcmp.eq.s32.totalorder %v5060, 1
        %vm5189 = vcmp.eq.s32.totalorder %v5061, 1
        %vm5190 = vcmp.eq.s32.totalorder %v5062, 1
        %vm5191 = vcmp.eq.s32.totalorder %v5063, 1
        %vm5192 = vcmp.eq.s32.totalorder %v5064, 1
        %vm5193 = vcmp.eq.s32.totalorder %v5065, 1
        %vm5194 = vcmp.eq.s32.totalorder %v5066, 1
        %vm5195 = vcmp.eq.s32.totalorder %v5067, 1
        %vm5196 = vcmp.eq.s32.totalorder %v5068, 1
        %vm5197 = vcmp.eq.s32.totalorder %v5069, 1
        %vm5198 = vcmp.eq.s32.totalorder %v5070, 1
        %vm5199 = vcmp.eq.s32.totalorder %v5071, 1
        %vm5200 = vcmp.eq.s32.totalorder %v5072, 1
        %vm5201 = vcmp.eq.s32.totalorder %v5073, 1
        %vm5202 = vcmp.eq.s32.totalorder %v5074, 1
        %vm5203 = vcmp.eq.s32.totalorder %v5075, 1
        %vm5204 = vcmp.eq.s32.totalorder %v5076, 1
        %vm5205 = vcmp.eq.s32.totalorder %v5077, 1
        %v5206 = vsel %vm5078, %v1674, 0.0
        %v5207 = vsel %vm5079, %v1676, 0.0
        %v5208 = vsel %vm5080, %v1679, 0.0
        %v5209 = vsel %vm5081, %v1681, 0.0
        %v5210 = vsel %vm5082, %v1684, 0.0
        %v5211 = vsel %vm5083, %v1686, 0.0
        %v5212 = vsel %vm5084, %v1689, 0.0
        %v5213 = vsel %vm5085, %v1691, 0.0
        %v5214 = vsel %vm5086, %v1694, 0.0
        %v5215 = vsel %vm5087, %v1696, 0.0
        %v5216 = vsel %vm5088, %v1699, 0.0
        %v5217 = vsel %vm5089, %v1701, 0.0
        %v5218 = vsel %vm5090, %v1704, 0.0
        %v5219 = vsel %vm5091, %v1706, 0.0
        %v5220 = vsel %vm5092, %v1709, 0.0
        %v5221 = vsel %vm5093, %v1711, 0.0
        %v5222 = vsel %vm5094, %v1714, 0.0
        %v5223 = vsel %vm5095, %v1716, 0.0
        %v5224 = vsel %vm5096, %v1719, 0.0
        %v5225 = vsel %vm5097, %v1721, 0.0
        %v5226 = vsel %vm5098, %v1724, 0.0
        %v5227 = vsel %vm5099, %v1726, 0.0
        %v5228 = vsel %vm5100, %v1729, 0.0
        %v5229 = vsel %vm5101, %v1731, 0.0
        %v5230 = vsel %vm5102, %v1734, 0.0
        %v5231 = vsel %vm5103, %v1736, 0.0
        %v5232 = vsel %vm5104, %v1739, 0.0
        %v5233 = vsel %vm5105, %v1741, 0.0
        %v5234 = vsel %vm5106, %v1744, 0.0
        %v5235 = vsel %vm5107, %v1746, 0.0
        %v5236 = vsel %vm5108, %v1749, 0.0
        %v5237 = vsel %vm5109, %v1751, 0.0
        %v5238 = vsel %vm5110, %v1754, 0.0
        %v5239 = vsel %vm5111, %v1756, 0.0
        %v5240 = vsel %vm5112, %v1759, 0.0
        %v5241 = vsel %vm5113, %v1761, 0.0
        %v5242 = vsel %vm5114, %v1764, 0.0
        %v5243 = vsel %vm5115, %v1766, 0.0
        %v5244 = vsel %vm5116, %v1769, 0.0
        %v5245 = vsel %vm5117, %v1771, 0.0
        %v5246 = vsel %vm5118, %v1774, 0.0
        %v5247 = vsel %vm5119, %v1776, 0.0
        %v5248 = vsel %vm5120, %v1779, 0.0
        %v5249 = vsel %vm5121, %v1781, 0.0
        %v5250 = vsel %vm5122, %v1784, 0.0
        %v5251 = vsel %vm5123, %v1786, 0.0
        %v5252 = vsel %vm5124, %v1789, 0.0
        %v5253 = vsel %vm5125, %v1791, 0.0
        %v5254 = vsel %vm5126, %v1794, 0.0
        %v5255 = vsel %vm5127, %v1796, 0.0
        %v5256 = vsel %vm5128, %v1799, 0.0
        %v5257 = vsel %vm5129, %v1801, 0.0
        %v5258 = vsel %vm5130, %v1804, 0.0
        %v5259 = vsel %vm5131, %v1806, 0.0
        %v5260 = vsel %vm5132, %v1809, 0.0
        %v5261 = vsel %vm5133, %v1811, 0.0
        %v5262 = vsel %vm5134, %v1814, 0.0
        %v5263 = vsel %vm5135, %v1816, 0.0
        %v5264 = vsel %vm5136, %v1819, 0.0
        %v5265 = vsel %vm5137, %v1821, 0.0
        %v5266 = vsel %vm5138, %v1824, 0.0
        %v5267 = vsel %vm5139, %v1826, 0.0
        %v5268 = vsel %vm5140, %v1829, 0.0
        %v5269 = vsel %vm5141, %v1831, 0.0
        %v5270 = vsel %vm5142, %v1834, 0.0
        %v5271 = vsel %vm5143, %v1836, 0.0
        %v5272 = vsel %vm5144, %v1839, 0.0
        %v5273 = vsel %vm5145, %v1841, 0.0
        %v5274 = vsel %vm5146, %v1844, 0.0
        %v5275 = vsel %vm5147, %v1846, 0.0
        %v5276 = vsel %vm5148, %v1849, 0.0
        %v5277 = vsel %vm5149, %v1851, 0.0
        %v5278 = vsel %vm5150, %v1854, 0.0
        %v5279 = vsel %vm5151, %v1856, 0.0
        %v5280 = vsel %vm5152, %v1859, 0.0
        %v5281 = vsel %vm5153, %v1861, 0.0
        %v5282 = vsel %vm5154, %v1864, 0.0
        %v5283 = vsel %vm5155, %v1866, 0.0
        %v5284 = vsel %vm5156, %v1869, 0.0
        %v5285 = vsel %vm5157, %v1871, 0.0
        %v5286 = vsel %vm5158, %v1874, 0.0
        %v5287 = vsel %vm5159, %v1876, 0.0
        %v5288 = vsel %vm5160, %v1879, 0.0
        %v5289 = vsel %vm5161, %v1881, 0.0
        %v5290 = vsel %vm5162, %v1884, 0.0
        %v5291 = vsel %vm5163, %v1886, 0.0
        %v5292 = vsel %vm5164, %v1889, 0.0
        %v5293 = vsel %vm5165, %v1891, 0.0
        %v5294 = vsel %vm5166, %v1894, 0.0
        %v5295 = vsel %vm5167, %v1896, 0.0
        %v5296 = vsel %vm5168, %v1899, 0.0
        %v5297 = vsel %vm5169, %v1901, 0.0
        %v5298 = vsel %vm5170, %v1904, 0.0
        %v5299 = vsel %vm5171, %v1906, 0.0
        %v5300 = vsel %vm5172, %v1909, 0.0
        %v5301 = vsel %vm5173, %v1911, 0.0
        %v5302 = vsel %vm5174, %v1914, 0.0
        %v5303 = vsel %vm5175, %v1916, 0.0
        %v5304 = vsel %vm5176, %v1919, 0.0
        %v5305 = vsel %vm5177, %v1921, 0.0
        %v5306 = vsel %vm5178, %v1924, 0.0
        %v5307 = vsel %vm5179, %v1926, 0.0
        %v5308 = vsel %vm5180, %v1929, 0.0
        %v5309 = vsel %vm5181, %v1931, 0.0
        %v5310 = vsel %vm5182, %v1934, 0.0
        %v5311 = vsel %vm5183, %v1936, 0.0
        %v5312 = vsel %vm5184, %v1939, 0.0
        %v5313 = vsel %vm5185, %v1941, 0.0
        %v5314 = vsel %vm5186, %v1944, 0.0
        %v5315 = vsel %vm5187, %v1946, 0.0
        %v5316 = vsel %vm5188, %v1949, 0.0
        %v5317 = vsel %vm5189, %v1951, 0.0
        %v5318 = vsel %vm5190, %v1954, 0.0
        %v5319 = vsel %vm5191, %v1956, 0.0
        %v5320 = vsel %vm5192, %v1959, 0.0
        %v5321 = vsel %vm5193, %v1961, 0.0
        %v5322 = vsel %vm5194, %v1964, 0.0
        %v5323 = vsel %vm5195, %v1966, 0.0
        %v5324 = vsel %vm5196, %v1969, 0.0
        %v5325 = vsel %vm5197, %v1971, 0.0
        %v5326 = vsel %vm5198, %v1974, 0.0
        %v5327 = vsel %vm5199, %v1976, 0.0
        %v5328 = vsel %vm5200, %v1979, 0.0
        %v5329 = vsel %vm5201, %v1981, 0.0
        %v5330 = vsel %vm5202, %v1984, 0.0
        %v5331 = vsel %vm5203, %v1986, 0.0
        %v5332 = vsel %vm5204, %v1989, 0.0
        %v5333 = vsel %vm5205, %v1991, 0.0
        %v5334 = vadd.f32 %v5206, %v5207
        %v5335 = vadd.f32 %v5334, %v5208
        %v5336 = vadd.f32 %v5335, %v5209
        %v5337 = vadd.f32 %v5336, %v5210
        %v5338 = vadd.f32 %v5337, %v5211
        %v5339 = vadd.f32 %v5338, %v5212
        %v5340 = vadd.f32 %v5339, %v5213
        %v5341 = vadd.f32 %v5340, %v5214
        %v5342 = vadd.f32 %v5341, %v5215
        %v5343 = vadd.f32 %v5342, %v5216
        %v5344 = vadd.f32 %v5343, %v5217
        %v5345 = vadd.f32 %v5344, %v5218
        %v5346 = vadd.f32 %v5345, %v5219
        %v5347 = vadd.f32 %v5346, %v5220
        %v5348 = vadd.f32 %v5347, %v5221
        %v5349 = vadd.f32 %v5348, %v5222
        %v5350 = vadd.f32 %v5349, %v5223
        %v5351 = vadd.f32 %v5350, %v5224
        %v5352 = vadd.f32 %v5351, %v5225
        %v5353 = vadd.f32 %v5352, %v5226
        %v5354 = vadd.f32 %v5353, %v5227
        %v5355 = vadd.f32 %v5354, %v5228
        %v5356 = vadd.f32 %v5355, %v5229
        %v5357 = vadd.f32 %v5356, %v5230
        %v5358 = vadd.f32 %v5357, %v5231
        %v5359 = vadd.f32 %v5358, %v5232
        %v5360 = vadd.f32 %v5359, %v5233
        %v5361 = vadd.f32 %v5360, %v5234
        %v5362 = vadd.f32 %v5361, %v5235
        %v5363 = vadd.f32 %v5362, %v5236
        %v5364 = vadd.f32 %v5363, %v5237
        %v5365 = vadd.f32 %v5364, %v5238
        %v5366 = vadd.f32 %v5365, %v5239
        %v5367 = vadd.f32 %v5366, %v5240
        %v5368 = vadd.f32 %v5367, %v5241
        %v5369 = vadd.f32 %v5368, %v5242
        %v5370 = vadd.f32 %v5369, %v5243
        %v5371 = vadd.f32 %v5370, %v5244
        %v5372 = vadd.f32 %v5371, %v5245
        %v5373 = vadd.f32 %v5372, %v5246
        %v5374 = vadd.f32 %v5373, %v5247
        %v5375 = vadd.f32 %v5374, %v5248
        %v5376 = vadd.f32 %v5375, %v5249
        %v5377 = vadd.f32 %v5376, %v5250
        %v5378 = vadd.f32 %v5377, %v5251
        %v5379 = vadd.f32 %v5378, %v5252
        %v5380 = vadd.f32 %v5379, %v5253
        %v5381 = vadd.f32 %v5380, %v5254
        %v5382 = vadd.f32 %v5381, %v5255
        %v5383 = vadd.f32 %v5382, %v5256
        %v5384 = vadd.f32 %v5383, %v5257
        %v5385 = vadd.f32 %v5384, %v5258
        %v5386 = vadd.f32 %v5385, %v5259
        %v5387 = vadd.f32 %v5386, %v5260
        %v5388 = vadd.f32 %v5387, %v5261
        %v5389 = vadd.f32 %v5388, %v5262
        %v5390 = vadd.f32 %v5389, %v5263
        %v5391 = vadd.f32 %v5390, %v5264
        %v5392 = vadd.f32 %v5391, %v5265
        %v5393 = vadd.f32 %v5392, %v5266
        %v5394 = vadd.f32 %v5393, %v5267
        %v5395 = vadd.f32 %v5394, %v5268
        %v5396 = vadd.f32 %v5395, %v5269
        %v5397 = vadd.f32 %v5396, %v5270
        %v5398 = vadd.f32 %v5397, %v5271
        %v5399 = vadd.f32 %v5398, %v5272
        %v5400 = vadd.f32 %v5399, %v5273
        %v5401 = vadd.f32 %v5400, %v5274
        %v5402 = vadd.f32 %v5401, %v5275
        %v5403 = vadd.f32 %v5402, %v5276
        %v5404 = vadd.f32 %v5403, %v5277
        %v5405 = vadd.f32 %v5404, %v5278
        %v5406 = vadd.f32 %v5405, %v5279
        %v5407 = vadd.f32 %v5406, %v5280
        %v5408 = vadd.f32 %v5407, %v5281
        %v5409 = vadd.f32 %v5408, %v5282
        %v5410 = vadd.f32 %v5409, %v5283
        %v5411 = vadd.f32 %v5410, %v5284
        %v5412 = vadd.f32 %v5411, %v5285
        %v5413 = vadd.f32 %v5412, %v5286
        %v5414 = vadd.f32 %v5413, %v5287
        %v5415 = vadd.f32 %v5414, %v5288
        %v5416 = vadd.f32 %v5415, %v5289
        %v5417 = vadd.f32 %v5416, %v5290
        %v5418 = vadd.f32 %v5417, %v5291
        %v5419 = vadd.f32 %v5418, %v5292
        %v5420 = vadd.f32 %v5419, %v5293
        %v5421 = vadd.f32 %v5420, %v5294
        %v5422 = vadd.f32 %v5421, %v5295
        %v5423 = vadd.f32 %v5422, %v5296
        %v5424 = vadd.f32 %v5423, %v5297
        %v5425 = vadd.f32 %v5424, %v5298
        %v5426 = vadd.f32 %v5425, %v5299
        %v5427 = vadd.f32 %v5426, %v5300
        %v5428 = vadd.f32 %v5427, %v5301
        %v5429 = vadd.f32 %v5428, %v5302
        %v5430 = vadd.f32 %v5429, %v5303
        %v5431 = vadd.f32 %v5430, %v5304
        %v5432 = vadd.f32 %v5431, %v5305
        %v5433 = vadd.f32 %v5432, %v5306
        %v5434 = vadd.f32 %v5433, %v5307
        %v5435 = vadd.f32 %v5434, %v5308
        %v5436 = vadd.f32 %v5435, %v5309
        %v5437 = vadd.f32 %v5436, %v5310
        %v5438 = vadd.f32 %v5437, %v5311
        %v5439 = vadd.f32 %v5438, %v5312
        %v5440 = vadd.f32 %v5439, %v5313
        %v5441 = vadd.f32 %v5440, %v5314
        %v5442 = vadd.f32 %v5441, %v5315
        %v5443 = vadd.f32 %v5442, %v5316
        %v5444 = vadd.f32 %v5443, %v5317
        %v5445 = vadd.f32 %v5444, %v5318
        %v5446 = vadd.f32 %v5445, %v5319
        %v5447 = vadd.f32 %v5446, %v5320
        %v5448 = vadd.f32 %v5447, %v5321
        %v5449 = vadd.f32 %v5448, %v5322
        %v5450 = vadd.f32 %v5449, %v5323
        %v5451 = vadd.f32 %v5450, %v5324
        %v5452 = vadd.f32 %v5451, %v5325
        %v5453 = vadd.f32 %v5452, %v5326
        %v5454 = vadd.f32 %v5453, %v5327
        %v5455 = vadd.f32 %v5454, %v5328
        %v5456 = vadd.f32 %v5455, %v5329
        %v5457 = vadd.f32 %v5456, %v5330
        %v5458 = vadd.f32 %v5457, %v5331
        %v5459 = vadd.f32 %v5458, %v5332
        %v5460 = vadd.f32 %v5459, %v5333
        %v5461 = vrot.slane %v5460, 4
        %v5462 = vadd.f32 %v5460, %v5461
        %v5463 = vrot.slane %v5462, 2
        %v5464 = vadd.f32 %v5462, %v5463
        %v5465 = vrot.slane %v5464, 1
        %v5466 = vadd.f32 %v5464, %v5465
        %v5467 = vadd.f32 %v4693, %v5466
        %5468 = vst [vmem:[#allocation3] sm:$0x1] %v5467
        %p5469 = scmp.eq.s32.totalorder %s24, 1
        // Predicated region
        $region65: #{graph_level_triples_mlp.1} parent=59 // pred_check
          %p5470 = pneg %p5469
        $region66: #{graph_level_triples_mlp.1} parent=59 // pred_check_branch
          %5472 = sbr.rel (%p5470) target = $region68
        $region67: #{graph_level_triples_mlp.1} parent=59 // pred_region
          %v5473 = vld [vmem:[#allocation2] sm:$0x1]
          %v5474 = vld [vmem:[%s5] sm:$0xff]
          %v5475 = vld [vmem:[%s5 + $0x8] sm:$0xff]
          %v5476 = vld [vmem:[%s5 + $0x10] sm:$0xff]
          %v5477 = vld [vmem:[%s5 + $0x18] sm:$0xff]
          %v5478 = vld [vmem:[%s5 + $0x20] sm:$0xff]
          %v5479 = vld [vmem:[%s5 + $0x28] sm:$0xff]
          %v5480 = vld [vmem:[%s5 + $0x30] sm:$0xff]
          %v5481 = vld [vmem:[%s5 + $0x38] sm:$0xff]
          %v5482 = vld [vmem:[%s5 + $0x40] sm:$0xff]
          %v5483 = vld [vmem:[%s5 + $0x48] sm:$0xff]
          %v5484 = vld [vmem:[%s5 + $0x50] sm:$0xff]
          %v5485 = vld [vmem:[%s5 + $0x58] sm:$0xff]
          %v5486 = vld [vmem:[%s5 + $0x60] sm:$0xff]
          %v5487 = vld [vmem:[%s5 + $0x68] sm:$0xff]
          %v5488 = vld [vmem:[%s5 + $0x70] sm:$0xff]
          %v5489 = vld [vmem:[%s5 + $0x78] sm:$0xff]
          %v5490 = vld [vmem:[#allocation3] sm:$0x1]
          %v5491 = vld [vmem:[%s6] sm:$0xff]
          %v5492 = vld [vmem:[%s6 + $0x8] sm:$0xff]
          %v5493 = vld [vmem:[%s6 + $0x10] sm:$0xff]
          %v5494 = vld [vmem:[%s6 + $0x18] sm:$0xff]
          %v5495 = vld [vmem:[%s6 + $0x20] sm:$0xff]
          %v5496 = vld [vmem:[%s6 + $0x28] sm:$0xff]
          %v5497 = vld [vmem:[%s6 + $0x30] sm:$0xff]
          %v5498 = vld [vmem:[%s6 + $0x38] sm:$0xff]
          %v5499 = vld [vmem:[%s6 + $0x40] sm:$0xff]
          %v5500 = vld [vmem:[%s6 + $0x48] sm:$0xff]
          %v5501 = vld [vmem:[%s6 + $0x50] sm:$0xff]
          %v5502 = vld [vmem:[%s6 + $0x58] sm:$0xff]
          %v5503 = vld [vmem:[%s6 + $0x60] sm:$0xff]
          %v5504 = vld [vmem:[%s6 + $0x68] sm:$0xff]
          %v5505 = vld [vmem:[%s6 + $0x70] sm:$0xff]
          %v5506 = vld [vmem:[%s6 + $0x78] sm:$0xff]
          %5507 = vmatpush.msra.mxu0 %v5506
          %5508 = vmatpush.msra.mxu0 %v5505
          %5509 = vmatpush.msra.mxu0 %v5504
          %5510 = vmatpush.msra.mxu0 %v5503
          %5511 = vmatpush.msra.mxu0 %v5502
          %5512 = vmatpush.msra.mxu0 %v5501
          %5513 = vmatpush.msra.mxu0 %v5500
          %5514 = vmatpush.msra.mxu0 %v5499
          %5515 = vmatpush.msra.mxu0 %v5498
          %5516 = vmatpush.msra.mxu0 %v5497
          %5517 = vmatpush.msra.mxu0 %v5496
          %5518 = vmatpush.msra.mxu0 %v5495
          %5519 = vmatpush.msra.mxu0 %v5494
          %5520 = vmatpush.msra.mxu0 %v5493
          %5521 = vmatpush.msra.mxu0 %v5492
          %5522 = vmatpush.msra.mxu0 %v5491
          %5523 = vmatmul.f32.gmra.mxu0 %v5490
          %v5524 = vpop.f32.mrf.mxu0
          %v5525 = vadd.f32 0.0, %v5524
          %5526 = vdwg.mxu0
          %5527 = vmatpush.msra.mxu0 %v5489
          %5528 = vmatpush.msra.mxu0 %v5488
          %5529 = vmatpush.msra.mxu0 %v5487
          %5530 = vmatpush.msra.mxu0 %v5486
          %5531 = vmatpush.msra.mxu0 %v5485
          %5532 = vmatpush.msra.mxu0 %v5484
          %5533 = vmatpush.msra.mxu0 %v5483
          %5534 = vmatpush.msra.mxu0 %v5482
          %5535 = vmatpush.msra.mxu0 %v5481
          %5536 = vmatpush.msra.mxu0 %v5480
          %5537 = vmatpush.msra.mxu0 %v5479
          %5538 = vmatpush.msra.mxu0 %v5478
          %5539 = vmatpush.msra.mxu0 %v5477
          %5540 = vmatpush.msra.mxu0 %v5476
          %5541 = vmatpush.msra.mxu0 %v5475
          %5542 = vmatpush.msra.mxu0 %v5474
          %5543 = vmatmul.f32.gmra.mxu0 %v5473
          %v5544 = vpop.f32.mrf.mxu0
          %v5545 = vadd.f32 %v5525, %v5544
          %5546 = vdwg.mxu0
          %v5547 = vld [vmem:[%s7] sm:$0x1]
          %v5548 = vadd.f32 %v5545, %v5547
          %v5549 = vmax.f32 %v5548, 0.0
          %v5550 = vld [vmem:[%s8] sm:$0xff]
          %v5551 = vld [vmem:[%s8 + $0x8] sm:$0xff]
          %v5552 = vld [vmem:[%s8 + $0x10] sm:$0xff]
          %v5553 = vld [vmem:[%s8 + $0x18] sm:$0xff]
          %v5554 = vld [vmem:[%s8 + $0x20] sm:$0xff]
          %v5555 = vld [vmem:[%s8 + $0x28] sm:$0xff]
          %v5556 = vld [vmem:[%s8 + $0x30] sm:$0xff]
          %v5557 = vld [vmem:[%s8 + $0x38] sm:$0xff]
          %v5558 = vld [vmem:[%s8 + $0x40] sm:$0xff]
          %v5559 = vld [vmem:[%s8 + $0x48] sm:$0xff]
          %v5560 = vld [vmem:[%s8 + $0x50] sm:$0xff]
          %v5561 = vld [vmem:[%s8 + $0x58] sm:$0xff]
          %v5562 = vld [vmem:[%s8 + $0x60] sm:$0xff]
          %v5563 = vld [vmem:[%s8 + $0x68] sm:$0xff]
          %v5564 = vld [vmem:[%s8 + $0x70] sm:$0xff]
          %v5565 = vld [vmem:[%s8 + $0x78] sm:$0xff]
          %v5566 = vld [vmem:[%s9] sm:$0x1]
          %5567 = vmatpush.msra.mxu0 %v5565
          %5568 = vmatpush.msra.mxu0 %v5564
          %5569 = vmatpush.msra.mxu0 %v5563
          %5570 = vmatpush.msra.mxu0 %v5562
          %5571 = vmatpush.msra.mxu0 %v5561
          %5572 = vmatpush.msra.mxu0 %v5560
          %5573 = vmatpush.msra.mxu0 %v5559
          %5574 = vmatpush.msra.mxu0 %v5558
          %5575 = vmatpush.msra.mxu0 %v5557
          %5576 = vmatpush.msra.mxu0 %v5556
          %5577 = vmatpush.msra.mxu0 %v5555
          %5578 = vmatpush.msra.mxu0 %v5554
          %5579 = vmatpush.msra.mxu0 %v5553
          %5580 = vmatpush.msra.mxu0 %v5552
          %5581 = vmatpush.msra.mxu0 %v5551
          %5582 = vmatpush.msra.mxu0 %v5550
          %5583 = vmatmul.f32.gmra.mxu0 %v5549
          %v5584 = vpop.f32.mrf.mxu0
          %v5585 = vadd.f32 %v5566, %v5584
          %5586 = vdwg.mxu0
          %5587 = vst [vmem:[#allocation5] sm:$0x1] %v5585
        $region68: #{graph_level_triples_mlp.1} parent=59 // pred_fallthru
          _
        %s5588 = sand.u32 %s247, 1
        %s5589 = sand.u32 %s247, 1
        %s5590 = smul.addr %s5589, 1024
        %s5591 = scalar_lea.vmem [#allocation4], %s5590
        // Predicated region
        $region69: #{graph_level_triples_mlp.1} parent=59 // pred_check
          %p5592 = pneg %p257
        $region70: #{graph_level_triples_mlp.1} parent=59 // pred_check_branch
          %5594 = sbr.rel (%p5592) target = $region72
        $region71: #{graph_level_triples_mlp.1} parent=59 // pred_region
          %s5595 = smul.u32 128, %s24
          %s5596 = ssub.s32 250, %s5595
          %p5597 = scmp.lt.s32.totalorder %s5596, 128
          %s5598 = scalar_select %p5597, %s5596, 128
          %s5599 = smul.u32 8, %s5598
          %p5600 = scmp.ne.s32.totalorder 0, %s5599
          %s5601 = smul.addr %s5595, 8
          %s5602 = scalar_lea.vmem %s10, %s5601
          // Predicated region
          $region73: #{graph_level_triples_mlp.1} parent=71 // pred_check
            %p5603 = pneg %p5600
          $region74: #{graph_level_triples_mlp.1} parent=71 // pred_check_branch
            %5605 = sbr.rel (%p5603) target = $region76
          $region75: #{graph_level_triples_mlp.1} parent=71 // pred_region
            // Predicated region
            $region77: #{graph_level_triples_mlp.1} parent=75 // pred_check
              _
            $region78: #{graph_level_triples_mlp.1} parent=75 // pred_check_branch
              %5607 = sbr.rel (0) target = $region80
            $region79: #{graph_level_triples_mlp.1} parent=75 // pred_region
              // Predicated region
              $region99: #{graph_level_triples_mlp.1} parent=79 // pred_check
                _
              $region100: #{graph_level_triples_mlp.1} parent=79 // pred_check_branch
                %5719 = sbr.rel (0) target = $region102
              $region101: #{graph_level_triples_mlp.1} parent=79 // pred_region
                %s5720 = sshrl.u32 %s5598, 5
                // While loop
                $region103: #{graph_level_triples_mlp.1} parent=101 // loop_pre_header
                  _
                $region104: #{graph_level_triples_mlp.1} parent=101 // loop_header
                  %s5722 = sphi 0, %s5724
                  %p5723 = scmp.ge.s32.totalorder %s5722, %s5720
                  %s5727 = sphi 0, %s5796
                  %s5728 = sphi %s5591, %s5799
                  %s5729 = sphi %s5602, %s5800
                $region105: #{graph_level_triples_mlp.1} parent=101 // loop_header_branch
                  %5726 = sbr.rel (%p5723) target = $region109
                $region106: #{graph_level_triples_mlp.1} parent=101 // loop_body
                  %v5730 = vld [vmem:[%s5728] sm:$0xff]
                  %5731 = vst [vmem:[%s5729] sm:$0xff] %v5730
                  %v5732 = vld [vmem:[%s5728 + $0x8] sm:$0xff]
                  %5733 = vst [vmem:[%s5729 + $0x8] sm:$0xff] %v5732
                  %v5734 = vld [vmem:[%s5728 + $0x10] sm:$0xff]
                  %5735 = vst [vmem:[%s5729 + $0x10] sm:$0xff] %v5734
                  %v5736 = vld [vmem:[%s5728 + $0x18] sm:$0xff]
                  %5737 = vst [vmem:[%s5729 + $0x18] sm:$0xff] %v5736
                  %v5738 = vld [vmem:[%s5728 + $0x20] sm:$0xff]
                  %5739 = vst [vmem:[%s5729 + $0x20] sm:$0xff] %v5738
                  %v5740 = vld [vmem:[%s5728 + $0x28] sm:$0xff]
                  %5741 = vst [vmem:[%s5729 + $0x28] sm:$0xff] %v5740
                  %v5742 = vld [vmem:[%s5728 + $0x30] sm:$0xff]
                  %5743 = vst [vmem:[%s5729 + $0x30] sm:$0xff] %v5742
                  %v5744 = vld [vmem:[%s5728 + $0x38] sm:$0xff]
                  %5745 = vst [vmem:[%s5729 + $0x38] sm:$0xff] %v5744
                  %v5746 = vld [vmem:[%s5728 + $0x40] sm:$0xff]
                  %5747 = vst [vmem:[%s5729 + $0x40] sm:$0xff] %v5746
                  %v5748 = vld [vmem:[%s5728 + $0x48] sm:$0xff]
                  %5749 = vst [vmem:[%s5729 + $0x48] sm:$0xff] %v5748
                  %v5750 = vld [vmem:[%s5728 + $0x50] sm:$0xff]
                  %5751 = vst [vmem:[%s5729 + $0x50] sm:$0xff] %v5750
                  %v5752 = vld [vmem:[%s5728 + $0x58] sm:$0xff]
                  %5753 = vst [vmem:[%s5729 + $0x58] sm:$0xff] %v5752
                  %v5754 = vld [vmem:[%s5728 + $0x60] sm:$0xff]
                  %5755 = vst [vmem:[%s5729 + $0x60] sm:$0xff] %v5754
                  %v5756 = vld [vmem:[%s5728 + $0x68] sm:$0xff]
                  %5757 = vst [vmem:[%s5729 + $0x68] sm:$0xff] %v5756
                  %v5758 = vld [vmem:[%s5728 + $0x70] sm:$0xff]
                  %5759 = vst [vmem:[%s5729 + $0x70] sm:$0xff] %v5758
                  %v5760 = vld [vmem:[%s5728 + $0x78] sm:$0xff]
                  %5761 = vst [vmem:[%s5729 + $0x78] sm:$0xff] %v5760
                  %v5762 = vld [vmem:[%s5728 + $0x80] sm:$0xff]
                  %5763 = vst [vmem:[%s5729 + $0x80] sm:$0xff] %v5762
                  %v5764 = vld [vmem:[%s5728 + $0x88] sm:$0xff]
                  %5765 = vst [vmem:[%s5729 + $0x88] sm:$0xff] %v5764
                  %v5766 = vld [vmem:[%s5728 + $0x90] sm:$0xff]
                  %5767 = vst [vmem:[%s5729 + $0x90] sm:$0xff] %v5766
                  %v5768 = vld [vmem:[%s5728 + $0x98] sm:$0xff]
                  %5769 = vst [vmem:[%s5729 + $0x98] sm:$0xff] %v5768
                  %v5770 = vld [vmem:[%s5728 + $0xa0] sm:$0xff]
                  %5771 = vst [vmem:[%s5729 + $0xa0] sm:$0xff] %v5770
                  %v5772 = vld [vmem:[%s5728 + $0xa8] sm:$0xff]
                  %5773 = vst [vmem:[%s5729 + $0xa8] sm:$0xff] %v5772
                  %v5774 = vld [vmem:[%s5728 + $0xb0] sm:$0xff]
                  %5775 = vst [vmem:[%s5729 + $0xb0] sm:$0xff] %v5774
                  %v5776 = vld [vmem:[%s5728 + $0xb8] sm:$0xff]
                  %5777 = vst [vmem:[%s5729 + $0xb8] sm:$0xff] %v5776
                  %v5778 = vld [vmem:[%s5728 + $0xc0] sm:$0xff]
                  %5779 = vst [vmem:[%s5729 + $0xc0] sm:$0xff] %v5778
                  %v5780 = vld [vmem:[%s5728 + $0xc8] sm:$0xff]
                  %5781 = vst [vmem:[%s5729 + $0xc8] sm:$0xff] %v5780
                  %v5782 = vld [vmem:[%s5728 + $0xd0] sm:$0xff]
                  %5783 = vst [vmem:[%s5729 + $0xd0] sm:$0xff] %v5782
                  %v5784 = vld [vmem:[%s5728 + $0xd8] sm:$0xff]
                  %5785 = vst [vmem:[%s5729 + $0xd8] sm:$0xff] %v5784
                  %v5786 = vld [vmem:[%s5728 + $0xe0] sm:$0xff]
                  %5787 = vst [vmem:[%s5729 + $0xe0] sm:$0xff] %v5786
                  %v5788 = vld [vmem:[%s5728 + $0xe8] sm:$0xff]
                  %5789 = vst [vmem:[%s5729 + $0xe8] sm:$0xff] %v5788
                  %v5790 = vld [vmem:[%s5728 + $0xf0] sm:$0xff]
                  %5791 = vst [vmem:[%s5729 + $0xf0] sm:$0xff] %v5790
                  %v5792 = vld [vmem:[%s5728 + $0xf8] sm:$0xff]
                  %5793 = vst [vmem:[%s5729 + $0xf8] sm:$0xff] %v5792
                  %s5794 = sadd.s32 1, %s5727
                  %p5795 = scmp.ge.s32.totalorder %s5794, %s5720
                  %s5796 = scalar_select %p5795, 0, %s5794
                  %s5797 = smul.u32 %s5796, 256
                  %s5798 = smul.u32 %s5796, 256
                  %s5799 = scalar_lea.vmem %s5591, %s5797 [#allocation4]
                  %s5800 = scalar_lea.vmem %s5602, %s5798
                $region107: #{graph_level_triples_mlp.1} parent=101 // loop_footer
                  %s5724 = sadd.s32 %s5722, 1
                $region108: #{graph_level_triples_mlp.1} parent=101 // loop_footer_branch
                  %5721 = sbr.rel target = $region104
                $region109: #{graph_level_triples_mlp.1} parent=101 // loop_exit
                  _
                %s5801 = sshrl.u32 %s5598, 5
                %s5802 = sand.u32 %s5598, 31
                %s5803 = smul.u32 %s5801, 32
                %s5804 = smul.u32 8, %s5803
                %s5805 = scalar_lea.vmem %s5591, %s5804 [#allocation4]
                %s5806 = smul.u32 8, %s5803
                %s5807 = scalar_lea.vmem %s5602, %s5806
                // While loop
                $region110: #{graph_level_triples_mlp.1} parent=101 // loop_pre_header
                  _
                $region111: #{graph_level_triples_mlp.1} parent=101 // loop_header
                  %s5809 = sphi 0, %s5811
                  %p5810 = scmp.ge.s32.totalorder %s5809, %s5802
                  %s5814 = sphi 0, %s5821
                  %s5815 = sphi %s5805, %s5824
                  %s5816 = sphi %s5807, %s5825
                $region112: #{graph_level_triples_mlp.1} parent=101 // loop_header_branch
                  %5813 = sbr.rel (%p5810) target = $region116
                $region113: #{graph_level_triples_mlp.1} parent=101 // loop_body
                  %v5817 = vld [vmem:[%s5815] sm:$0xff]
                  %5818 = vst [vmem:[%s5816] sm:$0xff] %v5817
                  %s5819 = sadd.s32 1, %s5814
                  %p5820 = scmp.ge.s32.totalorder %s5819, %s5802
                  %s5821 = scalar_select %p5820, 0, %s5819
                  %s5822 = smul.u32 %s5821, 8
                  %s5823 = smul.u32 %s5821, 8
                  %s5824 = scalar_lea.vmem %s5805, %s5822 [#allocation4]
                  %s5825 = scalar_lea.vmem %s5807, %s5823
                $region114: #{graph_level_triples_mlp.1} parent=101 // loop_footer
                  %s5811 = sadd.s32 %s5809, 1
                $region115: #{graph_level_triples_mlp.1} parent=101 // loop_footer_branch
                  %5808 = sbr.rel target = $region111
                $region116: #{graph_level_triples_mlp.1} parent=101 // loop_exit
                  _
              $region102: #{graph_level_triples_mlp.1} parent=79 // pred_fallthru
                _
              // Predicated region
              $region117: #{graph_level_triples_mlp.1} parent=79 // pred_check
                _
              $region118: #{graph_level_triples_mlp.1} parent=79 // pred_check_branch
                %5827 = sbr.rel target = $region120
              $region119: #{graph_level_triples_mlp.1} parent=79 // pred_region
                _
              $region120: #{graph_level_triples_mlp.1} parent=79 // pred_fallthru
                _
            $region80: #{graph_level_triples_mlp.1} parent=75 // pred_fallthru
              _
            // Predicated region
            $region81: #{graph_level_triples_mlp.1} parent=75 // pred_check
              _
            $region82: #{graph_level_triples_mlp.1} parent=75 // pred_check_branch
              %5609 = sbr.rel target = $region84
            $region83: #{graph_level_triples_mlp.1} parent=75 // pred_region
              %s5611 = ssub.s32 256, 1
              %s5612 = sshrl.u32 %s5598, 5
              // While loop
              $region85: #{graph_level_triples_mlp.1} parent=83 // loop_pre_header
                _
              $region86: #{graph_level_triples_mlp.1} parent=83 // loop_header
                %s5614 = sphi 0, %s5616
                %p5615 = scmp.ge.s32.totalorder %s5614, %s5612
                %s5619 = sphi 0, %s5688
                %s5620 = sphi %s5591, %s5691
                %s5621 = sphi %s5602, %s5692
              $region87: #{graph_level_triples_mlp.1} parent=83 // loop_header_branch
                %5618 = sbr.rel (%p5615) target = $region91
              $region88: #{graph_level_triples_mlp.1} parent=83 // loop_body
                %v5622 = vld [vmem:[%s5620] sm:%s5611]
                %5623 = vst [vmem:[%s5621] sm:%s5611] %v5622
                %v5624 = vld [vmem:[%s5620 + $0x8] sm:%s5611]
                %5625 = vst [vmem:[%s5621 + $0x8] sm:%s5611] %v5624
                %v5626 = vld [vmem:[%s5620 + $0x10] sm:%s5611]
                %5627 = vst [vmem:[%s5621 + $0x10] sm:%s5611] %v5626
                %v5628 = vld [vmem:[%s5620 + $0x18] sm:%s5611]
                %5629 = vst [vmem:[%s5621 + $0x18] sm:%s5611] %v5628
                %v5630 = vld [vmem:[%s5620 + $0x20] sm:%s5611]
                %5631 = vst [vmem:[%s5621 + $0x20] sm:%s5611] %v5630
                %v5632 = vld [vmem:[%s5620 + $0x28] sm:%s5611]
                %5633 = vst [vmem:[%s5621 + $0x28] sm:%s5611] %v5632
                %v5634 = vld [vmem:[%s5620 + $0x30] sm:%s5611]
                %5635 = vst [vmem:[%s5621 + $0x30] sm:%s5611] %v5634
                %v5636 = vld [vmem:[%s5620 + $0x38] sm:%s5611]
                %5637 = vst [vmem:[%s5621 + $0x38] sm:%s5611] %v5636
                %v5638 = vld [vmem:[%s5620 + $0x40] sm:%s5611]
                %5639 = vst [vmem:[%s5621 + $0x40] sm:%s5611] %v5638
                %v5640 = vld [vmem:[%s5620 + $0x48] sm:%s5611]
                %5641 = vst [vmem:[%s5621 + $0x48] sm:%s5611] %v5640
                %v5642 = vld [vmem:[%s5620 + $0x50] sm:%s5611]
                %5643 = vst [vmem:[%s5621 + $0x50] sm:%s5611] %v5642
                %v5644 = vld [vmem:[%s5620 + $0x58] sm:%s5611]
                %5645 = vst [vmem:[%s5621 + $0x58] sm:%s5611] %v5644
                %v5646 = vld [vmem:[%s5620 + $0x60] sm:%s5611]
                %5647 = vst [vmem:[%s5621 + $0x60] sm:%s5611] %v5646
                %v5648 = vld [vmem:[%s5620 + $0x68] sm:%s5611]
                %5649 = vst [vmem:[%s5621 + $0x68] sm:%s5611] %v5648
                %v5650 = vld [vmem:[%s5620 + $0x70] sm:%s5611]
                %5651 = vst [vmem:[%s5621 + $0x70] sm:%s5611] %v5650
                %v5652 = vld [vmem:[%s5620 + $0x78] sm:%s5611]
                %5653 = vst [vmem:[%s5621 + $0x78] sm:%s5611] %v5652
                %v5654 = vld [vmem:[%s5620 + $0x80] sm:%s5611]
                %5655 = vst [vmem:[%s5621 + $0x80] sm:%s5611] %v5654
                %v5656 = vld [vmem:[%s5620 + $0x88] sm:%s5611]
                %5657 = vst [vmem:[%s5621 + $0x88] sm:%s5611] %v5656
                %v5658 = vld [vmem:[%s5620 + $0x90] sm:%s5611]
                %5659 = vst [vmem:[%s5621 + $0x90] sm:%s5611] %v5658
                %v5660 = vld [vmem:[%s5620 + $0x98] sm:%s5611]
                %5661 = vst [vmem:[%s5621 + $0x98] sm:%s5611] %v5660
                %v5662 = vld [vmem:[%s5620 + $0xa0] sm:%s5611]
                %5663 = vst [vmem:[%s5621 + $0xa0] sm:%s5611] %v5662
                %v5664 = vld [vmem:[%s5620 + $0xa8] sm:%s5611]
                %5665 = vst [vmem:[%s5621 + $0xa8] sm:%s5611] %v5664
                %v5666 = vld [vmem:[%s5620 + $0xb0] sm:%s5611]
                %5667 = vst [vmem:[%s5621 + $0xb0] sm:%s5611] %v5666
                %v5668 = vld [vmem:[%s5620 + $0xb8] sm:%s5611]
                %5669 = vst [vmem:[%s5621 + $0xb8] sm:%s5611] %v5668
                %v5670 = vld [vmem:[%s5620 + $0xc0] sm:%s5611]
                %5671 = vst [vmem:[%s5621 + $0xc0] sm:%s5611] %v5670
                %v5672 = vld [vmem:[%s5620 + $0xc8] sm:%s5611]
                %5673 = vst [vmem:[%s5621 + $0xc8] sm:%s5611] %v5672
                %v5674 = vld [vmem:[%s5620 + $0xd0] sm:%s5611]
                %5675 = vst [vmem:[%s5621 + $0xd0] sm:%s5611] %v5674
                %v5676 = vld [vmem:[%s5620 + $0xd8] sm:%s5611]
                %5677 = vst [vmem:[%s5621 + $0xd8] sm:%s5611] %v5676
                %v5678 = vld [vmem:[%s5620 + $0xe0] sm:%s5611]
                %5679 = vst [vmem:[%s5621 + $0xe0] sm:%s5611] %v5678
                %v5680 = vld [vmem:[%s5620 + $0xe8] sm:%s5611]
                %5681 = vst [vmem:[%s5621 + $0xe8] sm:%s5611] %v5680
                %v5682 = vld [vmem:[%s5620 + $0xf0] sm:%s5611]
                %5683 = vst [vmem:[%s5621 + $0xf0] sm:%s5611] %v5682
                %v5684 = vld [vmem:[%s5620 + $0xf8] sm:%s5611]
                %5685 = vst [vmem:[%s5621 + $0xf8] sm:%s5611] %v5684
                %s5686 = sadd.s32 1, %s5619
                %p5687 = scmp.ge.s32.totalorder %s5686, %s5612
                %s5688 = scalar_select %p5687, 0, %s5686
                %s5689 = smul.u32 %s5688, 256
                %s5690 = smul.u32 %s5688, 256
                %s5691 = scalar_lea.vmem %s5591, %s5689 [#allocation4]
                %s5692 = scalar_lea.vmem %s5602, %s5690
              $region89: #{graph_level_triples_mlp.1} parent=83 // loop_footer
                %s5616 = sadd.s32 %s5614, 1
              $region90: #{graph_level_triples_mlp.1} parent=83 // loop_footer_branch
                %5613 = sbr.rel target = $region86
              $region91: #{graph_level_triples_mlp.1} parent=83 // loop_exit
                _
              %s5693 = sshrl.u32 %s5598, 5
              %s5694 = sand.u32 %s5598, 31
              %s5695 = smul.u32 %s5693, 32
              %s5696 = smul.u32 8, %s5695
              %s5697 = scalar_lea.vmem %s5591, %s5696 [#allocation4]
              %s5698 = smul.u32 8, %s5695
              %s5699 = scalar_lea.vmem %s5602, %s5698
              // While loop
              $region92: #{graph_level_triples_mlp.1} parent=83 // loop_pre_header
                _
              $region93: #{graph_level_triples_mlp.1} parent=83 // loop_header
                %s5701 = sphi 0, %s5703
                %p5702 = scmp.ge.s32.totalorder %s5701, %s5694
                %s5706 = sphi 0, %s5713
                %s5707 = sphi %s5697, %s5716
                %s5708 = sphi %s5699, %s5717
              $region94: #{graph_level_triples_mlp.1} parent=83 // loop_header_branch
                %5705 = sbr.rel (%p5702) target = $region98
              $region95: #{graph_level_triples_mlp.1} parent=83 // loop_body
                %v5709 = vld [vmem:[%s5707] sm:%s5611]
                %5710 = vst [vmem:[%s5708] sm:%s5611] %v5709
                %s5711 = sadd.s32 1, %s5706
                %p5712 = scmp.ge.s32.totalorder %s5711, %s5694
                %s5713 = scalar_select %p5712, 0, %s5711
                %s5714 = smul.u32 %s5713, 8
                %s5715 = smul.u32 %s5713, 8
                %s5716 = scalar_lea.vmem %s5697, %s5714 [#allocation4]
                %s5717 = scalar_lea.vmem %s5699, %s5715
              $region96: #{graph_level_triples_mlp.1} parent=83 // loop_footer
                %s5703 = sadd.s32 %s5701, 1
              $region97: #{graph_level_triples_mlp.1} parent=83 // loop_footer_branch
                %5700 = sbr.rel target = $region93
              $region98: #{graph_level_triples_mlp.1} parent=83 // loop_exit
                _
            $region84: #{graph_level_triples_mlp.1} parent=75 // pred_fallthru
              _
          $region76: #{graph_level_triples_mlp.1} parent=71 // pred_fallthru
            _
          %5828 = vnop
        $region72: #{graph_level_triples_mlp.1} parent=59 // pred_fallthru
          _
        // Predicated region
        $region121: #{graph_level_triples_mlp.1} parent=59 // pred_check
          %p5829 = pneg %p278
        $region122: #{graph_level_triples_mlp.1} parent=59 // pred_check_branch
          %5831 = sbr.rel (%p5829) target = $region124
        $region123: #{graph_level_triples_mlp.1} parent=59 // pred_region
          %5833 = vsyncadd [#allocation6], 0
          %s5835 = sshll.u32 [#allocation5], 4
          %s5836 = int_to_ptr.vmem [resolvable:$true] %s5835
          %s5837 = sshll.u32 %s11, 4
          %s5838 = int_to_ptr.hbm [resolvable:$true] %s5837
          %5840 = dma.vmem_to_hbm [thread:$0]  %s5836, 16, %s5838, [#allocation6]
        $region124: #{graph_level_triples_mlp.1} parent=59 // pred_fallthru
          _
        // Predicated region
        $region125: #{graph_level_triples_mlp.1} parent=59 // pred_check
          %p5841 = pneg %p278
        $region126: #{graph_level_triples_mlp.1} parent=59 // pred_check_branch
          %5843 = sbr.rel (%p5841) target = $region128
        $region127: #{graph_level_triples_mlp.1} parent=59 // pred_region
          %5845 = dma.done [#allocation6], 16
        $region128: #{graph_level_triples_mlp.1} parent=59 // pred_fallthru
          _
      $region60: #{graph_level_triples_mlp.1} parent=5 // pred_fallthru
        _
      %p5846 = scmp.le.s32.totalorder 2, %s19
      // Predicated region
      $region129: #{graph_level_triples_mlp.1} parent=5 // pred_check
        %p5847 = pneg %p5846
      $region130: #{graph_level_triples_mlp.1} parent=5 // pred_check_branch
        %5849 = sbr.rel (%p5847) target = $region132
      $region131: #{graph_level_triples_mlp.1} parent=5 // pred_region
        %s5850 = ssub.s32 %s19, 2
        // Predicated region
        $region133: #{graph_level_triples_mlp.1} parent=131 // pred_check
          %p5851 = pneg %p263
        $region134: #{graph_level_triples_mlp.1} parent=131 // pred_check_branch
          %5853 = sbr.rel (%p5851) target = $region136
        $region135: #{graph_level_triples_mlp.1} parent=131 // pred_region
          %s5854 = sand.u32 %s248, 1
          %s5855 = sand.u32 %s248, 1
          %s5856 = smul.addr %s5855, 1024
          %s5857 = scalar_lea.vmem [#allocation4], %s5856
        $region136: #{graph_level_triples_mlp.1} parent=131 // pred_fallthru
          _
      $region132: #{graph_level_triples_mlp.1} parent=5 // pred_fallthru
        _
    $region6: #{graph_level_triples_mlp.1} parent=1 // loop_footer
      %s23 = sadd.s32 1, %s19
    $region7: #{graph_level_triples_mlp.1} parent=1 // loop_footer_branch
      %18 = sbr.rel target = $region3
    $region8: #{graph_level_triples_mlp.1} parent=1 // loop_exit
      _
    %5858 = vsyncpa [#allocation6], 1
    %s5859 = scalar_lea.sflag [#allocation6], 1
    %5860 = vsyncpa %s5859, 1

</llo_original>
